<compile_context>
chip_gen: v7x
topology: tpu7x:2x2x1
jax: 0.10.0
libtpu: 0.0.40
codegen_flags: <defaults>
</compile_context>

<pallas_src>
import jax
import jax.numpy as jnp
from jax import lax
from jax.experimental import pallas as pl
from jax.experimental.pallas import tpu as pltpu

# ----------------------------- model dimensions -----------------------------
B, C_IN, H_IN, W_IN = 2, 4, 16, 16     # conv input, PyTorch NCHW convention
C_OUT = 8                              # conv output channels
SEQ = W_IN                             # RNN sequence length = image width
FEAT = C_OUT * H_IN                    # RNN input feature size = C*H = 128
HID = 32                               # GRU hidden size
HP = H_IN + 2                          # padded height
KSLAB = 3 * C_IN * HP                  # im2col slab feature size = 216


# ------------------------------ fused CRNN kernel -----------------------------
def crnn_kernel(slab_ref, wbig_ref, bfeat_ref, wih_ref, whh_ref, gb_ref,
                out_ref, hn_ref):
    # slab_ref : (SEQ*B, 216)   column-im2col rows ordered (t=w, b), cols (dw, ci, hp)
    # wbig_ref : (216, FEAT)    block-Toeplitz conv weight (conv+bridge in one matmul)
    # bfeat_ref: (1, FEAT)      conv bias broadcast to the bridge feature layout
    # wih_ref  : (3, FEAT, HID) input->gate weights, gate order (r, z, n)
    # whh_ref  : (3, HID, HID)  hidden->gate weights
    # gb_ref   : (4, HID)       rows: b_ir+b_hr, b_iz+b_hz, b_in, b_hn
    # out_ref  : (SEQ, B, HID)  time-major GRU outputs
    # hn_ref   : (B, HID)       final hidden state

    # ---- conv(3x3, pad=1) + ReLU + bridge as ONE lane-dense (128-wide) matmul ----
    # s[(t*B + b), co*H + h] == relu(conv(x))[b, co, h, w=t]
    s = jnp.dot(slab_ref[...], wbig_ref[...], preferred_element_type=jnp.float32)
    s = jnp.maximum(s + bfeat_ref[...], 0.0)                       # (SEQ*B, FEAT)

    # ---- hoisted input projection for ALL timesteps (off the recurrent path) ----
    gx_r = jnp.dot(s, wih_ref[0], preferred_element_type=jnp.float32) + gb_ref[0:1, :]
    gx_z = jnp.dot(s, wih_ref[1], preferred_element_type=jnp.float32) + gb_ref[1:2, :]
    gx_n = jnp.dot(s, wih_ref[2], preferred_element_type=jnp.float32) + gb_ref[2:3, :]

    whh_r = whh_ref[0]
    whh_z = whh_ref[1]
    whh_n = whh_ref[2]
    b_hn = gb_ref[3:4, :]

    # ---- recurrent loop, fully unrolled (SEQ is a static Python int) ----
    h = jnp.zeros((B, HID), jnp.float32)
    for t in range(SEQ):
        xr = gx_r[t * B:(t + 1) * B, :]
        xz = gx_z[t * B:(t + 1) * B, :]
        xn = gx_n[t * B:(t + 1) * B, :]
        r = jax.nn.sigmoid(xr + jnp.dot(h, whh_r, preferred_element_type=jnp.float32))
        z = jax.nn.sigmoid(xz + jnp.dot(h, whh_z, preferred_element_type=jnp.float32))
        n = jnp.tanh(xn + r * (jnp.dot(h, whh_n, preferred_element_type=jnp.float32) + b_hn))
        h = (1.0 - z) * n + z * h
        out_ref[t] = h
    hn_ref[...] = h


# ------------------------- parameter / input repackaging ----------------------
def _conv_to_bridge_weight(conv_w):
    """OIHW conv weight -> (216, 128) block-Toeplitz weight.

    W_big[(dw, ci, hp), (co, h)] = conv_w[co, ci, hp - h, dw]  if 0 <= hp-h < 3 else 0
    so that (im2col-column slab) @ W_big == conv+bridge output.
    """
    hp = jnp.arange(HP)[:, None]                         # (HP, 1)
    h = jnp.arange(H_IN)[None, :]                        # (1, H)
    kh = hp - h                                          # (HP, H)
    valid = ((kh >= 0) & (kh < 3)).astype(jnp.float32)
    kh_c = jnp.clip(kh, 0, 2)
    w_t = jnp.transpose(conv_w, (3, 1, 2, 0))            # (kw, ci, kh, co)
    w_g = w_t[:, :, kh_c, :] * valid[None, None, :, :, None]   # (kw, ci, hp, h, co)
    return jnp.transpose(w_g, (0, 1, 2, 4, 3)).reshape(KSLAB, FEAT)


# ------------------------------- CRNN forward --------------------------------
@jax.jit
def crnn_forward(x_nchw, params):
    """x_nchw: (B, C_IN, H_IN, W_IN) f32 -> (output (B, T, HID), hidden (1, B, HID))."""
    conv_w, conv_b, w_ih, w_hh, b_ih, b_hh = params

    # input slab: rows ordered (w, b), cols ordered (dw, ci, hp)
    x_pad = jnp.pad(x_nchw, ((0, 0), (0, 0), (1, 1), (1, 1)))            # (B, C, HP, WP)
    cols = jnp.stack([x_pad[:, :, :, dw:dw + W_IN] for dw in range(3)], axis=0)  # (3,B,C,HP,W)
    slab = jnp.transpose(cols, (4, 1, 0, 2, 3)).reshape(SEQ * B, KSLAB)  # (32, 216)

    # parameter repackaging (tiny; in production precompute once outside the step)
    w_big = _conv_to_bridge_weight(conv_w)                               # (216, 128)
    b_feat = jnp.repeat(conv_b, H_IN).reshape(1, FEAT)                   # (1, 128)
    wih_g = jnp.stack([w_ih[:, 0:HID], w_ih[:, HID:2 * HID], w_ih[:, 2 * HID:]], 0)
    whh_g = jnp.stack([w_hh[:, 0:HID], w_hh[:, HID:2 * HID], w_hh[:, 2 * HID:]], 0)
    gbias = jnp.stack([b_ih[0:HID] + b_hh[0:HID],
                       b_ih[HID:2 * HID] + b_hh[HID:2 * HID],
                       b_ih[2 * HID:],
                       b_hh[2 * HID:]], 0)                               # (4, HID)

    vmem_specs = [pl.BlockSpec(memory_space=pltpu.MemorySpace.VMEM) for _ in range(6)]
    out_tbh, h_n = pl.pallas_call(
        crnn_kernel,
        out_shape=(jax.ShapeDtypeStruct((SEQ, B, HID), jnp.float32),
                   jax.ShapeDtypeStruct((B, HID), jnp.float32)),
        in_specs=vmem_specs,
        out_specs=(pl.BlockSpec(memory_space=pltpu.MemorySpace.VMEM),
                   pl.BlockSpec(memory_space=pltpu.MemorySpace.VMEM)),
    )(slab, w_big, b_feat, wih_g, whh_g, gbias)

    output = jnp.transpose(out_tbh, (1, 0, 2))                           # (B, T, HID)
    hidden = h_n[None, :, :]                                             # (1, B, HID)
    return output, hidden


# ------------------------------ pure-JAX reference ----------------------------
def crnn_reference(x_nchw, params):
    conv_w, conv_b, w_ih, w_hh, b_ih, b_hh = params
    y = lax.conv_general_dilated(x_nchw, conv_w, (1, 1), "SAME",
                                 dimension_numbers=("NCHW", "OIHW", "NCHW"))
    y = jnp.maximum(y + conv_b[None, :, None, None], 0.0)
    seq = jnp.transpose(y, (0, 3, 1, 2)).reshape(B, SEQ, FEAT)           # (B, W, C*H)
    h = jnp.zeros((B, HID), jnp.float32)
    outs = []
    for t in range(SEQ):
        xt = seq[:, t, :]
        gx = xt @ w_ih + b_ih
        gh = h @ w_hh + b_hh
        r = jax.nn.sigmoid(gx[:, :HID] + gh[:, :HID])
        z = jax.nn.sigmoid(gx[:, HID:2 * HID] + gh[:, HID:2 * HID])
        n = jnp.tanh(gx[:, 2 * HID:] + r * gh[:, 2 * HID:])
        h = (1.0 - z) * n + z * h
        outs.append(h)
    return jnp.stack(outs, axis=1), h[None]


# ------------------------------------ main ------------------------------------
if __name__ == "__main__":
    key = jax.random.PRNGKey(0)
    ks = jax.random.split(key, 8)

    # deterministic synthetic parameters (shapes implied by the module's components)
    conv_w = 0.1 * jax.random.normal(ks[0], (C_OUT, C_IN, 3, 3), jnp.float32)   # OIHW
    conv_b = 0.1 * jax.random.normal(ks[1], (C_OUT,), jnp.float32)
    w_ih = 0.1 * jax.random.normal(ks[2], (FEAT, 3 * HID), jnp.float32)          # gates (r,z,n)
    w_hh = 0.1 * jax.random.normal(ks[3], (HID, 3 * HID), jnp.float32)
    b_ih = 0.1 * jax.random.normal(ks[4], (3 * HID,), jnp.float32)
    b_hh = 0.1 * jax.random.normal(ks[5], (3 * HID,), jnp.float32)
    params = (conv_w, conv_b, w_ih, w_hh, b_ih, b_hh)

    x = jax.random.normal(ks[6], (B, C_IN, H_IN, W_IN), jnp.float32)

    output, hidden = jax.block_until_ready(crnn_forward(x, params))
    ref_out, ref_hid = crnn_reference(x, params)

    assert output.shape == (B, SEQ, HID), output.shape
    assert hidden.shape == (1, B, HID), hidden.shape
    assert bool(jnp.all(jnp.isfinite(output))) and bool(jnp.all(jnp.isfinite(hidden)))
    assert bool(jnp.allclose(output, ref_out, rtol=1e-2, atol=1e-2))
    assert bool(jnp.allclose(hidden, ref_hid, rtol=1e-2, atol=1e-2))

    print("KERNEL_OK")
</pallas_src>

<mosaic_0001>
module attributes {stable_mosaic.version = 11 : i64} {
  func.func @crnn_kernel(%arg0: memref<32x216xf32, #tpu.memory_space<vmem>>, %arg1: memref<216x128xf32, #tpu.memory_space<vmem>>, %arg2: memref<1x128xf32, #tpu.memory_space<vmem>>, %arg3: memref<3x128x32xf32, #tpu.memory_space<vmem>>, %arg4: memref<3x32x32xf32, #tpu.memory_space<vmem>>, %arg5: memref<4x32xf32, #tpu.memory_space<vmem>>, %arg6: memref<16x2x32xf32, #tpu.memory_space<vmem>>, %arg7: memref<2x32xf32, #tpu.memory_space<vmem>>) attributes {dimension_semantics = [], scalar_prefetch = 0 : i64, scratch_operands = 0 : i64, tpu.core_type = #tpu.core_type<tc>} {
    %c0 = arith.constant 0 : index
    %c0_0 = arith.constant 0 : index
    %0 = vector.load %arg0[%c0, %c0_0] : memref<32x216xf32, #tpu.memory_space<vmem>>, vector<32x216xf32>
    %c0_1 = arith.constant 0 : index
    %c0_2 = arith.constant 0 : index
    %1 = vector.load %arg1[%c0_1, %c0_2] : memref<216x128xf32, #tpu.memory_space<vmem>>, vector<216x128xf32>
    %cst = arith.constant dense<0.000000e+00> : vector<32x128xf32>
    %2 = tpu.matmul %0, %1, %cst {dimension_numbers = #tpu.dot_dimension_numbers<[1], [0], [0], [1], [0, 0, 1, 1], [], []>} : vector<32x216xf32>, vector<216x128xf32>, vector<32x128xf32> -> vector<32x128xf32>
    %c0_3 = arith.constant 0 : index
    %c0_4 = arith.constant 0 : index
    %3 = vector.load %arg2[%c0_3, %c0_4] : memref<1x128xf32, #tpu.memory_space<vmem>>, vector<1x128xf32>
    %4 = vector.broadcast %3 : vector<1x128xf32> to vector<32x128xf32>
    %5 = arith.addf %2, %4 : vector<32x128xf32>
    %cst_5 = arith.constant 0.000000e+00 : f32
    %6 = vector.broadcast %cst_5 : f32 to vector<32x128xf32>
    %7 = arith.maximumf %5, %6 : vector<32x128xf32>
    %c0_6 = arith.constant 0 : index
    %c0_7 = arith.constant 0 : index
    %c0_8 = arith.constant 0 : index
    %8 = vector.load %arg3[%c0_6, %c0_7, %c0_8] : memref<3x128x32xf32, #tpu.memory_space<vmem>>, vector<1x128x32xf32>
    %9 = vector.shape_cast %8 : vector<1x128x32xf32> to vector<128x32xf32>
    %cst_9 = arith.constant dense<0.000000e+00> : vector<32x32xf32>
    %10 = tpu.matmul %7, %9, %cst_9 {dimension_numbers = #tpu.dot_dimension_numbers<[1], [0], [0], [1], [0, 0, 1, 1], [], []>} : vector<32x128xf32>, vector<128x32xf32>, vector<32x32xf32> -> vector<32x32xf32>
    %c0_10 = arith.constant 0 : index
    %c0_11 = arith.constant 0 : index
    %11 = vector.load %arg5[%c0_10, %c0_11] : memref<4x32xf32, #tpu.memory_space<vmem>>, vector<1x32xf32>
    %12 = vector.broadcast %11 : vector<1x32xf32> to vector<32x32xf32>
    %13 = arith.addf %10, %12 : vector<32x32xf32>
    %c1 = arith.constant 1 : index
    %c0_12 = arith.constant 0 : index
    %c0_13 = arith.constant 0 : index
    %14 = vector.load %arg3[%c1, %c0_12, %c0_13] : memref<3x128x32xf32, #tpu.memory_space<vmem>>, vector<1x128x32xf32>
    %15 = vector.shape_cast %14 : vector<1x128x32xf32> to vector<128x32xf32>
    %cst_14 = arith.constant dense<0.000000e+00> : vector<32x32xf32>
    %16 = tpu.matmul %7, %15, %cst_14 {dimension_numbers = #tpu.dot_dimension_numbers<[1], [0], [0], [1], [0, 0, 1, 1], [], []>} : vector<32x128xf32>, vector<128x32xf32>, vector<32x32xf32> -> vector<32x32xf32>
    %c1_15 = arith.constant 1 : index
    %c0_16 = arith.constant 0 : index
    %17 = vector.load %arg5[%c1_15, %c0_16] : memref<4x32xf32, #tpu.memory_space<vmem>>, vector<1x32xf32>
    %18 = vector.broadcast %17 : vector<1x32xf32> to vector<32x32xf32>
    %19 = arith.addf %16, %18 : vector<32x32xf32>
    %c2 = arith.constant 2 : index
    %c0_17 = arith.constant 0 : index
    %c0_18 = arith.constant 0 : index
    %20 = vector.load %arg3[%c2, %c0_17, %c0_18] : memref<3x128x32xf32, #tpu.memory_space<vmem>>, vector<1x128x32xf32>
    %21 = vector.shape_cast %20 : vector<1x128x32xf32> to vector<128x32xf32>
    %cst_19 = arith.constant dense<0.000000e+00> : vector<32x32xf32>
    %22 = tpu.matmul %7, %21, %cst_19 {dimension_numbers = #tpu.dot_dimension_numbers<[1], [0], [0], [1], [0, 0, 1, 1], [], []>} : vector<32x128xf32>, vector<128x32xf32>, vector<32x32xf32> -> vector<32x32xf32>
    %c2_20 = arith.constant 2 : index
    %c0_21 = arith.constant 0 : index
    %23 = vector.load %arg5[%c2_20, %c0_21] : memref<4x32xf32, #tpu.memory_space<vmem>>, vector<1x32xf32>
    %24 = vector.broadcast %23 : vector<1x32xf32> to vector<32x32xf32>
    %25 = arith.addf %22, %24 : vector<32x32xf32>
    %c0_22 = arith.constant 0 : index
    %c0_23 = arith.constant 0 : index
    %c0_24 = arith.constant 0 : index
    %26 = vector.load %arg4[%c0_22, %c0_23, %c0_24] : memref<3x32x32xf32, #tpu.memory_space<vmem>>, vector<1x32x32xf32>
    %27 = vector.shape_cast %26 : vector<1x32x32xf32> to vector<32x32xf32>
    %c1_25 = arith.constant 1 : index
    %c0_26 = arith.constant 0 : index
    %c0_27 = arith.constant 0 : index
    %28 = vector.load %arg4[%c1_25, %c0_26, %c0_27] : memref<3x32x32xf32, #tpu.memory_space<vmem>>, vector<1x32x32xf32>
    %29 = vector.shape_cast %28 : vector<1x32x32xf32> to vector<32x32xf32>
    %c2_28 = arith.constant 2 : index
    %c0_29 = arith.constant 0 : index
    %c0_30 = arith.constant 0 : index
    %30 = vector.load %arg4[%c2_28, %c0_29, %c0_30] : memref<3x32x32xf32, #tpu.memory_space<vmem>>, vector<1x32x32xf32>
    %31 = vector.shape_cast %30 : vector<1x32x32xf32> to vector<32x32xf32>
    %c3 = arith.constant 3 : index
    %c0_31 = arith.constant 0 : index
    %32 = vector.load %arg5[%c3, %c0_31] : memref<4x32xf32, #tpu.memory_space<vmem>>, vector<1x32xf32>
    %cst_32 = arith.constant 0.000000e+00 : f32
    %33 = vector.broadcast %cst_32 : f32 to vector<2x32xf32>
    %34 = vector.extract_strided_slice %13 {offsets = [0, 0], sizes = [2, 32], strides = [1, 1]} : vector<32x32xf32> to vector<2x32xf32>
    %35 = vector.extract_strided_slice %19 {offsets = [0, 0], sizes = [2, 32], strides = [1, 1]} : vector<32x32xf32> to vector<2x32xf32>
    %36 = vector.extract_strided_slice %25 {offsets = [0, 0], sizes = [2, 32], strides = [1, 1]} : vector<32x32xf32> to vector<2x32xf32>
    %cst_33 = arith.constant dense<0.000000e+00> : vector<2x32xf32>
    %37 = tpu.matmul %33, %27, %cst_33 {dimension_numbers = #tpu.dot_dimension_numbers<[1], [0], [0], [1], [0, 0, 1, 1], [], []>} : vector<2x32xf32>, vector<32x32xf32>, vector<2x32xf32> -> vector<2x32xf32>
    %38 = arith.addf %34, %37 : vector<2x32xf32>
    %39 = arith.negf %38 : vector<2x32xf32>
    %40 = math.exp %39 : vector<2x32xf32>
    %cst_34 = arith.constant 1.000000e+00 : f32
    %41 = vector.broadcast %cst_34 : f32 to vector<2x32xf32>
    %42 = arith.addf %41, %40 : vector<2x32xf32>
    %43 = arith.divf %41, %42 : vector<2x32xf32>
    %cst_35 = arith.constant dense<0.000000e+00> : vector<2x32xf32>
    %44 = tpu.matmul %33, %29, %cst_35 {dimension_numbers = #tpu.dot_dimension_numbers<[1], [0], [0], [1], [0, 0, 1, 1], [], []>} : vector<2x32xf32>, vector<32x32xf32>, vector<2x32xf32> -> vector<2x32xf32>
    %45 = arith.addf %35, %44 : vector<2x32xf32>
    %46 = arith.negf %45 : vector<2x32xf32>
    %47 = math.exp %46 : vector<2x32xf32>
    %cst_36 = arith.constant 1.000000e+00 : f32
    %48 = vector.broadcast %cst_36 : f32 to vector<2x32xf32>
    %49 = arith.addf %48, %47 : vector<2x32xf32>
    %50 = arith.divf %48, %49 : vector<2x32xf32>
    %cst_37 = arith.constant dense<0.000000e+00> : vector<2x32xf32>
    %51 = tpu.matmul %33, %31, %cst_37 {dimension_numbers = #tpu.dot_dimension_numbers<[1], [0], [0], [1], [0, 0, 1, 1], [], []>} : vector<2x32xf32>, vector<32x32xf32>, vector<2x32xf32> -> vector<2x32xf32>
    %52 = vector.broadcast %32 : vector<1x32xf32> to vector<2x32xf32>
    %53 = arith.addf %51, %52 : vector<2x32xf32>
    %54 = arith.mulf %43, %53 : vector<2x32xf32>
    %55 = arith.addf %36, %54 : vector<2x32xf32>
    %56 = math.tanh %55 : vector<2x32xf32>
    %cst_38 = arith.constant 1.000000e+00 : f32
    %57 = vector.broadcast %cst_38 : f32 to vector<2x32xf32>
    %58 = arith.subf %57, %50 : vector<2x32xf32>
    %59 = arith.mulf %58, %56 : vector<2x32xf32>
    %60 = arith.mulf %50, %33 : vector<2x32xf32>
    %61 = arith.addf %59, %60 : vector<2x32xf32>
    %c0_39 = arith.constant 0 : index
    %c0_40 = arith.constant 0 : index
    %c0_41 = arith.constant 0 : index
    %62 = vector.load %arg6[%c0_39, %c0_40, %c0_41] : memref<16x2x32xf32, #tpu.memory_space<vmem>>, vector<1x2x32xf32>
    %63 = vector.shape_cast %62 : vector<1x2x32xf32> to vector<2x32xf32>
    %64 = vector.shape_cast %61 : vector<2x32xf32> to vector<1x2x32xf32>
    tpu.vector_store %arg6[%c0_39, %c0_40, %c0_41], %64 {strides = array<i32>} : memref<16x2x32xf32, #tpu.memory_space<vmem>>, vector<1x2x32xf32>,
    %65 = vector.extract_strided_slice %13 {offsets = [2, 0], sizes = [2, 32], strides = [1, 1]} : vector<32x32xf32> to vector<2x32xf32>
    %66 = vector.extract_strided_slice %19 {offsets = [2, 0], sizes = [2, 32], strides = [1, 1]} : vector<32x32xf32> to vector<2x32xf32>
    %67 = vector.extract_strided_slice %25 {offsets = [2, 0], sizes = [2, 32], strides = [1, 1]} : vector<32x32xf32> to vector<2x32xf32>
    %cst_42 = arith.constant dense<0.000000e+00> : vector<2x32xf32>
    %68 = tpu.matmul %61, %27, %cst_42 {dimension_numbers = #tpu.dot_dimension_numbers<[1], [0], [0], [1], [0, 0, 1, 1], [], []>} : vector<2x32xf32>, vector<32x32xf32>, vector<2x32xf32> -> vector<2x32xf32>
    %69 = arith.addf %65, %68 : vector<2x32xf32>
    %70 = arith.negf %69 : vector<2x32xf32>
    %71 = math.exp %70 : vector<2x32xf32>
    %cst_43 = arith.constant 1.000000e+00 : f32
    %72 = vector.broadcast %cst_43 : f32 to vector<2x32xf32>
    %73 = arith.addf %72, %71 : vector<2x32xf32>
    %74 = arith.divf %72, %73 : vector<2x32xf32>
    %cst_44 = arith.constant dense<0.000000e+00> : vector<2x32xf32>
    %75 = tpu.matmul %61, %29, %cst_44 {dimension_numbers = #tpu.dot_dimension_numbers<[1], [0], [0], [1], [0, 0, 1, 1], [], []>} : vector<2x32xf32>, vector<32x32xf32>, vector<2x32xf32> -> vector<2x32xf32>
    %76 = arith.addf %66, %75 : vector<2x32xf32>
    %77 = arith.negf %76 : vector<2x32xf32>
    %78 = math.exp %77 : vector<2x32xf32>
    %cst_45 = arith.constant 1.000000e+00 : f32
    %79 = vector.broadcast %cst_45 : f32 to vector<2x32xf32>
    %80 = arith.addf %79, %78 : vector<2x32xf32>
    %81 = arith.divf %79, %80 : vector<2x32xf32>
    %cst_46 = arith.constant dense<0.000000e+00> : vector<2x32xf32>
    %82 = tpu.matmul %61, %31, %cst_46 {dimension_numbers = #tpu.dot_dimension_numbers<[1], [0], [0], [1], [0, 0, 1, 1], [], []>} : vector<2x32xf32>, vector<32x32xf32>, vector<2x32xf32> -> vector<2x32xf32>
    %83 = vector.broadcast %32 : vector<1x32xf32> to vector<2x32xf32>
    %84 = arith.addf %82, %83 : vector<2x32xf32>
    %85 = arith.mulf %74, %84 : vector<2x32xf32>
    %86 = arith.addf %67, %85 : vector<2x32xf32>
    %87 = math.tanh %86 : vector<2x32xf32>
    %cst_47 = arith.constant 1.000000e+00 : f32
    %88 = vector.broadcast %cst_47 : f32 to vector<2x32xf32>
    %89 = arith.subf %88, %81 : vector<2x32xf32>
    %90 = arith.mulf %89, %87 : vector<2x32xf32>
    %91 = arith.mulf %81, %61 : vector<2x32xf32>
    %92 = arith.addf %90, %91 : vector<2x32xf32>
    %c1_48 = arith.constant 1 : index
    %c0_49 = arith.constant 0 : index
    %c0_50 = arith.constant 0 : index
    %93 = vector.load %arg6[%c1_48, %c0_49, %c0_50] : memref<16x2x32xf32, #tpu.memory_space<vmem>>, vector<1x2x32xf32>
    %94 = vector.shape_cast %93 : vector<1x2x32xf32> to vector<2x32xf32>
    %95 = vector.shape_cast %92 : vector<2x32xf32> to vector<1x2x32xf32>
    tpu.vector_store %arg6[%c1_48, %c0_49, %c0_50], %95 {strides = array<i32>} : memref<16x2x32xf32, #tpu.memory_space<vmem>>, vector<1x2x32xf32>,
    %96 = vector.extract_strided_slice %13 {offsets = [4, 0], sizes = [2, 32], strides = [1, 1]} : vector<32x32xf32> to vector<2x32xf32>
    %97 = vector.extract_strided_slice %19 {offsets = [4, 0], sizes = [2, 32], strides = [1, 1]} : vector<32x32xf32> to vector<2x32xf32>
    %98 = vector.extract_strided_slice %25 {offsets = [4, 0], sizes = [2, 32], strides = [1, 1]} : vector<32x32xf32> to vector<2x32xf32>
    %cst_51 = arith.constant dense<0.000000e+00> : vector<2x32xf32>
    %99 = tpu.matmul %92, %27, %cst_51 {dimension_numbers = #tpu.dot_dimension_numbers<[1], [0], [0], [1], [0, 0, 1, 1], [], []>} : vector<2x32xf32>, vector<32x32xf32>, vector<2x32xf32> -> vector<2x32xf32>
    %100 = arith.addf %96, %99 : vector<2x32xf32>
    %101 = arith.negf %100 : vector<2x32xf32>
    %102 = math.exp %101 : vector<2x32xf32>
    %cst_52 = arith.constant 1.000000e+00 : f32
    %103 = vector.broadcast %cst_52 : f32 to vector<2x32xf32>
    %104 = arith.addf %103, %102 : vector<2x32xf32>
    %105 = arith.divf %103, %104 : vector<2x32xf32>
    %cst_53 = arith.constant dense<0.000000e+00> : vector<2x32xf32>
    %106 = tpu.matmul %92, %29, %cst_53 {dimension_numbers = #tpu.dot_dimension_numbers<[1], [0], [0], [1], [0, 0, 1, 1], [], []>} : vector<2x32xf32>, vector<32x32xf32>, vector<2x32xf32> -> vector<2x32xf32>
    %107 = arith.addf %97, %106 : vector<2x32xf32>
    %108 = arith.negf %107 : vector<2x32xf32>
    %109 = math.exp %108 : vector<2x32xf32>
    %cst_54 = arith.constant 1.000000e+00 : f32
    %110 = vector.broadcast %cst_54 : f32 to vector<2x32xf32>
    %111 = arith.addf %110, %109 : vector<2x32xf32>
    %112 = arith.divf %110, %111 : vector<2x32xf32>
    %cst_55 = arith.constant dense<0.000000e+00> : vector<2x32xf32>
    %113 = tpu.matmul %92, %31, %cst_55 {dimension_numbers = #tpu.dot_dimension_numbers<[1], [0], [0], [1], [0, 0, 1, 1], [], []>} : vector<2x32xf32>, vector<32x32xf32>, vector<2x32xf32> -> vector<2x32xf32>
    %114 = vector.broadcast %32 : vector<1x32xf32> to vector<2x32xf32>
    %115 = arith.addf %113, %114 : vector<2x32xf32>
    %116 = arith.mulf %105, %115 : vector<2x32xf32>
    %117 = arith.addf %98, %116 : vector<2x32xf32>
    %118 = math.tanh %117 : vector<2x32xf32>
    %cst_56 = arith.constant 1.000000e+00 : f32
    %119 = vector.broadcast %cst_56 : f32 to vector<2x32xf32>
    %120 = arith.subf %119, %112 : vector<2x32xf32>
    %121 = arith.mulf %120, %118 : vector<2x32xf32>
    %122 = arith.mulf %112, %92 : vector<2x32xf32>
    %123 = arith.addf %121, %122 : vector<2x32xf32>
    %c2_57 = arith.constant 2 : index
    %c0_58 = arith.constant 0 : index
    %c0_59 = arith.constant 0 : index
    %124 = vector.load %arg6[%c2_57, %c0_58, %c0_59] : memref<16x2x32xf32, #tpu.memory_space<vmem>>, vector<1x2x32xf32>
    %125 = vector.shape_cast %124 : vector<1x2x32xf32> to vector<2x32xf32>
    %126 = vector.shape_cast %123 : vector<2x32xf32> to vector<1x2x32xf32>
    tpu.vector_store %arg6[%c2_57, %c0_58, %c0_59], %126 {strides = array<i32>} : memref<16x2x32xf32, #tpu.memory_space<vmem>>, vector<1x2x32xf32>,
    %127 = vector.extract_strided_slice %13 {offsets = [6, 0], sizes = [2, 32], strides = [1, 1]} : vector<32x32xf32> to vector<2x32xf32>
    %128 = vector.extract_strided_slice %19 {offsets = [6, 0], sizes = [2, 32], strides = [1, 1]} : vector<32x32xf32> to vector<2x32xf32>
    %129 = vector.extract_strided_slice %25 {offsets = [6, 0], sizes = [2, 32], strides = [1, 1]} : vector<32x32xf32> to vector<2x32xf32>
    %cst_60 = arith.constant dense<0.000000e+00> : vector<2x32xf32>
    %130 = tpu.matmul %123, %27, %cst_60 {dimension_numbers = #tpu.dot_dimension_numbers<[1], [0], [0], [1], [0, 0, 1, 1], [], []>} : vector<2x32xf32>, vector<32x32xf32>, vector<2x32xf32> -> vector<2x32xf32>
    %131 = arith.addf %127, %130 : vector<2x32xf32>
    %132 = arith.negf %131 : vector<2x32xf32>
    %133 = math.exp %132 : vector<2x32xf32>
    %cst_61 = arith.constant 1.000000e+00 : f32
    %134 = vector.broadcast %cst_61 : f32 to vector<2x32xf32>
    %135 = arith.addf %134, %133 : vector<2x32xf32>
    %136 = arith.divf %134, %135 : vector<2x32xf32>
    %cst_62 = arith.constant dense<0.000000e+00> : vector<2x32xf32>
    %137 = tpu.matmul %123, %29, %cst_62 {dimension_numbers = #tpu.dot_dimension_numbers<[1], [0], [0], [1], [0, 0, 1, 1], [], []>} : vector<2x32xf32>, vector<32x32xf32>, vector<2x32xf32> -> vector<2x32xf32>
    %138 = arith.addf %128, %137 : vector<2x32xf32>
    %139 = arith.negf %138 : vector<2x32xf32>
    %140 = math.exp %139 : vector<2x32xf32>
    %cst_63 = arith.constant 1.000000e+00 : f32
    %141 = vector.broadcast %cst_63 : f32 to vector<2x32xf32>
    %142 = arith.addf %141, %140 : vector<2x32xf32>
    %143 = arith.divf %141, %142 : vector<2x32xf32>
    %cst_64 = arith.constant dense<0.000000e+00> : vector<2x32xf32>
    %144 = tpu.matmul %123, %31, %cst_64 {dimension_numbers = #tpu.dot_dimension_numbers<[1], [0], [0], [1], [0, 0, 1, 1], [], []>} : vector<2x32xf32>, vector<32x32xf32>, vector<2x32xf32> -> vector<2x32xf32>
    %145 = vector.broadcast %32 : vector<1x32xf32> to vector<2x32xf32>
    %146 = arith.addf %144, %145 : vector<2x32xf32>
    %147 = arith.mulf %136, %146 : vector<2x32xf32>
    %148 = arith.addf %129, %147 : vector<2x32xf32>
    %149 = math.tanh %148 : vector<2x32xf32>
    %cst_65 = arith.constant 1.000000e+00 : f32
    %150 = vector.broadcast %cst_65 : f32 to vector<2x32xf32>
    %151 = arith.subf %150, %143 : vector<2x32xf32>
    %152 = arith.mulf %151, %149 : vector<2x32xf32>
    %153 = arith.mulf %143, %123 : vector<2x32xf32>
    %154 = arith.addf %152, %153 : vector<2x32xf32>
    %c3_66 = arith.constant 3 : index
    %c0_67 = arith.constant 0 : index
    %c0_68 = arith.constant 0 : index
    %155 = vector.load %arg6[%c3_66, %c0_67, %c0_68] : memref<16x2x32xf32, #tpu.memory_space<vmem>>, vector<1x2x32xf32>
    %156 = vector.shape_cast %155 : vector<1x2x32xf32> to vector<2x32xf32>
    %157 = vector.shape_cast %154 : vector<2x32xf32> to vector<1x2x32xf32>
    tpu.vector_store %arg6[%c3_66, %c0_67, %c0_68], %157 {strides = array<i32>} : memref<16x2x32xf32, #tpu.memory_space<vmem>>, vector<1x2x32xf32>,
    %158 = vector.extract_strided_slice %13 {offsets = [8, 0], sizes = [2, 32], strides = [1, 1]} : vector<32x32xf32> to vector<2x32xf32>
    %159 = vector.extract_strided_slice %19 {offsets = [8, 0], sizes = [2, 32], strides = [1, 1]} : vector<32x32xf32> to vector<2x32xf32>
    %160 = vector.extract_strided_slice %25 {offsets = [8, 0], sizes = [2, 32], strides = [1, 1]} : vector<32x32xf32> to vector<2x32xf32>
    %cst_69 = arith.constant dense<0.000000e+00> : vector<2x32xf32>
    %161 = tpu.matmul %154, %27, %cst_69 {dimension_numbers = #tpu.dot_dimension_numbers<[1], [0], [0], [1], [0, 0, 1, 1], [], []>} : vector<2x32xf32>, vector<32x32xf32>, vector<2x32xf32> -> vector<2x32xf32>
    %162 = arith.addf %158, %161 : vector<2x32xf32>
    %163 = arith.negf %162 : vector<2x32xf32>
    %164 = math.exp %163 : vector<2x32xf32>
    %cst_70 = arith.constant 1.000000e+00 : f32
    %165 = vector.broadcast %cst_70 : f32 to vector<2x32xf32>
    %166 = arith.addf %165, %164 : vector<2x32xf32>
    %167 = arith.divf %165, %166 : vector<2x32xf32>
    %cst_71 = arith.constant dense<0.000000e+00> : vector<2x32xf32>
    %168 = tpu.matmul %154, %29, %cst_71 {dimension_numbers = #tpu.dot_dimension_numbers<[1], [0], [0], [1], [0, 0, 1, 1], [], []>} : vector<2x32xf32>, vector<32x32xf32>, vector<2x32xf32> -> vector<2x32xf32>
    %169 = arith.addf %159, %168 : vector<2x32xf32>
    %170 = arith.negf %169 : vector<2x32xf32>
    %171 = math.exp %170 : vector<2x32xf32>
    %cst_72 = arith.constant 1.000000e+00 : f32
    %172 = vector.broadcast %cst_72 : f32 to vector<2x32xf32>
    %173 = arith.addf %172, %171 : vector<2x32xf32>
    %174 = arith.divf %172, %173 : vector<2x32xf32>
    %cst_73 = arith.constant dense<0.000000e+00> : vector<2x32xf32>
    %175 = tpu.matmul %154, %31, %cst_73 {dimension_numbers = #tpu.dot_dimension_numbers<[1], [0], [0], [1], [0, 0, 1, 1], [], []>} : vector<2x32xf32>, vector<32x32xf32>, vector<2x32xf32> -> vector<2x32xf32>
    %176 = vector.broadcast %32 : vector<1x32xf32> to vector<2x32xf32>
    %177 = arith.addf %175, %176 : vector<2x32xf32>
    %178 = arith.mulf %167, %177 : vector<2x32xf32>
    %179 = arith.addf %160, %178 : vector<2x32xf32>
    %180 = math.tanh %179 : vector<2x32xf32>
    %cst_74 = arith.constant 1.000000e+00 : f32
    %181 = vector.broadcast %cst_74 : f32 to vector<2x32xf32>
    %182 = arith.subf %181, %174 : vector<2x32xf32>
    %183 = arith.mulf %182, %180 : vector<2x32xf32>
    %184 = arith.mulf %174, %154 : vector<2x32xf32>
    %185 = arith.addf %183, %184 : vector<2x32xf32>
    %c4 = arith.constant 4 : index
    %c0_75 = arith.constant 0 : index
    %c0_76 = arith.constant 0 : index
    %186 = vector.load %arg6[%c4, %c0_75, %c0_76] : memref<16x2x32xf32, #tpu.memory_space<vmem>>, vector<1x2x32xf32>
    %187 = vector.shape_cast %186 : vector<1x2x32xf32> to vector<2x32xf32>
    %188 = vector.shape_cast %185 : vector<2x32xf32> to vector<1x2x32xf32>
    tpu.vector_store %arg6[%c4, %c0_75, %c0_76], %188 {strides = array<i32>} : memref<16x2x32xf32, #tpu.memory_space<vmem>>, vector<1x2x32xf32>,
    %189 = vector.extract_strided_slice %13 {offsets = [10, 0], sizes = [2, 32], strides = [1, 1]} : vector<32x32xf32> to vector<2x32xf32>
    %190 = vector.extract_strided_slice %19 {offsets = [10, 0], sizes = [2, 32], strides = [1, 1]} : vector<32x32xf32> to vector<2x32xf32>
    %191 = vector.extract_strided_slice %25 {offsets = [10, 0], sizes = [2, 32], strides = [1, 1]} : vector<32x32xf32> to vector<2x32xf32>
    %cst_77 = arith.constant dense<0.000000e+00> : vector<2x32xf32>
    %192 = tpu.matmul %185, %27, %cst_77 {dimension_numbers = #tpu.dot_dimension_numbers<[1], [0], [0], [1], [0, 0, 1, 1], [], []>} : vector<2x32xf32>, vector<32x32xf32>, vector<2x32xf32> -> vector<2x32xf32>
    %193 = arith.addf %189, %192 : vector<2x32xf32>
    %194 = arith.negf %193 : vector<2x32xf32>
    %195 = math.exp %194 : vector<2x32xf32>
    %cst_78 = arith.constant 1.000000e+00 : f32
    %196 = vector.broadcast %cst_78 : f32 to vector<2x32xf32>
    %197 = arith.addf %196, %195 : vector<2x32xf32>
    %198 = arith.divf %196, %197 : vector<2x32xf32>
    %cst_79 = arith.constant dense<0.000000e+00> : vector<2x32xf32>
    %199 = tpu.matmul %185, %29, %cst_79 {dimension_numbers = #tpu.dot_dimension_numbers<[1], [0], [0], [1], [0, 0, 1, 1], [], []>} : vector<2x32xf32>, vector<32x32xf32>, vector<2x32xf32> -> vector<2x32xf32>
    %200 = arith.addf %190, %199 : vector<2x32xf32>
    %201 = arith.negf %200 : vector<2x32xf32>
    %202 = math.exp %201 : vector<2x32xf32>
    %cst_80 = arith.constant 1.000000e+00 : f32
    %203 = vector.broadcast %cst_80 : f32 to vector<2x32xf32>
    %204 = arith.addf %203, %202 : vector<2x32xf32>
    %205 = arith.divf %203, %204 : vector<2x32xf32>
    %cst_81 = arith.constant dense<0.000000e+00> : vector<2x32xf32>
    %206 = tpu.matmul %185, %31, %cst_81 {dimension_numbers = #tpu.dot_dimension_numbers<[1], [0], [0], [1], [0, 0, 1, 1], [], []>} : vector<2x32xf32>, vector<32x32xf32>, vector<2x32xf32> -> vector<2x32xf32>
    %207 = vector.broadcast %32 : vector<1x32xf32> to vector<2x32xf32>
    %208 = arith.addf %206, %207 : vector<2x32xf32>
    %209 = arith.mulf %198, %208 : vector<2x32xf32>
    %210 = arith.addf %191, %209 : vector<2x32xf32>
    %211 = math.tanh %210 : vector<2x32xf32>
    %cst_82 = arith.constant 1.000000e+00 : f32
    %212 = vector.broadcast %cst_82 : f32 to vector<2x32xf32>
    %213 = arith.subf %212, %205 : vector<2x32xf32>
    %214 = arith.mulf %213, %211 : vector<2x32xf32>
    %215 = arith.mulf %205, %185 : vector<2x32xf32>
    %216 = arith.addf %214, %215 : vector<2x32xf32>
    %c5 = arith.constant 5 : index
    %c0_83 = arith.constant 0 : index
    %c0_84 = arith.constant 0 : index
    %217 = vector.load %arg6[%c5, %c0_83, %c0_84] : memref<16x2x32xf32, #tpu.memory_space<vmem>>, vector<1x2x32xf32>
    %218 = vector.shape_cast %217 : vector<1x2x32xf32> to vector<2x32xf32>
    %219 = vector.shape_cast %216 : vector<2x32xf32> to vector<1x2x32xf32>
    tpu.vector_store %arg6[%c5, %c0_83, %c0_84], %219 {strides = array<i32>} : memref<16x2x32xf32, #tpu.memory_space<vmem>>, vector<1x2x32xf32>,
    %220 = vector.extract_strided_slice %13 {offsets = [12, 0], sizes = [2, 32], strides = [1, 1]} : vector<32x32xf32> to vector<2x32xf32>
    %221 = vector.extract_strided_slice %19 {offsets = [12, 0], sizes = [2, 32], strides = [1, 1]} : vector<32x32xf32> to vector<2x32xf32>
    %222 = vector.extract_strided_slice %25 {offsets = [12, 0], sizes = [2, 32], strides = [1, 1]} : vector<32x32xf32> to vector<2x32xf32>
    %cst_85 = arith.constant dense<0.000000e+00> : vector<2x32xf32>
    %223 = tpu.matmul %216, %27, %cst_85 {dimension_numbers = #tpu.dot_dimension_numbers<[1], [0], [0], [1], [0, 0, 1, 1], [], []>} : vector<2x32xf32>, vector<32x32xf32>, vector<2x32xf32> -> vector<2x32xf32>
    %224 = arith.addf %220, %223 : vector<2x32xf32>
    %225 = arith.negf %224 : vector<2x32xf32>
    %226 = math.exp %225 : vector<2x32xf32>
    %cst_86 = arith.constant 1.000000e+00 : f32
    %227 = vector.broadcast %cst_86 : f32 to vector<2x32xf32>
    %228 = arith.addf %227, %226 : vector<2x32xf32>
    %229 = arith.divf %227, %228 : vector<2x32xf32>
    %cst_87 = arith.constant dense<0.000000e+00> : vector<2x32xf32>
    %230 = tpu.matmul %216, %29, %cst_87 {dimension_numbers = #tpu.dot_dimension_numbers<[1], [0], [0], [1], [0, 0, 1, 1], [], []>} : vector<2x32xf32>, vector<32x32xf32>, vector<2x32xf32> -> vector<2x32xf32>
    %231 = arith.addf %221, %230 : vector<2x32xf32>
    %232 = arith.negf %231 : vector<2x32xf32>
    %233 = math.exp %232 : vector<2x32xf32>
    %cst_88 = arith.constant 1.000000e+00 : f32
    %234 = vector.broadcast %cst_88 : f32 to vector<2x32xf32>
    %235 = arith.addf %234, %233 : vector<2x32xf32>
    %236 = arith.divf %234, %235 : vector<2x32xf32>
    %cst_89 = arith.constant dense<0.000000e+00> : vector<2x32xf32>
    %237 = tpu.matmul %216, %31, %cst_89 {dimension_numbers = #tpu.dot_dimension_numbers<[1], [0], [0], [1], [0, 0, 1, 1], [], []>} : vector<2x32xf32>, vector<32x32xf32>, vector<2x32xf32> -> vector<2x32xf32>
    %238 = vector.broadcast %32 : vector<1x32xf32> to vector<2x32xf32>
    %239 = arith.addf %237, %238 : vector<2x32xf32>
    %240 = arith.mulf %229, %239 : vector<2x32xf32>
    %241 = arith.addf %222, %240 : vector<2x32xf32>
    %242 = math.tanh %241 : vector<2x32xf32>
    %cst_90 = arith.constant 1.000000e+00 : f32
    %243 = vector.broadcast %cst_90 : f32 to vector<2x32xf32>
    %244 = arith.subf %243, %236 : vector<2x32xf32>
    %245 = arith.mulf %244, %242 : vector<2x32xf32>
    %246 = arith.mulf %236, %216 : vector<2x32xf32>
    %247 = arith.addf %245, %246 : vector<2x32xf32>
    %c6 = arith.constant 6 : index
    %c0_91 = arith.constant 0 : index
    %c0_92 = arith.constant 0 : index
    %248 = vector.load %arg6[%c6, %c0_91, %c0_92] : memref<16x2x32xf32, #tpu.memory_space<vmem>>, vector<1x2x32xf32>
    %249 = vector.shape_cast %248 : vector<1x2x32xf32> to vector<2x32xf32>
    %250 = vector.shape_cast %247 : vector<2x32xf32> to vector<1x2x32xf32>
    tpu.vector_store %arg6[%c6, %c0_91, %c0_92], %250 {strides = array<i32>} : memref<16x2x32xf32, #tpu.memory_space<vmem>>, vector<1x2x32xf32>,
    %251 = vector.extract_strided_slice %13 {offsets = [14, 0], sizes = [2, 32], strides = [1, 1]} : vector<32x32xf32> to vector<2x32xf32>
    %252 = vector.extract_strided_slice %19 {offsets = [14, 0], sizes = [2, 32], strides = [1, 1]} : vector<32x32xf32> to vector<2x32xf32>
    %253 = vector.extract_strided_slice %25 {offsets = [14, 0], sizes = [2, 32], strides = [1, 1]} : vector<32x32xf32> to vector<2x32xf32>
    %cst_93 = arith.constant dense<0.000000e+00> : vector<2x32xf32>
    %254 = tpu.matmul %247, %27, %cst_93 {dimension_numbers = #tpu.dot_dimension_numbers<[1], [0], [0], [1], [0, 0, 1, 1], [], []>} : vector<2x32xf32>, vector<32x32xf32>, vector<2x32xf32> -> vector<2x32xf32>
    %255 = arith.addf %251, %254 : vector<2x32xf32>
    %256 = arith.negf %255 : vector<2x32xf32>
    %257 = math.exp %256 : vector<2x32xf32>
    %cst_94 = arith.constant 1.000000e+00 : f32
    %258 = vector.broadcast %cst_94 : f32 to vector<2x32xf32>
    %259 = arith.addf %258, %257 : vector<2x32xf32>
    %260 = arith.divf %258, %259 : vector<2x32xf32>
    %cst_95 = arith.constant dense<0.000000e+00> : vector<2x32xf32>
    %261 = tpu.matmul %247, %29, %cst_95 {dimension_numbers = #tpu.dot_dimension_numbers<[1], [0], [0], [1], [0, 0, 1, 1], [], []>} : vector<2x32xf32>, vector<32x32xf32>, vector<2x32xf32> -> vector<2x32xf32>
    %262 = arith.addf %252, %261 : vector<2x32xf32>
    %263 = arith.negf %262 : vector<2x32xf32>
    %264 = math.exp %263 : vector<2x32xf32>
    %cst_96 = arith.constant 1.000000e+00 : f32
    %265 = vector.broadcast %cst_96 : f32 to vector<2x32xf32>
    %266 = arith.addf %265, %264 : vector<2x32xf32>
    %267 = arith.divf %265, %266 : vector<2x32xf32>
    %cst_97 = arith.constant dense<0.000000e+00> : vector<2x32xf32>
    %268 = tpu.matmul %247, %31, %cst_97 {dimension_numbers = #tpu.dot_dimension_numbers<[1], [0], [0], [1], [0, 0, 1, 1], [], []>} : vector<2x32xf32>, vector<32x32xf32>, vector<2x32xf32> -> vector<2x32xf32>
    %269 = vector.broadcast %32 : vector<1x32xf32> to vector<2x32xf32>
    %270 = arith.addf %268, %269 : vector<2x32xf32>
    %271 = arith.mulf %260, %270 : vector<2x32xf32>
    %272 = arith.addf %253, %271 : vector<2x32xf32>
    %273 = math.tanh %272 : vector<2x32xf32>
    %cst_98 = arith.constant 1.000000e+00 : f32
    %274 = vector.broadcast %cst_98 : f32 to vector<2x32xf32>
    %275 = arith.subf %274, %267 : vector<2x32xf32>
    %276 = arith.mulf %275, %273 : vector<2x32xf32>
    %277 = arith.mulf %267, %247 : vector<2x32xf32>
    %278 = arith.addf %276, %277 : vector<2x32xf32>
    %c7 = arith.constant 7 : index
    %c0_99 = arith.constant 0 : index
    %c0_100 = arith.constant 0 : index
    %279 = vector.load %arg6[%c7, %c0_99, %c0_100] : memref<16x2x32xf32, #tpu.memory_space<vmem>>, vector<1x2x32xf32>
    %280 = vector.shape_cast %279 : vector<1x2x32xf32> to vector<2x32xf32>
    %281 = vector.shape_cast %278 : vector<2x32xf32> to vector<1x2x32xf32>
    tpu.vector_store %arg6[%c7, %c0_99, %c0_100], %281 {strides = array<i32>} : memref<16x2x32xf32, #tpu.memory_space<vmem>>, vector<1x2x32xf32>,
    %282 = vector.extract_strided_slice %13 {offsets = [16, 0], sizes = [2, 32], strides = [1, 1]} : vector<32x32xf32> to vector<2x32xf32>
    %283 = vector.extract_strided_slice %19 {offsets = [16, 0], sizes = [2, 32], strides = [1, 1]} : vector<32x32xf32> to vector<2x32xf32>
    %284 = vector.extract_strided_slice %25 {offsets = [16, 0], sizes = [2, 32], strides = [1, 1]} : vector<32x32xf32> to vector<2x32xf32>
    %cst_101 = arith.constant dense<0.000000e+00> : vector<2x32xf32>
    %285 = tpu.matmul %278, %27, %cst_101 {dimension_numbers = #tpu.dot_dimension_numbers<[1], [0], [0], [1], [0, 0, 1, 1], [], []>} : vector<2x32xf32>, vector<32x32xf32>, vector<2x32xf32> -> vector<2x32xf32>
    %286 = arith.addf %282, %285 : vector<2x32xf32>
    %287 = arith.negf %286 : vector<2x32xf32>
    %288 = math.exp %287 : vector<2x32xf32>
    %cst_102 = arith.constant 1.000000e+00 : f32
    %289 = vector.broadcast %cst_102 : f32 to vector<2x32xf32>
    %290 = arith.addf %289, %288 : vector<2x32xf32>
    %291 = arith.divf %289, %290 : vector<2x32xf32>
    %cst_103 = arith.constant dense<0.000000e+00> : vector<2x32xf32>
    %292 = tpu.matmul %278, %29, %cst_103 {dimension_numbers = #tpu.dot_dimension_numbers<[1], [0], [0], [1], [0, 0, 1, 1], [], []>} : vector<2x32xf32>, vector<32x32xf32>, vector<2x32xf32> -> vector<2x32xf32>
    %293 = arith.addf %283, %292 : vector<2x32xf32>
    %294 = arith.negf %293 : vector<2x32xf32>
    %295 = math.exp %294 : vector<2x32xf32>
    %cst_104 = arith.constant 1.000000e+00 : f32
    %296 = vector.broadcast %cst_104 : f32 to vector<2x32xf32>
    %297 = arith.addf %296, %295 : vector<2x32xf32>
    %298 = arith.divf %296, %297 : vector<2x32xf32>
    %cst_105 = arith.constant dense<0.000000e+00> : vector<2x32xf32>
    %299 = tpu.matmul %278, %31, %cst_105 {dimension_numbers = #tpu.dot_dimension_numbers<[1], [0], [0], [1], [0, 0, 1, 1], [], []>} : vector<2x32xf32>, vector<32x32xf32>, vector<2x32xf32> -> vector<2x32xf32>
    %300 = vector.broadcast %32 : vector<1x32xf32> to vector<2x32xf32>
    %301 = arith.addf %299, %300 : vector<2x32xf32>
    %302 = arith.mulf %291, %301 : vector<2x32xf32>
    %303 = arith.addf %284, %302 : vector<2x32xf32>
    %304 = math.tanh %303 : vector<2x32xf32>
    %cst_106 = arith.constant 1.000000e+00 : f32
    %305 = vector.broadcast %cst_106 : f32 to vector<2x32xf32>
    %306 = arith.subf %305, %298 : vector<2x32xf32>
    %307 = arith.mulf %306, %304 : vector<2x32xf32>
    %308 = arith.mulf %298, %278 : vector<2x32xf32>
    %309 = arith.addf %307, %308 : vector<2x32xf32>
    %c8 = arith.constant 8 : index
    %c0_107 = arith.constant 0 : index
    %c0_108 = arith.constant 0 : index
    %310 = vector.load %arg6[%c8, %c0_107, %c0_108] : memref<16x2x32xf32, #tpu.memory_space<vmem>>, vector<1x2x32xf32>
    %311 = vector.shape_cast %310 : vector<1x2x32xf32> to vector<2x32xf32>
    %312 = vector.shape_cast %309 : vector<2x32xf32> to vector<1x2x32xf32>
    tpu.vector_store %arg6[%c8, %c0_107, %c0_108], %312 {strides = array<i32>} : memref<16x2x32xf32, #tpu.memory_space<vmem>>, vector<1x2x32xf32>,
    %313 = vector.extract_strided_slice %13 {offsets = [18, 0], sizes = [2, 32], strides = [1, 1]} : vector<32x32xf32> to vector<2x32xf32>
    %314 = vector.extract_strided_slice %19 {offsets = [18, 0], sizes = [2, 32], strides = [1, 1]} : vector<32x32xf32> to vector<2x32xf32>
    %315 = vector.extract_strided_slice %25 {offsets = [18, 0], sizes = [2, 32], strides = [1, 1]} : vector<32x32xf32> to vector<2x32xf32>
    %cst_109 = arith.constant dense<0.000000e+00> : vector<2x32xf32>
    %316 = tpu.matmul %309, %27, %cst_109 {dimension_numbers = #tpu.dot_dimension_numbers<[1], [0], [0], [1], [0, 0, 1, 1], [], []>} : vector<2x32xf32>, vector<32x32xf32>, vector<2x32xf32> -> vector<2x32xf32>
    %317 = arith.addf %313, %316 : vector<2x32xf32>
    %318 = arith.negf %317 : vector<2x32xf32>
    %319 = math.exp %318 : vector<2x32xf32>
    %cst_110 = arith.constant 1.000000e+00 : f32
    %320 = vector.broadcast %cst_110 : f32 to vector<2x32xf32>
    %321 = arith.addf %320, %319 : vector<2x32xf32>
    %322 = arith.divf %320, %321 : vector<2x32xf32>
    %cst_111 = arith.constant dense<0.000000e+00> : vector<2x32xf32>
    %323 = tpu.matmul %309, %29, %cst_111 {dimension_numbers = #tpu.dot_dimension_numbers<[1], [0], [0], [1], [0, 0, 1, 1], [], []>} : vector<2x32xf32>, vector<32x32xf32>, vector<2x32xf32> -> vector<2x32xf32>
    %324 = arith.addf %314, %323 : vector<2x32xf32>
    %325 = arith.negf %324 : vector<2x32xf32>
    %326 = math.exp %325 : vector<2x32xf32>
    %cst_112 = arith.constant 1.000000e+00 : f32
    %327 = vector.broadcast %cst_112 : f32 to vector<2x32xf32>
    %328 = arith.addf %327, %326 : vector<2x32xf32>
    %329 = arith.divf %327, %328 : vector<2x32xf32>
    %cst_113 = arith.constant dense<0.000000e+00> : vector<2x32xf32>
    %330 = tpu.matmul %309, %31, %cst_113 {dimension_numbers = #tpu.dot_dimension_numbers<[1], [0], [0], [1], [0, 0, 1, 1], [], []>} : vector<2x32xf32>, vector<32x32xf32>, vector<2x32xf32> -> vector<2x32xf32>
    %331 = vector.broadcast %32 : vector<1x32xf32> to vector<2x32xf32>
    %332 = arith.addf %330, %331 : vector<2x32xf32>
    %333 = arith.mulf %322, %332 : vector<2x32xf32>
    %334 = arith.addf %315, %333 : vector<2x32xf32>
    %335 = math.tanh %334 : vector<2x32xf32>
    %cst_114 = arith.constant 1.000000e+00 : f32
    %336 = vector.broadcast %cst_114 : f32 to vector<2x32xf32>
    %337 = arith.subf %336, %329 : vector<2x32xf32>
    %338 = arith.mulf %337, %335 : vector<2x32xf32>
    %339 = arith.mulf %329, %309 : vector<2x32xf32>
    %340 = arith.addf %338, %339 : vector<2x32xf32>
    %c9 = arith.constant 9 : index
    %c0_115 = arith.constant 0 : index
    %c0_116 = arith.constant 0 : index
    %341 = vector.load %arg6[%c9, %c0_115, %c0_116] : memref<16x2x32xf32, #tpu.memory_space<vmem>>, vector<1x2x32xf32>
    %342 = vector.shape_cast %341 : vector<1x2x32xf32> to vector<2x32xf32>
    %343 = vector.shape_cast %340 : vector<2x32xf32> to vector<1x2x32xf32>
    tpu.vector_store %arg6[%c9, %c0_115, %c0_116], %343 {strides = array<i32>} : memref<16x2x32xf32, #tpu.memory_space<vmem>>, vector<1x2x32xf32>,
    %344 = vector.extract_strided_slice %13 {offsets = [20, 0], sizes = [2, 32], strides = [1, 1]} : vector<32x32xf32> to vector<2x32xf32>
    %345 = vector.extract_strided_slice %19 {offsets = [20, 0], sizes = [2, 32], strides = [1, 1]} : vector<32x32xf32> to vector<2x32xf32>
    %346 = vector.extract_strided_slice %25 {offsets = [20, 0], sizes = [2, 32], strides = [1, 1]} : vector<32x32xf32> to vector<2x32xf32>
    %cst_117 = arith.constant dense<0.000000e+00> : vector<2x32xf32>
    %347 = tpu.matmul %340, %27, %cst_117 {dimension_numbers = #tpu.dot_dimension_numbers<[1], [0], [0], [1], [0, 0, 1, 1], [], []>} : vector<2x32xf32>, vector<32x32xf32>, vector<2x32xf32> -> vector<2x32xf32>
    %348 = arith.addf %344, %347 : vector<2x32xf32>
    %349 = arith.negf %348 : vector<2x32xf32>
    %350 = math.exp %349 : vector<2x32xf32>
    %cst_118 = arith.constant 1.000000e+00 : f32
    %351 = vector.broadcast %cst_118 : f32 to vector<2x32xf32>
    %352 = arith.addf %351, %350 : vector<2x32xf32>
    %353 = arith.divf %351, %352 : vector<2x32xf32>
    %cst_119 = arith.constant dense<0.000000e+00> : vector<2x32xf32>
    %354 = tpu.matmul %340, %29, %cst_119 {dimension_numbers = #tpu.dot_dimension_numbers<[1], [0], [0], [1], [0, 0, 1, 1], [], []>} : vector<2x32xf32>, vector<32x32xf32>, vector<2x32xf32> -> vector<2x32xf32>
    %355 = arith.addf %345, %354 : vector<2x32xf32>
    %356 = arith.negf %355 : vector<2x32xf32>
    %357 = math.exp %356 : vector<2x32xf32>
    %cst_120 = arith.constant 1.000000e+00 : f32
    %358 = vector.broadcast %cst_120 : f32 to vector<2x32xf32>
    %359 = arith.addf %358, %357 : vector<2x32xf32>
    %360 = arith.divf %358, %359 : vector<2x32xf32>
    %cst_121 = arith.constant dense<0.000000e+00> : vector<2x32xf32>
    %361 = tpu.matmul %340, %31, %cst_121 {dimension_numbers = #tpu.dot_dimension_numbers<[1], [0], [0], [1], [0, 0, 1, 1], [], []>} : vector<2x32xf32>, vector<32x32xf32>, vector<2x32xf32> -> vector<2x32xf32>
    %362 = vector.broadcast %32 : vector<1x32xf32> to vector<2x32xf32>
    %363 = arith.addf %361, %362 : vector<2x32xf32>
    %364 = arith.mulf %353, %363 : vector<2x32xf32>
    %365 = arith.addf %346, %364 : vector<2x32xf32>
    %366 = math.tanh %365 : vector<2x32xf32>
    %cst_122 = arith.constant 1.000000e+00 : f32
    %367 = vector.broadcast %cst_122 : f32 to vector<2x32xf32>
    %368 = arith.subf %367, %360 : vector<2x32xf32>
    %369 = arith.mulf %368, %366 : vector<2x32xf32>
    %370 = arith.mulf %360, %340 : vector<2x32xf32>
    %371 = arith.addf %369, %370 : vector<2x32xf32>
    %c10 = arith.constant 10 : index
    %c0_123 = arith.constant 0 : index
    %c0_124 = arith.constant 0 : index
    %372 = vector.load %arg6[%c10, %c0_123, %c0_124] : memref<16x2x32xf32, #tpu.memory_space<vmem>>, vector<1x2x32xf32>
    %373 = vector.shape_cast %372 : vector<1x2x32xf32> to vector<2x32xf32>
    %374 = vector.shape_cast %371 : vector<2x32xf32> to vector<1x2x32xf32>
    tpu.vector_store %arg6[%c10, %c0_123, %c0_124], %374 {strides = array<i32>} : memref<16x2x32xf32, #tpu.memory_space<vmem>>, vector<1x2x32xf32>,
    %375 = vector.extract_strided_slice %13 {offsets = [22, 0], sizes = [2, 32], strides = [1, 1]} : vector<32x32xf32> to vector<2x32xf32>
    %376 = vector.extract_strided_slice %19 {offsets = [22, 0], sizes = [2, 32], strides = [1, 1]} : vector<32x32xf32> to vector<2x32xf32>
    %377 = vector.extract_strided_slice %25 {offsets = [22, 0], sizes = [2, 32], strides = [1, 1]} : vector<32x32xf32> to vector<2x32xf32>
    %cst_125 = arith.constant dense<0.000000e+00> : vector<2x32xf32>
    %378 = tpu.matmul %371, %27, %cst_125 {dimension_numbers = #tpu.dot_dimension_numbers<[1], [0], [0], [1], [0, 0, 1, 1], [], []>} : vector<2x32xf32>, vector<32x32xf32>, vector<2x32xf32> -> vector<2x32xf32>
    %379 = arith.addf %375, %378 : vector<2x32xf32>
    %380 = arith.negf %379 : vector<2x32xf32>
    %381 = math.exp %380 : vector<2x32xf32>
    %cst_126 = arith.constant 1.000000e+00 : f32
    %382 = vector.broadcast %cst_126 : f32 to vector<2x32xf32>
    %383 = arith.addf %382, %381 : vector<2x32xf32>
    %384 = arith.divf %382, %383 : vector<2x32xf32>
    %cst_127 = arith.constant dense<0.000000e+00> : vector<2x32xf32>
    %385 = tpu.matmul %371, %29, %cst_127 {dimension_numbers = #tpu.dot_dimension_numbers<[1], [0], [0], [1], [0, 0, 1, 1], [], []>} : vector<2x32xf32>, vector<32x32xf32>, vector<2x32xf32> -> vector<2x32xf32>
    %386 = arith.addf %376, %385 : vector<2x32xf32>
    %387 = arith.negf %386 : vector<2x32xf32>
    %388 = math.exp %387 : vector<2x32xf32>
    %cst_128 = arith.constant 1.000000e+00 : f32
    %389 = vector.broadcast %cst_128 : f32 to vector<2x32xf32>
    %390 = arith.addf %389, %388 : vector<2x32xf32>
    %391 = arith.divf %389, %390 : vector<2x32xf32>
    %cst_129 = arith.constant dense<0.000000e+00> : vector<2x32xf32>
    %392 = tpu.matmul %371, %31, %cst_129 {dimension_numbers = #tpu.dot_dimension_numbers<[1], [0], [0], [1], [0, 0, 1, 1], [], []>} : vector<2x32xf32>, vector<32x32xf32>, vector<2x32xf32> -> vector<2x32xf32>
    %393 = vector.broadcast %32 : vector<1x32xf32> to vector<2x32xf32>
    %394 = arith.addf %392, %393 : vector<2x32xf32>
    %395 = arith.mulf %384, %394 : vector<2x32xf32>
    %396 = arith.addf %377, %395 : vector<2x32xf32>
    %397 = math.tanh %396 : vector<2x32xf32>
    %cst_130 = arith.constant 1.000000e+00 : f32
    %398 = vector.broadcast %cst_130 : f32 to vector<2x32xf32>
    %399 = arith.subf %398, %391 : vector<2x32xf32>
    %400 = arith.mulf %399, %397 : vector<2x32xf32>
    %401 = arith.mulf %391, %371 : vector<2x32xf32>
    %402 = arith.addf %400, %401 : vector<2x32xf32>
    %c11 = arith.constant 11 : index
    %c0_131 = arith.constant 0 : index
    %c0_132 = arith.constant 0 : index
    %403 = vector.load %arg6[%c11, %c0_131, %c0_132] : memref<16x2x32xf32, #tpu.memory_space<vmem>>, vector<1x2x32xf32>
    %404 = vector.shape_cast %403 : vector<1x2x32xf32> to vector<2x32xf32>
    %405 = vector.shape_cast %402 : vector<2x32xf32> to vector<1x2x32xf32>
    tpu.vector_store %arg6[%c11, %c0_131, %c0_132], %405 {strides = array<i32>} : memref<16x2x32xf32, #tpu.memory_space<vmem>>, vector<1x2x32xf32>,
    %406 = vector.extract_strided_slice %13 {offsets = [24, 0], sizes = [2, 32], strides = [1, 1]} : vector<32x32xf32> to vector<2x32xf32>
    %407 = vector.extract_strided_slice %19 {offsets = [24, 0], sizes = [2, 32], strides = [1, 1]} : vector<32x32xf32> to vector<2x32xf32>
    %408 = vector.extract_strided_slice %25 {offsets = [24, 0], sizes = [2, 32], strides = [1, 1]} : vector<32x32xf32> to vector<2x32xf32>
    %cst_133 = arith.constant dense<0.000000e+00> : vector<2x32xf32>
    %409 = tpu.matmul %402, %27, %cst_133 {dimension_numbers = #tpu.dot_dimension_numbers<[1], [0], [0], [1], [0, 0, 1, 1], [], []>} : vector<2x32xf32>, vector<32x32xf32>, vector<2x32xf32> -> vector<2x32xf32>
    %410 = arith.addf %406, %409 : vector<2x32xf32>
    %411 = arith.negf %410 : vector<2x32xf32>
    %412 = math.exp %411 : vector<2x32xf32>
    %cst_134 = arith.constant 1.000000e+00 : f32
    %413 = vector.broadcast %cst_134 : f32 to vector<2x32xf32>
    %414 = arith.addf %413, %412 : vector<2x32xf32>
    %415 = arith.divf %413, %414 : vector<2x32xf32>
    %cst_135 = arith.constant dense<0.000000e+00> : vector<2x32xf32>
    %416 = tpu.matmul %402, %29, %cst_135 {dimension_numbers = #tpu.dot_dimension_numbers<[1], [0], [0], [1], [0, 0, 1, 1], [], []>} : vector<2x32xf32>, vector<32x32xf32>, vector<2x32xf32> -> vector<2x32xf32>
    %417 = arith.addf %407, %416 : vector<2x32xf32>
    %418 = arith.negf %417 : vector<2x32xf32>
    %419 = math.exp %418 : vector<2x32xf32>
    %cst_136 = arith.constant 1.000000e+00 : f32
    %420 = vector.broadcast %cst_136 : f32 to vector<2x32xf32>
    %421 = arith.addf %420, %419 : vector<2x32xf32>
    %422 = arith.divf %420, %421 : vector<2x32xf32>
    %cst_137 = arith.constant dense<0.000000e+00> : vector<2x32xf32>
    %423 = tpu.matmul %402, %31, %cst_137 {dimension_numbers = #tpu.dot_dimension_numbers<[1], [0], [0], [1], [0, 0, 1, 1], [], []>} : vector<2x32xf32>, vector<32x32xf32>, vector<2x32xf32> -> vector<2x32xf32>
    %424 = vector.broadcast %32 : vector<1x32xf32> to vector<2x32xf32>
    %425 = arith.addf %423, %424 : vector<2x32xf32>
    %426 = arith.mulf %415, %425 : vector<2x32xf32>
    %427 = arith.addf %408, %426 : vector<2x32xf32>
    %428 = math.tanh %427 : vector<2x32xf32>
    %cst_138 = arith.constant 1.000000e+00 : f32
    %429 = vector.broadcast %cst_138 : f32 to vector<2x32xf32>
    %430 = arith.subf %429, %422 : vector<2x32xf32>
    %431 = arith.mulf %430, %428 : vector<2x32xf32>
    %432 = arith.mulf %422, %402 : vector<2x32xf32>
    %433 = arith.addf %431, %432 : vector<2x32xf32>
    %c12 = arith.constant 12 : index
    %c0_139 = arith.constant 0 : index
    %c0_140 = arith.constant 0 : index
    %434 = vector.load %arg6[%c12, %c0_139, %c0_140] : memref<16x2x32xf32, #tpu.memory_space<vmem>>, vector<1x2x32xf32>
    %435 = vector.shape_cast %434 : vector<1x2x32xf32> to vector<2x32xf32>
    %436 = vector.shape_cast %433 : vector<2x32xf32> to vector<1x2x32xf32>
    tpu.vector_store %arg6[%c12, %c0_139, %c0_140], %436 {strides = array<i32>} : memref<16x2x32xf32, #tpu.memory_space<vmem>>, vector<1x2x32xf32>,
    %437 = vector.extract_strided_slice %13 {offsets = [26, 0], sizes = [2, 32], strides = [1, 1]} : vector<32x32xf32> to vector<2x32xf32>
    %438 = vector.extract_strided_slice %19 {offsets = [26, 0], sizes = [2, 32], strides = [1, 1]} : vector<32x32xf32> to vector<2x32xf32>
    %439 = vector.extract_strided_slice %25 {offsets = [26, 0], sizes = [2, 32], strides = [1, 1]} : vector<32x32xf32> to vector<2x32xf32>
    %cst_141 = arith.constant dense<0.000000e+00> : vector<2x32xf32>
    %440 = tpu.matmul %433, %27, %cst_141 {dimension_numbers = #tpu.dot_dimension_numbers<[1], [0], [0], [1], [0, 0, 1, 1], [], []>} : vector<2x32xf32>, vector<32x32xf32>, vector<2x32xf32> -> vector<2x32xf32>
    %441 = arith.addf %437, %440 : vector<2x32xf32>
    %442 = arith.negf %441 : vector<2x32xf32>
    %443 = math.exp %442 : vector<2x32xf32>
    %cst_142 = arith.constant 1.000000e+00 : f32
    %444 = vector.broadcast %cst_142 : f32 to vector<2x32xf32>
    %445 = arith.addf %444, %443 : vector<2x32xf32>
    %446 = arith.divf %444, %445 : vector<2x32xf32>
    %cst_143 = arith.constant dense<0.000000e+00> : vector<2x32xf32>
    %447 = tpu.matmul %433, %29, %cst_143 {dimension_numbers = #tpu.dot_dimension_numbers<[1], [0], [0], [1], [0, 0, 1, 1], [], []>} : vector<2x32xf32>, vector<32x32xf32>, vector<2x32xf32> -> vector<2x32xf32>
    %448 = arith.addf %438, %447 : vector<2x32xf32>
    %449 = arith.negf %448 : vector<2x32xf32>
    %450 = math.exp %449 : vector<2x32xf32>
    %cst_144 = arith.constant 1.000000e+00 : f32
    %451 = vector.broadcast %cst_144 : f32 to vector<2x32xf32>
    %452 = arith.addf %451, %450 : vector<2x32xf32>
    %453 = arith.divf %451, %452 : vector<2x32xf32>
    %cst_145 = arith.constant dense<0.000000e+00> : vector<2x32xf32>
    %454 = tpu.matmul %433, %31, %cst_145 {dimension_numbers = #tpu.dot_dimension_numbers<[1], [0], [0], [1], [0, 0, 1, 1], [], []>} : vector<2x32xf32>, vector<32x32xf32>, vector<2x32xf32> -> vector<2x32xf32>
    %455 = vector.broadcast %32 : vector<1x32xf32> to vector<2x32xf32>
    %456 = arith.addf %454, %455 : vector<2x32xf32>
    %457 = arith.mulf %446, %456 : vector<2x32xf32>
    %458 = arith.addf %439, %457 : vector<2x32xf32>
    %459 = math.tanh %458 : vector<2x32xf32>
    %cst_146 = arith.constant 1.000000e+00 : f32
    %460 = vector.broadcast %cst_146 : f32 to vector<2x32xf32>
    %461 = arith.subf %460, %453 : vector<2x32xf32>
    %462 = arith.mulf %461, %459 : vector<2x32xf32>
    %463 = arith.mulf %453, %433 : vector<2x32xf32>
    %464 = arith.addf %462, %463 : vector<2x32xf32>
    %c13 = arith.constant 13 : index
    %c0_147 = arith.constant 0 : index
    %c0_148 = arith.constant 0 : index
    %465 = vector.load %arg6[%c13, %c0_147, %c0_148] : memref<16x2x32xf32, #tpu.memory_space<vmem>>, vector<1x2x32xf32>
    %466 = vector.shape_cast %465 : vector<1x2x32xf32> to vector<2x32xf32>
    %467 = vector.shape_cast %464 : vector<2x32xf32> to vector<1x2x32xf32>
    tpu.vector_store %arg6[%c13, %c0_147, %c0_148], %467 {strides = array<i32>} : memref<16x2x32xf32, #tpu.memory_space<vmem>>, vector<1x2x32xf32>,
    %468 = vector.extract_strided_slice %13 {offsets = [28, 0], sizes = [2, 32], strides = [1, 1]} : vector<32x32xf32> to vector<2x32xf32>
    %469 = vector.extract_strided_slice %19 {offsets = [28, 0], sizes = [2, 32], strides = [1, 1]} : vector<32x32xf32> to vector<2x32xf32>
    %470 = vector.extract_strided_slice %25 {offsets = [28, 0], sizes = [2, 32], strides = [1, 1]} : vector<32x32xf32> to vector<2x32xf32>
    %cst_149 = arith.constant dense<0.000000e+00> : vector<2x32xf32>
    %471 = tpu.matmul %464, %27, %cst_149 {dimension_numbers = #tpu.dot_dimension_numbers<[1], [0], [0], [1], [0, 0, 1, 1], [], []>} : vector<2x32xf32>, vector<32x32xf32>, vector<2x32xf32> -> vector<2x32xf32>
    %472 = arith.addf %468, %471 : vector<2x32xf32>
    %473 = arith.negf %472 : vector<2x32xf32>
    %474 = math.exp %473 : vector<2x32xf32>
    %cst_150 = arith.constant 1.000000e+00 : f32
    %475 = vector.broadcast %cst_150 : f32 to vector<2x32xf32>
    %476 = arith.addf %475, %474 : vector<2x32xf32>
    %477 = arith.divf %475, %476 : vector<2x32xf32>
    %cst_151 = arith.constant dense<0.000000e+00> : vector<2x32xf32>
    %478 = tpu.matmul %464, %29, %cst_151 {dimension_numbers = #tpu.dot_dimension_numbers<[1], [0], [0], [1], [0, 0, 1, 1], [], []>} : vector<2x32xf32>, vector<32x32xf32>, vector<2x32xf32> -> vector<2x32xf32>
    %479 = arith.addf %469, %478 : vector<2x32xf32>
    %480 = arith.negf %479 : vector<2x32xf32>
    %481 = math.exp %480 : vector<2x32xf32>
    %cst_152 = arith.constant 1.000000e+00 : f32
    %482 = vector.broadcast %cst_152 : f32 to vector<2x32xf32>
    %483 = arith.addf %482, %481 : vector<2x32xf32>
    %484 = arith.divf %482, %483 : vector<2x32xf32>
    %cst_153 = arith.constant dense<0.000000e+00> : vector<2x32xf32>
    %485 = tpu.matmul %464, %31, %cst_153 {dimension_numbers = #tpu.dot_dimension_numbers<[1], [0], [0], [1], [0, 0, 1, 1], [], []>} : vector<2x32xf32>, vector<32x32xf32>, vector<2x32xf32> -> vector<2x32xf32>
    %486 = vector.broadcast %32 : vector<1x32xf32> to vector<2x32xf32>
    %487 = arith.addf %485, %486 : vector<2x32xf32>
    %488 = arith.mulf %477, %487 : vector<2x32xf32>
    %489 = arith.addf %470, %488 : vector<2x32xf32>
    %490 = math.tanh %489 : vector<2x32xf32>
    %cst_154 = arith.constant 1.000000e+00 : f32
    %491 = vector.broadcast %cst_154 : f32 to vector<2x32xf32>
    %492 = arith.subf %491, %484 : vector<2x32xf32>
    %493 = arith.mulf %492, %490 : vector<2x32xf32>
    %494 = arith.mulf %484, %464 : vector<2x32xf32>
    %495 = arith.addf %493, %494 : vector<2x32xf32>
    %c14 = arith.constant 14 : index
    %c0_155 = arith.constant 0 : index
    %c0_156 = arith.constant 0 : index
    %496 = vector.load %arg6[%c14, %c0_155, %c0_156] : memref<16x2x32xf32, #tpu.memory_space<vmem>>, vector<1x2x32xf32>
    %497 = vector.shape_cast %496 : vector<1x2x32xf32> to vector<2x32xf32>
    %498 = vector.shape_cast %495 : vector<2x32xf32> to vector<1x2x32xf32>
    tpu.vector_store %arg6[%c14, %c0_155, %c0_156], %498 {strides = array<i32>} : memref<16x2x32xf32, #tpu.memory_space<vmem>>, vector<1x2x32xf32>,
    %499 = vector.extract_strided_slice %13 {offsets = [30, 0], sizes = [2, 32], strides = [1, 1]} : vector<32x32xf32> to vector<2x32xf32>
    %500 = vector.extract_strided_slice %19 {offsets = [30, 0], sizes = [2, 32], strides = [1, 1]} : vector<32x32xf32> to vector<2x32xf32>
    %501 = vector.extract_strided_slice %25 {offsets = [30, 0], sizes = [2, 32], strides = [1, 1]} : vector<32x32xf32> to vector<2x32xf32>
    %cst_157 = arith.constant dense<0.000000e+00> : vector<2x32xf32>
    %502 = tpu.matmul %495, %27, %cst_157 {dimension_numbers = #tpu.dot_dimension_numbers<[1], [0], [0], [1], [0, 0, 1, 1], [], []>} : vector<2x32xf32>, vector<32x32xf32>, vector<2x32xf32> -> vector<2x32xf32>
    %503 = arith.addf %499, %502 : vector<2x32xf32>
    %504 = arith.negf %503 : vector<2x32xf32>
    %505 = math.exp %504 : vector<2x32xf32>
    %cst_158 = arith.constant 1.000000e+00 : f32
    %506 = vector.broadcast %cst_158 : f32 to vector<2x32xf32>
    %507 = arith.addf %506, %505 : vector<2x32xf32>
    %508 = arith.divf %506, %507 : vector<2x32xf32>
    %cst_159 = arith.constant dense<0.000000e+00> : vector<2x32xf32>
    %509 = tpu.matmul %495, %29, %cst_159 {dimension_numbers = #tpu.dot_dimension_numbers<[1], [0], [0], [1], [0, 0, 1, 1], [], []>} : vector<2x32xf32>, vector<32x32xf32>, vector<2x32xf32> -> vector<2x32xf32>
    %510 = arith.addf %500, %509 : vector<2x32xf32>
    %511 = arith.negf %510 : vector<2x32xf32>
    %512 = math.exp %511 : vector<2x32xf32>
    %cst_160 = arith.constant 1.000000e+00 : f32
    %513 = vector.broadcast %cst_160 : f32 to vector<2x32xf32>
    %514 = arith.addf %513, %512 : vector<2x32xf32>
    %515 = arith.divf %513, %514 : vector<2x32xf32>
    %cst_161 = arith.constant dense<0.000000e+00> : vector<2x32xf32>
    %516 = tpu.matmul %495, %31, %cst_161 {dimension_numbers = #tpu.dot_dimension_numbers<[1], [0], [0], [1], [0, 0, 1, 1], [], []>} : vector<2x32xf32>, vector<32x32xf32>, vector<2x32xf32> -> vector<2x32xf32>
    %517 = vector.broadcast %32 : vector<1x32xf32> to vector<2x32xf32>
    %518 = arith.addf %516, %517 : vector<2x32xf32>
    %519 = arith.mulf %508, %518 : vector<2x32xf32>
    %520 = arith.addf %501, %519 : vector<2x32xf32>
    %521 = math.tanh %520 : vector<2x32xf32>
    %cst_162 = arith.constant 1.000000e+00 : f32
    %522 = vector.broadcast %cst_162 : f32 to vector<2x32xf32>
    %523 = arith.subf %522, %515 : vector<2x32xf32>
    %524 = arith.mulf %523, %521 : vector<2x32xf32>
    %525 = arith.mulf %515, %495 : vector<2x32xf32>
    %526 = arith.addf %524, %525 : vector<2x32xf32>
    %c15 = arith.constant 15 : index
    %c0_163 = arith.constant 0 : index
    %c0_164 = arith.constant 0 : index
    %527 = vector.load %arg6[%c15, %c0_163, %c0_164] : memref<16x2x32xf32, #tpu.memory_space<vmem>>, vector<1x2x32xf32>
    %528 = vector.shape_cast %527 : vector<1x2x32xf32> to vector<2x32xf32>
    %529 = vector.shape_cast %526 : vector<2x32xf32> to vector<1x2x32xf32>
    tpu.vector_store %arg6[%c15, %c0_163, %c0_164], %529 {strides = array<i32>} : memref<16x2x32xf32, #tpu.memory_space<vmem>>, vector<1x2x32xf32>,
    %c0_165 = arith.constant 0 : index
    %c0_166 = arith.constant 0 : index
    %530 = vector.load %arg7[%c0_165, %c0_166] : memref<2x32xf32, #tpu.memory_space<vmem>>, vector<2x32xf32>
    tpu.vector_store %arg7[%c0_165, %c0_166], %526 {strides = array<i32>} : memref<2x32xf32, #tpu.memory_space<vmem>>, vector<2x32xf32>,
    return
  }
}

</mosaic_0001>

<llo_original>
// kernel: crnn_forward.1
$region0: #{crnn_forward.1}
  #allocation0 [shape = 'u32[]', space=smem, size = 0x4, offset = 0x4, fixed_abs, tag = 'smem constant byte address 0x4 - core index']
  #allocation1 [shape = 'u32[144,128]{1,0:T(1,128)}', space=vmem, size = 0x12000, scoped, tag = 'internal scratch']
  %s0 = inlined_call_operand.vmem [shape: f32[32,216], index: 0, kind: input, shape index: {}]
  %s1 = inlined_call_operand.vmem [shape: f32[216,128], index: 1, kind: input, shape index: {}]
  %s2 = inlined_call_operand.vmem [shape: f32[1,128], index: 2, kind: input, shape index: {}]
  %s3 = inlined_call_operand.vmem [shape: f32[3,128,32], index: 3, kind: input, shape index: {}]
  %s4 = inlined_call_operand.vmem [shape: f32[3,32,32], index: 4, kind: input, shape index: {}]
  %s5 = inlined_call_operand.vmem [shape: f32[4,32], index: 5, kind: input, shape index: {}]
  %s6 = inlined_call_operand.vmem [shape: f32[16,2,32], index: 6, kind: output, shape index: {0}]
  %s7 = inlined_call_operand.hbm [shape: f32[2,32], index: 7, kind: output, shape index: {1}]
  %8 = xla_tuple %s6, %s7
  %s9 = sld [smem:[#allocation0]]
  $region42: #{crnn_forward.1} parent=0
    _
  %s11 = ssub.s32 1, %s9
  %s12 = scalar_select 0, %s11, %s9
  $region1: #{crnn_forward.1} parent=0
    #allocation2 [shape = 'u8[1024]{0}', space=vmem, size = 0x400, scoped, tag = 'output window, operand 1, single buffered']
    #allocation3 [shape = 's32[1]{0}', space=sflag, size = 0x4, scoped, tag = 'scoped memory for crnn_forward.1']
    %13 = vsyncpa [#allocation3], 0
    // Predicated region
    $region2: #{crnn_forward.1} parent=1 // pred_check
      _
    $region3: #{crnn_forward.1} parent=1 // pred_check_branch
      %15 = sbr.rel (0) target = $region5
    $region4: #{crnn_forward.1} parent=1 // pred_region
      _
    $region5: #{crnn_forward.1} parent=1 // pred_fallthru
      _
    // Predicated region
    $region6: #{crnn_forward.1} parent=1 // pred_check
      _
    $region7: #{crnn_forward.1} parent=1 // pred_check_branch
      %17 = sbr.rel (0) target = $region9
    $region8: #{crnn_forward.1} parent=1 // pred_region
      _
    $region9: #{crnn_forward.1} parent=1 // pred_fallthru
      _
    // Predicated region
    $region10: #{crnn_forward.1} parent=1 // pred_check
      _
    $region11: #{crnn_forward.1} parent=1 // pred_check_branch
      %19 = sbr.rel (0) target = $region13
    $region12: #{crnn_forward.1} parent=1 // pred_region
      _
    $region13: #{crnn_forward.1} parent=1 // pred_fallthru
      _
    // Predicated region
    $region14: #{crnn_forward.1} parent=1 // pred_check
      _
    $region15: #{crnn_forward.1} parent=1 // pred_check_branch
      %21 = sbr.rel (0) target = $region17
    $region16: #{crnn_forward.1} parent=1 // pred_region
      _
    $region17: #{crnn_forward.1} parent=1 // pred_fallthru
      _
    // Predicated region
    $region18: #{crnn_forward.1} parent=1 // pred_check
      _
    $region19: #{crnn_forward.1} parent=1 // pred_check_branch
      %23 = sbr.rel (0) target = $region21
    $region20: #{crnn_forward.1} parent=1 // pred_region
      _
    $region21: #{crnn_forward.1} parent=1 // pred_fallthru
      _
    // Predicated region
    $region22: #{crnn_forward.1} parent=1 // pred_check
      _
    $region23: #{crnn_forward.1} parent=1 // pred_check_branch
      %25 = sbr.rel (0) target = $region25
    $region24: #{crnn_forward.1} parent=1 // pred_region
      _
    $region25: #{crnn_forward.1} parent=1 // pred_fallthru
      _
    %v26 = vld [vmem:[%s0] sm:$0xff]
    %v27 = vld [vmem:[%s0 + $0x8] sm:$0xff]
    %v28 = vld [vmem:[%s0 + $0x10] sm:$0xff]
    %v29 = vld [vmem:[%s0 + $0x18] sm:$0xff]
    %v30 = vld [vmem:[%s0 + $0x20] sm:$0xff]
    %v31 = vld [vmem:[%s0 + $0x28] sm:$0xff]
    %v32 = vld [vmem:[%s0 + $0x30] sm:$0xff]
    %v33 = vld [vmem:[%s0 + $0x38] sm:$0xff]
    %v34 = vld [vmem:[%s1] sm:$0xff]
    %v35 = vld [vmem:[%s1 + $0x8] sm:$0xff]
    %v36 = vld [vmem:[%s1 + $0x10] sm:$0xff]
    %v37 = vld [vmem:[%s1 + $0x18] sm:$0xff]
    %v38 = vld [vmem:[%s1 + $0x20] sm:$0xff]
    %v39 = vld [vmem:[%s1 + $0x28] sm:$0xff]
    %v40 = vld [vmem:[%s1 + $0x30] sm:$0xff]
    %v41 = vld [vmem:[%s1 + $0x38] sm:$0xff]
    %v42 = vld [vmem:[%s1 + $0x40] sm:$0xff]
    %v43 = vld [vmem:[%s1 + $0x48] sm:$0xff]
    %v44 = vld [vmem:[%s1 + $0x50] sm:$0xff]
    %v45 = vld [vmem:[%s1 + $0x58] sm:$0xff]
    %v46 = vld [vmem:[%s1 + $0x60] sm:$0xff]
    %v47 = vld [vmem:[%s1 + $0x68] sm:$0xff]
    %v48 = vld [vmem:[%s1 + $0x70] sm:$0xff]
    %v49 = vld [vmem:[%s1 + $0x78] sm:$0xff]
    %v50 = vld [vmem:[%s1 + $0x80] sm:$0xff]
    %v51 = vld [vmem:[%s1 + $0x88] sm:$0xff]
    %v52 = vld [vmem:[%s1 + $0x90] sm:$0xff]
    %v53 = vld [vmem:[%s1 + $0x98] sm:$0xff]
    %v54 = vld [vmem:[%s1 + $0xa0] sm:$0xff]
    %v55 = vld [vmem:[%s1 + $0xa8] sm:$0xff]
    %v56 = vld [vmem:[%s1 + $0xb0] sm:$0xff]
    %v57 = vld [vmem:[%s1 + $0xb8] sm:$0xff]
    %v58 = vld [vmem:[%s1 + $0xc0] sm:$0xff]
    %v59 = vld [vmem:[%s1 + $0xc8] sm:$0xff]
    %v60 = vld [vmem:[%s1 + $0xd0] sm:$0xff]
    %v61 = vld [vmem:[%s2] sm:$0x1]
    %v63 = vlaneseq
    %v64 = vshrl.u32 %v63, 7
    %v65 = vsub.s32 0, %v64
    %v66 = vrot.slane %v61, %v65
    %vm68 = vcmask 719872
    %v70 = vsel %vm68, %v27, 0
    %v73 = vsel %vm68, %v29, 0
    %v76 = vsel %vm68, %v31, 0
    %v79 = vsel %vm68, %v33, 0
    %81 = vmatprep.subr.mxu0 0.0
    %82 = vmatpush1.msra.mxu0 %v34
    %83 = vmatprep.subr.mxu0 0.0
    %84 = vmatpush1.msra.mxu0 %v35
    %85 = vmatprep.subr.mxu0 0.0
    %86 = vmatpush1.msra.mxu0 %v36
    %87 = vmatprep.subr.mxu0 0.0
    %88 = vmatpush1.msra.mxu0 %v37
    %89 = vmatprep.subr.mxu0 0.0
    %90 = vmatpush1.msra.mxu0 %v38
    %91 = vmatprep.subr.mxu0 0.0
    %92 = vmatpush1.msra.mxu0 %v39
    %93 = vmatprep.subr.mxu0 0.0
    %94 = vmatpush1.msra.mxu0 %v40
    %95 = vmatprep.subr.mxu0 0.0
    %96 = vmatpush1.msra.mxu0 %v41
    %97 = vmatprep.subr.mxu0 0.0
    %98 = vmatpush1.msra.mxu0 %v42
    %99 = vmatprep.subr.mxu0 0.0
    %100 = vmatpush1.msra.mxu0 %v43
    %101 = vmatprep.subr.mxu0 0.0
    %102 = vmatpush1.msra.mxu0 %v44
    %103 = vmatprep.subr.mxu0 0.0
    %104 = vmatpush1.msra.mxu0 %v45
    %105 = vmatprep.subr.mxu0 0.0
    %106 = vmatpush1.msra.mxu0 %v46
    %107 = vmatprep.subr.mxu0 0.0
    %108 = vmatpush1.msra.mxu0 %v47
    %109 = vmatprep.subr.mxu0 0.0
    %110 = vmatpush1.msra.mxu0 %v48
    %111 = vmatprep.subr.mxu0 0.0
    %112 = vmatpush1.msra.mxu0 %v49
    %113 = vmatprep.subr.mxu0 0.0
    %114 = vmatpush1.msra.mxu0 %v50
    %115 = vmatprep.subr.mxu0 0.0
    %116 = vmatpush1.msra.mxu0 %v51
    %117 = vmatprep.subr.mxu0 0.0
    %118 = vmatpush1.msra.mxu0 %v52
    %119 = vmatprep.subr.mxu0 0.0
    %120 = vmatpush1.msra.mxu0 %v53
    %121 = vmatprep.subr.mxu0 0.0
    %122 = vmatpush1.msra.mxu0 %v54
    %123 = vmatprep.subr.mxu0 0.0
    %124 = vmatpush1.msra.mxu0 %v55
    %125 = vmatprep.subr.mxu0 0.0
    %126 = vmatpush1.msra.mxu0 %v56
    %127 = vmatprep.subr.mxu0 0.0
    %128 = vmatpush1.msra.mxu0 %v57
    %129 = vmatprep.subr.mxu0 0.0
    %130 = vmatpush1.msra.mxu0 %v58
    %131 = vmatprep.subr.mxu0 0.0
    %132 = vmatpush1.msra.mxu0 %v59
    %133 = vmatprep.subr.mxu0 0.0
    %134 = vmatpush1.msra.mxu0 %v60
    %135 = vmatprep.subr.mxu0 0.0
    %136 = vmatpush1.msra.mxu0 0.0
    %137 = vmatprep.subr.mxu0 0.0
    %138 = vmatpush1.msra.mxu0 0.0
    %139 = vmatprep.subr.mxu0 0.0
    %140 = vmatpush1.msra.mxu0 0.0
    %141 = vmatprep.subr.mxu0 0.0
    %142 = vmatpush1.msra.mxu0 0.0
    %143 = vmatprep.subr.mxu0 0.0
    %144 = vmatpush1.msra.mxu0 0.0
    %145 = vmatprep.mubr.f32.mxu0 %v70
    %146 = vmatmul.mubr.f32.gmra.mrb[0].mxu0 %v26
    %v147 = vpop.f32.mrb[0].mxu0
    %v148 = vadd.f32 %v66, %v147
    %v149 = vpop.f32.mrb[0].mxu0
    %150 = vmatprep.mubr.f32.mxu0 %v73
    %151 = vmatmul.mubr.f32.gmra.mrb[0].mxu0 %v28
    %v152 = vpop.f32.mrb[0].mxu0
    %v153 = vadd.f32 %v66, %v152
    %v154 = vpop.f32.mrb[0].mxu0
    %155 = vmatprep.mubr.f32.mxu0 %v76
    %156 = vmatmul.mubr.f32.gmra.mrb[0].mxu0 %v30
    %v157 = vpop.f32.mrb[0].mxu0
    %v158 = vadd.f32 %v66, %v157
    %v159 = vpop.f32.mrb[0].mxu0
    %160 = vmatprep.mubr.f32.mxu0 %v79
    %161 = vmatmul.mubr.f32.gmra.mrb[0].mxu0 %v32
    %v162 = vpop.f32.mrb[0].mxu0
    %v163 = vadd.f32 %v66, %v162
    %v164 = vpop.f32.mrb[0].mxu0
    %165 = vdwg.mxu0
    %v166 = vmax.f32 %v148, 0.0
    %v167 = vmax.f32 %v153, 0.0
    %v168 = vmax.f32 %v158, 0.0
    %v169 = vmax.f32 %v163, 0.0
    %v170 = vld [vmem:[%s3] sm:$0xff]
    %v171 = vld [vmem:[%s3 + $0x8] sm:$0xff]
    %v172 = vld [vmem:[%s3 + $0x10] sm:$0xff]
    %v173 = vld [vmem:[%s3 + $0x18] sm:$0xff]
    %v174 = vld [vmem:[%s3 + $0x20] sm:$0xff]
    %v175 = vld [vmem:[%s3 + $0x28] sm:$0xff]
    %v176 = vld [vmem:[%s3 + $0x30] sm:$0xff]
    %v177 = vld [vmem:[%s3 + $0x38] sm:$0xff]
    %v178 = vld [vmem:[%s3 + $0x40] sm:$0xff]
    %v179 = vld [vmem:[%s3 + $0x48] sm:$0xff]
    %v180 = vld [vmem:[%s3 + $0x50] sm:$0xff]
    %v181 = vld [vmem:[%s3 + $0x58] sm:$0xff]
    %v182 = vld [vmem:[%s3 + $0x60] sm:$0xff]
    %v183 = vld [vmem:[%s3 + $0x68] sm:$0xff]
    %v184 = vld [vmem:[%s3 + $0x70] sm:$0xff]
    %v185 = vld [vmem:[%s3 + $0x78] sm:$0xff]
    %v186 = vld [vmem:[%s5] sm:$0x1]
    %v187 = vlaneseq
    %v188 = vshrl.u32 %v187, 7
    %v189 = vsub.s32 0, %v188
    %v190 = vrot.slane %v186, %v189
    %191 = vmatprep.subr.mxu0 0.0
    %192 = vmatpush1.msra.mxu0 %v170
    %193 = vmatprep.subr.mxu0 0.0
    %194 = vmatpush1.msra.mxu0 %v171
    %195 = vmatprep.subr.mxu0 0.0
    %196 = vmatpush1.msra.mxu0 %v172
    %197 = vmatprep.subr.mxu0 0.0
    %198 = vmatpush1.msra.mxu0 %v173
    %199 = vmatprep.subr.mxu0 0.0
    %200 = vmatpush1.msra.mxu0 %v174
    %201 = vmatprep.subr.mxu0 0.0
    %202 = vmatpush1.msra.mxu0 %v175
    %203 = vmatprep.subr.mxu0 0.0
    %204 = vmatpush1.msra.mxu0 %v176
    %205 = vmatprep.subr.mxu0 0.0
    %206 = vmatpush1.msra.mxu0 %v177
    %207 = vmatprep.subr.mxu0 0.0
    %208 = vmatpush1.msra.mxu0 %v178
    %209 = vmatprep.subr.mxu0 0.0
    %210 = vmatpush1.msra.mxu0 %v179
    %211 = vmatprep.subr.mxu0 0.0
    %212 = vmatpush1.msra.mxu0 %v180
    %213 = vmatprep.subr.mxu0 0.0
    %214 = vmatpush1.msra.mxu0 %v181
    %215 = vmatprep.subr.mxu0 0.0
    %216 = vmatpush1.msra.mxu0 %v182
    %217 = vmatprep.subr.mxu0 0.0
    %218 = vmatpush1.msra.mxu0 %v183
    %219 = vmatprep.subr.mxu0 0.0
    %220 = vmatpush1.msra.mxu0 %v184
    %221 = vmatprep.subr.mxu0 0.0
    %222 = vmatpush1.msra.mxu0 %v185
    %223 = vmatprep.subr.mxu0 0.0
    %224 = vmatpush1.msra.mxu0 0.0
    %225 = vmatprep.subr.mxu0 0.0
    %226 = vmatpush1.msra.mxu0 0.0
    %227 = vmatprep.subr.mxu0 0.0
    %228 = vmatpush1.msra.mxu0 0.0
    %229 = vmatprep.subr.mxu0 0.0
    %230 = vmatpush1.msra.mxu0 0.0
    %231 = vmatprep.subr.mxu0 0.0
    %232 = vmatpush1.msra.mxu0 0.0
    %233 = vmatprep.subr.mxu0 0.0
    %234 = vmatpush1.msra.mxu0 0.0
    %235 = vmatprep.subr.mxu0 0.0
    %236 = vmatpush1.msra.mxu0 0.0
    %237 = vmatprep.subr.mxu0 0.0
    %238 = vmatpush1.msra.mxu0 0.0
    %239 = vmatprep.subr.mxu0 0.0
    %240 = vmatpush1.msra.mxu0 0.0
    %241 = vmatprep.subr.mxu0 0.0
    %242 = vmatpush1.msra.mxu0 0.0
    %243 = vmatprep.subr.mxu0 0.0
    %244 = vmatpush1.msra.mxu0 0.0
    %245 = vmatprep.subr.mxu0 0.0
    %246 = vmatpush1.msra.mxu0 0.0
    %247 = vmatprep.subr.mxu0 0.0
    %248 = vmatpush1.msra.mxu0 0.0
    %249 = vmatprep.subr.mxu0 0.0
    %250 = vmatpush1.msra.mxu0 0.0
    %251 = vmatprep.subr.mxu0 0.0
    %252 = vmatpush1.msra.mxu0 0.0
    %253 = vmatprep.subr.mxu0 0.0
    %254 = vmatpush1.msra.mxu0 0.0
    %255 = vmatprep.mubr.f32.mxu0 0.0
    %256 = vmatmul.mubr.f32.gmra.mrb[0].mxu0 %v166
    %v257 = vpop.f32.mrb[0].mxu0
    %v258 = vadd.f32 %v190, %v257
    %v259 = vpop.f32.mrb[0].mxu0
    %260 = vmatprep.mubr.f32.mxu0 0.0
    %261 = vmatmul.mubr.f32.gmra.mrb[0].mxu0 %v167
    %v262 = vpop.f32.mrb[0].mxu0
    %v263 = vadd.f32 %v190, %v262
    %v264 = vpop.f32.mrb[0].mxu0
    %265 = vmatprep.mubr.f32.mxu0 0.0
    %266 = vmatmul.mubr.f32.gmra.mrb[0].mxu0 %v168
    %v267 = vpop.f32.mrb[0].mxu0
    %v268 = vadd.f32 %v190, %v267
    %v269 = vpop.f32.mrb[0].mxu0
    %270 = vmatprep.mubr.f32.mxu0 0.0
    %271 = vmatmul.mubr.f32.gmra.mrb[0].mxu0 %v169
    %v272 = vpop.f32.mrb[0].mxu0
    %v273 = vadd.f32 %v190, %v272
    %v274 = vpop.f32.mrb[0].mxu0
    %275 = vdwg.mxu0
    %s276 = scalar_lea.vmem %s3, 128
    %v277 = vld [vmem:[%s276] sm:$0xff]
    %v278 = vld [vmem:[%s276 + $0x8] sm:$0xff]
    %v279 = vld [vmem:[%s276 + $0x10] sm:$0xff]
    %v280 = vld [vmem:[%s276 + $0x18] sm:$0xff]
    %v281 = vld [vmem:[%s276 + $0x20] sm:$0xff]
    %v282 = vld [vmem:[%s276 + $0x28] sm:$0xff]
    %v283 = vld [vmem:[%s276 + $0x30] sm:$0xff]
    %v284 = vld [vmem:[%s276 + $0x38] sm:$0xff]
    %v285 = vld [vmem:[%s276 + $0x40] sm:$0xff]
    %v286 = vld [vmem:[%s276 + $0x48] sm:$0xff]
    %v287 = vld [vmem:[%s276 + $0x50] sm:$0xff]
    %v288 = vld [vmem:[%s276 + $0x58] sm:$0xff]
    %v289 = vld [vmem:[%s276 + $0x60] sm:$0xff]
    %v290 = vld [vmem:[%s276 + $0x68] sm:$0xff]
    %v291 = vld [vmem:[%s276 + $0x70] sm:$0xff]
    %v292 = vld [vmem:[%s276 + $0x78] sm:$0xff]
    %v293 = vld [vmem:[%s5 + $0x1] sm:$0x1]
    %v294 = vlaneseq
    %v295 = vshrl.u32 %v294, 7
    %v296 = vsub.s32 0, %v295
    %v297 = vrot.slane %v293, %v296
    %298 = vmatprep.subr.mxu0 0.0
    %299 = vmatpush1.msra.mxu0 %v277
    %300 = vmatprep.subr.mxu0 0.0
    %301 = vmatpush1.msra.mxu0 %v278
    %302 = vmatprep.subr.mxu0 0.0
    %303 = vmatpush1.msra.mxu0 %v279
    %304 = vmatprep.subr.mxu0 0.0
    %305 = vmatpush1.msra.mxu0 %v280
    %306 = vmatprep.subr.mxu0 0.0
    %307 = vmatpush1.msra.mxu0 %v281
    %308 = vmatprep.subr.mxu0 0.0
    %309 = vmatpush1.msra.mxu0 %v282
    %310 = vmatprep.subr.mxu0 0.0
    %311 = vmatpush1.msra.mxu0 %v283
    %312 = vmatprep.subr.mxu0 0.0
    %313 = vmatpush1.msra.mxu0 %v284
    %314 = vmatprep.subr.mxu0 0.0
    %315 = vmatpush1.msra.mxu0 %v285
    %316 = vmatprep.subr.mxu0 0.0
    %317 = vmatpush1.msra.mxu0 %v286
    %318 = vmatprep.subr.mxu0 0.0
    %319 = vmatpush1.msra.mxu0 %v287
    %320 = vmatprep.subr.mxu0 0.0
    %321 = vmatpush1.msra.mxu0 %v288
    %322 = vmatprep.subr.mxu0 0.0
    %323 = vmatpush1.msra.mxu0 %v289
    %324 = vmatprep.subr.mxu0 0.0
    %325 = vmatpush1.msra.mxu0 %v290
    %326 = vmatprep.subr.mxu0 0.0
    %327 = vmatpush1.msra.mxu0 %v291
    %328 = vmatprep.subr.mxu0 0.0
    %329 = vmatpush1.msra.mxu0 %v292
    %330 = vmatprep.subr.mxu0 0.0
    %331 = vmatpush1.msra.mxu0 0.0
    %332 = vmatprep.subr.mxu0 0.0
    %333 = vmatpush1.msra.mxu0 0.0
    %334 = vmatprep.subr.mxu0 0.0
    %335 = vmatpush1.msra.mxu0 0.0
    %336 = vmatprep.subr.mxu0 0.0
    %337 = vmatpush1.msra.mxu0 0.0
    %338 = vmatprep.subr.mxu0 0.0
    %339 = vmatpush1.msra.mxu0 0.0
    %340 = vmatprep.subr.mxu0 0.0
    %341 = vmatpush1.msra.mxu0 0.0
    %342 = vmatprep.subr.mxu0 0.0
    %343 = vmatpush1.msra.mxu0 0.0
    %344 = vmatprep.subr.mxu0 0.0
    %345 = vmatpush1.msra.mxu0 0.0
    %346 = vmatprep.subr.mxu0 0.0
    %347 = vmatpush1.msra.mxu0 0.0
    %348 = vmatprep.subr.mxu0 0.0
    %349 = vmatpush1.msra.mxu0 0.0
    %350 = vmatprep.subr.mxu0 0.0
    %351 = vmatpush1.msra.mxu0 0.0
    %352 = vmatprep.subr.mxu0 0.0
    %353 = vmatpush1.msra.mxu0 0.0
    %354 = vmatprep.subr.mxu0 0.0
    %355 = vmatpush1.msra.mxu0 0.0
    %356 = vmatprep.subr.mxu0 0.0
    %357 = vmatpush1.msra.mxu0 0.0
    %358 = vmatprep.subr.mxu0 0.0
    %359 = vmatpush1.msra.mxu0 0.0
    %360 = vmatprep.subr.mxu0 0.0
    %361 = vmatpush1.msra.mxu0 0.0
    %362 = vmatprep.mubr.f32.mxu0 0.0
    %363 = vmatmul.mubr.f32.gmra.mrb[0].mxu0 %v166
    %v364 = vpop.f32.mrb[0].mxu0
    %v365 = vadd.f32 %v297, %v364
    %v366 = vpop.f32.mrb[0].mxu0
    %367 = vmatprep.mubr.f32.mxu0 0.0
    %368 = vmatmul.mubr.f32.gmra.mrb[0].mxu0 %v167
    %v369 = vpop.f32.mrb[0].mxu0
    %v370 = vadd.f32 %v297, %v369
    %v371 = vpop.f32.mrb[0].mxu0
    %372 = vmatprep.mubr.f32.mxu0 0.0
    %373 = vmatmul.mubr.f32.gmra.mrb[0].mxu0 %v168
    %v374 = vpop.f32.mrb[0].mxu0
    %v375 = vadd.f32 %v297, %v374
    %v376 = vpop.f32.mrb[0].mxu0
    %377 = vmatprep.mubr.f32.mxu0 0.0
    %378 = vmatmul.mubr.f32.gmra.mrb[0].mxu0 %v169
    %v379 = vpop.f32.mrb[0].mxu0
    %v380 = vadd.f32 %v297, %v379
    %v381 = vpop.f32.mrb[0].mxu0
    %382 = vdwg.mxu0
    %s383 = scalar_lea.vmem %s3, 256
    %v384 = vld [vmem:[%s383] sm:$0xff]
    %v385 = vld [vmem:[%s383 + $0x8] sm:$0xff]
    %v386 = vld [vmem:[%s383 + $0x10] sm:$0xff]
    %v387 = vld [vmem:[%s383 + $0x18] sm:$0xff]
    %v388 = vld [vmem:[%s383 + $0x20] sm:$0xff]
    %v389 = vld [vmem:[%s383 + $0x28] sm:$0xff]
    %v390 = vld [vmem:[%s383 + $0x30] sm:$0xff]
    %v391 = vld [vmem:[%s383 + $0x38] sm:$0xff]
    %v392 = vld [vmem:[%s383 + $0x40] sm:$0xff]
    %v393 = vld [vmem:[%s383 + $0x48] sm:$0xff]
    %v394 = vld [vmem:[%s383 + $0x50] sm:$0xff]
    %v395 = vld [vmem:[%s383 + $0x58] sm:$0xff]
    %v396 = vld [vmem:[%s383 + $0x60] sm:$0xff]
    %v397 = vld [vmem:[%s383 + $0x68] sm:$0xff]
    %v398 = vld [vmem:[%s383 + $0x70] sm:$0xff]
    %v399 = vld [vmem:[%s383 + $0x78] sm:$0xff]
    %v400 = vld [vmem:[%s5 + $0x2] sm:$0x1]
    %v401 = vlaneseq
    %v402 = vshrl.u32 %v401, 7
    %v403 = vsub.s32 0, %v402
    %v404 = vrot.slane %v400, %v403
    %405 = vmatprep.subr.mxu0 0.0
    %406 = vmatpush1.msra.mxu0 %v384
    %407 = vmatprep.subr.mxu0 0.0
    %408 = vmatpush1.msra.mxu0 %v385
    %409 = vmatprep.subr.mxu0 0.0
    %410 = vmatpush1.msra.mxu0 %v386
    %411 = vmatprep.subr.mxu0 0.0
    %412 = vmatpush1.msra.mxu0 %v387
    %413 = vmatprep.subr.mxu0 0.0
    %414 = vmatpush1.msra.mxu0 %v388
    %415 = vmatprep.subr.mxu0 0.0
    %416 = vmatpush1.msra.mxu0 %v389
    %417 = vmatprep.subr.mxu0 0.0
    %418 = vmatpush1.msra.mxu0 %v390
    %419 = vmatprep.subr.mxu0 0.0
    %420 = vmatpush1.msra.mxu0 %v391
    %421 = vmatprep.subr.mxu0 0.0
    %422 = vmatpush1.msra.mxu0 %v392
    %423 = vmatprep.subr.mxu0 0.0
    %424 = vmatpush1.msra.mxu0 %v393
    %425 = vmatprep.subr.mxu0 0.0
    %426 = vmatpush1.msra.mxu0 %v394
    %427 = vmatprep.subr.mxu0 0.0
    %428 = vmatpush1.msra.mxu0 %v395
    %429 = vmatprep.subr.mxu0 0.0
    %430 = vmatpush1.msra.mxu0 %v396
    %431 = vmatprep.subr.mxu0 0.0
    %432 = vmatpush1.msra.mxu0 %v397
    %433 = vmatprep.subr.mxu0 0.0
    %434 = vmatpush1.msra.mxu0 %v398
    %435 = vmatprep.subr.mxu0 0.0
    %436 = vmatpush1.msra.mxu0 %v399
    %437 = vmatprep.subr.mxu0 0.0
    %438 = vmatpush1.msra.mxu0 0.0
    %439 = vmatprep.subr.mxu0 0.0
    %440 = vmatpush1.msra.mxu0 0.0
    %441 = vmatprep.subr.mxu0 0.0
    %442 = vmatpush1.msra.mxu0 0.0
    %443 = vmatprep.subr.mxu0 0.0
    %444 = vmatpush1.msra.mxu0 0.0
    %445 = vmatprep.subr.mxu0 0.0
    %446 = vmatpush1.msra.mxu0 0.0
    %447 = vmatprep.subr.mxu0 0.0
    %448 = vmatpush1.msra.mxu0 0.0
    %449 = vmatprep.subr.mxu0 0.0
    %450 = vmatpush1.msra.mxu0 0.0
    %451 = vmatprep.subr.mxu0 0.0
    %452 = vmatpush1.msra.mxu0 0.0
    %453 = vmatprep.subr.mxu0 0.0
    %454 = vmatpush1.msra.mxu0 0.0
    %455 = vmatprep.subr.mxu0 0.0
    %456 = vmatpush1.msra.mxu0 0.0
    %457 = vmatprep.subr.mxu0 0.0
    %458 = vmatpush1.msra.mxu0 0.0
    %459 = vmatprep.subr.mxu0 0.0
    %460 = vmatpush1.msra.mxu0 0.0
    %461 = vmatprep.subr.mxu0 0.0
    %462 = vmatpush1.msra.mxu0 0.0
    %463 = vmatprep.subr.mxu0 0.0
    %464 = vmatpush1.msra.mxu0 0.0
    %465 = vmatprep.subr.mxu0 0.0
    %466 = vmatpush1.msra.mxu0 0.0
    %467 = vmatprep.subr.mxu0 0.0
    %468 = vmatpush1.msra.mxu0 0.0
    %469 = vmatprep.mubr.f32.mxu0 0.0
    %470 = vmatmul.mubr.f32.gmra.mrb[0].mxu0 %v166
    %v471 = vpop.f32.mrb[0].mxu0
    %v472 = vadd.f32 %v404, %v471
    %v473 = vpop.f32.mrb[0].mxu0
    %474 = vmatprep.mubr.f32.mxu0 0.0
    %475 = vmatmul.mubr.f32.gmra.mrb[0].mxu0 %v167
    %v476 = vpop.f32.mrb[0].mxu0
    %v477 = vadd.f32 %v404, %v476
    %v478 = vpop.f32.mrb[0].mxu0
    %479 = vmatprep.mubr.f32.mxu0 0.0
    %480 = vmatmul.mubr.f32.gmra.mrb[0].mxu0 %v168
    %v481 = vpop.f32.mrb[0].mxu0
    %v482 = vadd.f32 %v404, %v481
    %v483 = vpop.f32.mrb[0].mxu0
    %484 = vmatprep.mubr.f32.mxu0 0.0
    %485 = vmatmul.mubr.f32.gmra.mrb[0].mxu0 %v169
    %v486 = vpop.f32.mrb[0].mxu0
    %v487 = vadd.f32 %v404, %v486
    %v488 = vpop.f32.mrb[0].mxu0
    %489 = vdwg.mxu0
    %v490 = vld [vmem:[%s4] sm:$0xff]
    %v491 = vld [vmem:[%s4 + $0x8] sm:$0xff]
    %v492 = vld [vmem:[%s4 + $0x10] sm:$0xff]
    %v493 = vld [vmem:[%s4 + $0x18] sm:$0xff]
    %s494 = scalar_lea.vmem %s4, 32
    %v495 = vld [vmem:[%s494] sm:$0xff]
    %v496 = vld [vmem:[%s494 + $0x8] sm:$0xff]
    %v497 = vld [vmem:[%s494 + $0x10] sm:$0xff]
    %v498 = vld [vmem:[%s494 + $0x18] sm:$0xff]
    %s499 = scalar_lea.vmem %s4, 64
    %v500 = vld [vmem:[%s499] sm:$0xff]
    %v501 = vld [vmem:[%s499 + $0x8] sm:$0xff]
    %v502 = vld [vmem:[%s499 + $0x10] sm:$0xff]
    %v503 = vld [vmem:[%s499 + $0x18] sm:$0xff]
    %v504 = vld [vmem:[%s5 + $0x3] sm:$0x1]
    %vm505 = vcmask 261120
    %v507 = vsel %vm505, 0.0, 0
    %509 = vmatprep.subr.mxu0 0.0
    %510 = vmatpush1.msra.mxu0 %v490
    %511 = vmatprep.subr.mxu0 0.0
    %512 = vmatpush1.msra.mxu0 %v491
    %513 = vmatprep.subr.mxu0 0.0
    %514 = vmatpush1.msra.mxu0 %v492
    %515 = vmatprep.subr.mxu0 0.0
    %516 = vmatpush1.msra.mxu0 %v493
    %517 = vmatprep.subr.mxu0 0.0
    %518 = vmatpush1.msra.mxu0 0.0
    %519 = vmatprep.subr.mxu0 0.0
    %520 = vmatpush1.msra.mxu0 0.0
    %521 = vmatprep.subr.mxu0 0.0
    %522 = vmatpush1.msra.mxu0 0.0
    %523 = vmatprep.subr.mxu0 0.0
    %524 = vmatpush1.msra.mxu0 0.0
    %525 = vmatprep.subr.mxu0 0.0
    %526 = vmatpush1.msra.mxu0 0.0
    %527 = vmatprep.subr.mxu0 0.0
    %528 = vmatpush1.msra.mxu0 0.0
    %529 = vmatprep.subr.mxu0 0.0
    %530 = vmatpush1.msra.mxu0 0.0
    %531 = vmatprep.subr.mxu0 0.0
    %532 = vmatpush1.msra.mxu0 0.0
    %533 = vmatprep.subr.mxu0 0.0
    %534 = vmatpush1.msra.mxu0 0.0
    %535 = vmatprep.subr.mxu0 0.0
    %536 = vmatpush1.msra.mxu0 0.0
    %537 = vmatprep.subr.mxu0 0.0
    %538 = vmatpush1.msra.mxu0 0.0
    %539 = vmatprep.subr.mxu0 0.0
    %540 = vmatpush1.msra.mxu0 0.0
    %541 = vmatprep.subr.mxu0 0.0
    %542 = vmatpush1.msra.mxu0 0.0
    %543 = vmatprep.subr.mxu0 0.0
    %544 = vmatpush1.msra.mxu0 0.0
    %545 = vmatprep.subr.mxu0 0.0
    %546 = vmatpush1.msra.mxu0 0.0
    %547 = vmatprep.subr.mxu0 0.0
    %548 = vmatpush1.msra.mxu0 0.0
    %549 = vmatprep.subr.mxu0 0.0
    %550 = vmatpush1.msra.mxu0 0.0
    %551 = vmatprep.subr.mxu0 0.0
    %552 = vmatpush1.msra.mxu0 0.0
    %553 = vmatprep.subr.mxu0 0.0
    %554 = vmatpush1.msra.mxu0 0.0
    %555 = vmatprep.subr.mxu0 0.0
    %556 = vmatpush1.msra.mxu0 0.0
    %557 = vmatprep.subr.mxu0 0.0
    %558 = vmatpush1.msra.mxu0 0.0
    %559 = vmatprep.subr.mxu0 0.0
    %560 = vmatpush1.msra.mxu0 0.0
    %561 = vmatprep.subr.mxu0 0.0
    %562 = vmatpush1.msra.mxu0 0.0
    %563 = vmatprep.subr.mxu0 0.0
    %564 = vmatpush1.msra.mxu0 0.0
    %565 = vmatprep.subr.mxu0 0.0
    %566 = vmatpush1.msra.mxu0 0.0
    %567 = vmatprep.subr.mxu0 0.0
    %568 = vmatpush1.msra.mxu0 0.0
    %569 = vmatprep.subr.mxu0 0.0
    %570 = vmatpush1.msra.mxu0 0.0
    %571 = vmatprep.subr.mxu0 0.0
    %572 = vmatpush1.msra.mxu0 0.0
    %573 = vmatprep.mubr.f32.mxu0 0.0
    %574 = vmatmul.mubr.f32.gmra.mrb[0].mxu0 %v507
    %v575 = vpop.f32.mrb[0].mxu0
    %v576 = vadd.f32 0.0, %v575
    %v577 = vpop.f32.mrb[0].mxu0
    %578 = vdwg.mxu0
    %v579 = vadd.f32 %v258, %v576
    %v580 = vxor.u32 %v579, 2147483648
    %v581 = vmul.f32 %v580, 1.442695
    %v582 = vpow.pop %v581
    %v583 = vadd.f32 %v582, 1.0
    %v584 = vrcp.pop %v583
    %v585 = vmul.f32 1.0, %v584
    %586 = vmatprep.subr.mxu0 0.0
    %587 = vmatpush1.msra.mxu0 %v495
    %588 = vmatprep.subr.mxu0 0.0
    %589 = vmatpush1.msra.mxu0 %v496
    %590 = vmatprep.subr.mxu0 0.0
    %591 = vmatpush1.msra.mxu0 %v497
    %592 = vmatprep.subr.mxu0 0.0
    %593 = vmatpush1.msra.mxu0 %v498
    %594 = vmatprep.subr.mxu0 0.0
    %595 = vmatpush1.msra.mxu0 0.0
    %596 = vmatprep.subr.mxu0 0.0
    %597 = vmatpush1.msra.mxu0 0.0
    %598 = vmatprep.subr.mxu0 0.0
    %599 = vmatpush1.msra.mxu0 0.0
    %600 = vmatprep.subr.mxu0 0.0
    %601 = vmatpush1.msra.mxu0 0.0
    %602 = vmatprep.subr.mxu0 0.0
    %603 = vmatpush1.msra.mxu0 0.0
    %604 = vmatprep.subr.mxu0 0.0
    %605 = vmatpush1.msra.mxu0 0.0
    %606 = vmatprep.subr.mxu0 0.0
    %607 = vmatpush1.msra.mxu0 0.0
    %608 = vmatprep.subr.mxu0 0.0
    %609 = vmatpush1.msra.mxu0 0.0
    %610 = vmatprep.subr.mxu0 0.0
    %611 = vmatpush1.msra.mxu0 0.0
    %612 = vmatprep.subr.mxu0 0.0
    %613 = vmatpush1.msra.mxu0 0.0
    %614 = vmatprep.subr.mxu0 0.0
    %615 = vmatpush1.msra.mxu0 0.0
    %616 = vmatprep.subr.mxu0 0.0
    %617 = vmatpush1.msra.mxu0 0.0
    %618 = vmatprep.subr.mxu0 0.0
    %619 = vmatpush1.msra.mxu0 0.0
    %620 = vmatprep.subr.mxu0 0.0
    %621 = vmatpush1.msra.mxu0 0.0
    %622 = vmatprep.subr.mxu0 0.0
    %623 = vmatpush1.msra.mxu0 0.0
    %624 = vmatprep.subr.mxu0 0.0
    %625 = vmatpush1.msra.mxu0 0.0
    %626 = vmatprep.subr.mxu0 0.0
    %627 = vmatpush1.msra.mxu0 0.0
    %628 = vmatprep.subr.mxu0 0.0
    %629 = vmatpush1.msra.mxu0 0.0
    %630 = vmatprep.subr.mxu0 0.0
    %631 = vmatpush1.msra.mxu0 0.0
    %632 = vmatprep.subr.mxu0 0.0
    %633 = vmatpush1.msra.mxu0 0.0
    %634 = vmatprep.subr.mxu0 0.0
    %635 = vmatpush1.msra.mxu0 0.0
    %636 = vmatprep.subr.mxu0 0.0
    %637 = vmatpush1.msra.mxu0 0.0
    %638 = vmatprep.subr.mxu0 0.0
    %639 = vmatpush1.msra.mxu0 0.0
    %640 = vmatprep.subr.mxu0 0.0
    %641 = vmatpush1.msra.mxu0 0.0
    %642 = vmatprep.subr.mxu0 0.0
    %643 = vmatpush1.msra.mxu0 0.0
    %644 = vmatprep.subr.mxu0 0.0
    %645 = vmatpush1.msra.mxu0 0.0
    %646 = vmatprep.subr.mxu0 0.0
    %647 = vmatpush1.msra.mxu0 0.0
    %648 = vmatprep.subr.mxu0 0.0
    %649 = vmatpush1.msra.mxu0 0.0
    %650 = vmatprep.mubr.f32.mxu0 0.0
    %651 = vmatmul.mubr.f32.gmra.mrb[0].mxu0 %v507
    %v652 = vpop.f32.mrb[0].mxu0
    %v653 = vadd.f32 0.0, %v652
    %v654 = vpop.f32.mrb[0].mxu0
    %655 = vdwg.mxu0
    %v656 = vadd.f32 %v365, %v653
    %v657 = vxor.u32 %v656, 2147483648
    %v658 = vmul.f32 %v657, 1.442695
    %v659 = vpow.pop %v658
    %v660 = vadd.f32 %v659, 1.0
    %v661 = vrcp.pop %v660
    %v662 = vmul.f32 1.0, %v661
    %v663 = vlaneseq
    %v664 = vshrl.u32 %v663, 7
    %v665 = vsub.s32 0, %v664
    %v666 = vrot.slane %v504, %v665
    %667 = vmatprep.subr.mxu0 0.0
    %668 = vmatpush1.msra.mxu0 %v500
    %669 = vmatprep.subr.mxu0 0.0
    %670 = vmatpush1.msra.mxu0 %v501
    %671 = vmatprep.subr.mxu0 0.0
    %672 = vmatpush1.msra.mxu0 %v502
    %673 = vmatprep.subr.mxu0 0.0
    %674 = vmatpush1.msra.mxu0 %v503
    %675 = vmatprep.subr.mxu0 0.0
    %676 = vmatpush1.msra.mxu0 0.0
    %677 = vmatprep.subr.mxu0 0.0
    %678 = vmatpush1.msra.mxu0 0.0
    %679 = vmatprep.subr.mxu0 0.0
    %680 = vmatpush1.msra.mxu0 0.0
    %681 = vmatprep.subr.mxu0 0.0
    %682 = vmatpush1.msra.mxu0 0.0
    %683 = vmatprep.subr.mxu0 0.0
    %684 = vmatpush1.msra.mxu0 0.0
    %685 = vmatprep.subr.mxu0 0.0
    %686 = vmatpush1.msra.mxu0 0.0
    %687 = vmatprep.subr.mxu0 0.0
    %688 = vmatpush1.msra.mxu0 0.0
    %689 = vmatprep.subr.mxu0 0.0
    %690 = vmatpush1.msra.mxu0 0.0
    %691 = vmatprep.subr.mxu0 0.0
    %692 = vmatpush1.msra.mxu0 0.0
    %693 = vmatprep.subr.mxu0 0.0
    %694 = vmatpush1.msra.mxu0 0.0
    %695 = vmatprep.subr.mxu0 0.0
    %696 = vmatpush1.msra.mxu0 0.0
    %697 = vmatprep.subr.mxu0 0.0
    %698 = vmatpush1.msra.mxu0 0.0
    %699 = vmatprep.subr.mxu0 0.0
    %700 = vmatpush1.msra.mxu0 0.0
    %701 = vmatprep.subr.mxu0 0.0
    %702 = vmatpush1.msra.mxu0 0.0
    %703 = vmatprep.subr.mxu0 0.0
    %704 = vmatpush1.msra.mxu0 0.0
    %705 = vmatprep.subr.mxu0 0.0
    %706 = vmatpush1.msra.mxu0 0.0
    %707 = vmatprep.subr.mxu0 0.0
    %708 = vmatpush1.msra.mxu0 0.0
    %709 = vmatprep.subr.mxu0 0.0
    %710 = vmatpush1.msra.mxu0 0.0
    %711 = vmatprep.subr.mxu0 0.0
    %712 = vmatpush1.msra.mxu0 0.0
    %713 = vmatprep.subr.mxu0 0.0
    %714 = vmatpush1.msra.mxu0 0.0
    %715 = vmatprep.subr.mxu0 0.0
    %716 = vmatpush1.msra.mxu0 0.0
    %717 = vmatprep.subr.mxu0 0.0
    %718 = vmatpush1.msra.mxu0 0.0
    %719 = vmatprep.subr.mxu0 0.0
    %720 = vmatpush1.msra.mxu0 0.0
    %721 = vmatprep.subr.mxu0 0.0
    %722 = vmatpush1.msra.mxu0 0.0
    %723 = vmatprep.subr.mxu0 0.0
    %724 = vmatpush1.msra.mxu0 0.0
    %725 = vmatprep.subr.mxu0 0.0
    %726 = vmatpush1.msra.mxu0 0.0
    %727 = vmatprep.subr.mxu0 0.0
    %728 = vmatpush1.msra.mxu0 0.0
    %729 = vmatprep.subr.mxu0 0.0
    %730 = vmatpush1.msra.mxu0 0.0
    %731 = vmatprep.mubr.f32.mxu0 0.0
    %732 = vmatmul.mubr.f32.gmra.mrb[0].mxu0 %v507
    %v733 = vpop.f32.mrb[0].mxu0
    %v734 = vadd.f32 %v666, %v733
    %v735 = vpop.f32.mrb[0].mxu0
    %736 = vdwg.mxu0
    %v737 = vmul.f32 %v585, %v734
    %v738 = vadd.f32 %v472, %v737
    %v739 = vtanh.pop %v738
    %v740 = vsub.f32 1.0, %v662
    %v741 = vmul.f32 %v740, %v739
    %v742 = vmul.f32 %v662, 0.0
    %v743 = vadd.f32 %v741, %v742
    %vm744 = vcmask 254976
    %745 = vst.msk [vmem:[%s6] sm:$0x3] %vm744, %v743
    %v747 = vsel %vm505, %v743, 0
    %749 = vmatprep.subr.mxu0 0.0
    %750 = vmatpush1.msra.mxu0 %v490
    %751 = vmatprep.subr.mxu0 0.0
    %752 = vmatpush1.msra.mxu0 %v491
    %753 = vmatprep.subr.mxu0 0.0
    %754 = vmatpush1.msra.mxu0 %v492
    %755 = vmatprep.subr.mxu0 0.0
    %756 = vmatpush1.msra.mxu0 %v493
    %757 = vmatprep.subr.mxu0 0.0
    %758 = vmatpush1.msra.mxu0 0.0
    %759 = vmatprep.subr.mxu0 0.0
    %760 = vmatpush1.msra.mxu0 0.0
    %761 = vmatprep.subr.mxu0 0.0
    %762 = vmatpush1.msra.mxu0 0.0
    %763 = vmatprep.subr.mxu0 0.0
    %764 = vmatpush1.msra.mxu0 0.0
    %765 = vmatprep.subr.mxu0 0.0
    %766 = vmatpush1.msra.mxu0 0.0
    %767 = vmatprep.subr.mxu0 0.0
    %768 = vmatpush1.msra.mxu0 0.0
    %769 = vmatprep.subr.mxu0 0.0
    %770 = vmatpush1.msra.mxu0 0.0
    %771 = vmatprep.subr.mxu0 0.0
    %772 = vmatpush1.msra.mxu0 0.0
    %773 = vmatprep.subr.mxu0 0.0
    %774 = vmatpush1.msra.mxu0 0.0
    %775 = vmatprep.subr.mxu0 0.0
    %776 = vmatpush1.msra.mxu0 0.0
    %777 = vmatprep.subr.mxu0 0.0
    %778 = vmatpush1.msra.mxu0 0.0
    %779 = vmatprep.subr.mxu0 0.0
    %780 = vmatpush1.msra.mxu0 0.0
    %781 = vmatprep.subr.mxu0 0.0
    %782 = vmatpush1.msra.mxu0 0.0
    %783 = vmatprep.subr.mxu0 0.0
    %784 = vmatpush1.msra.mxu0 0.0
    %785 = vmatprep.subr.mxu0 0.0
    %786 = vmatpush1.msra.mxu0 0.0
    %787 = vmatprep.subr.mxu0 0.0
    %788 = vmatpush1.msra.mxu0 0.0
    %789 = vmatprep.subr.mxu0 0.0
    %790 = vmatpush1.msra.mxu0 0.0
    %791 = vmatprep.subr.mxu0 0.0
    %792 = vmatpush1.msra.mxu0 0.0
    %793 = vmatprep.subr.mxu0 0.0
    %794 = vmatpush1.msra.mxu0 0.0
    %795 = vmatprep.subr.mxu0 0.0
    %796 = vmatpush1.msra.mxu0 0.0
    %797 = vmatprep.subr.mxu0 0.0
    %798 = vmatpush1.msra.mxu0 0.0
    %799 = vmatprep.subr.mxu0 0.0
    %800 = vmatpush1.msra.mxu0 0.0
    %801 = vmatprep.subr.mxu0 0.0
    %802 = vmatpush1.msra.mxu0 0.0
    %803 = vmatprep.subr.mxu0 0.0
    %804 = vmatpush1.msra.mxu0 0.0
    %805 = vmatprep.subr.mxu0 0.0
    %806 = vmatpush1.msra.mxu0 0.0
    %807 = vmatprep.subr.mxu0 0.0
    %808 = vmatpush1.msra.mxu0 0.0
    %809 = vmatprep.subr.mxu0 0.0
    %810 = vmatpush1.msra.mxu0 0.0
    %811 = vmatprep.subr.mxu0 0.0
    %812 = vmatpush1.msra.mxu0 0.0
    %813 = vmatprep.mubr.f32.mxu0 0.0
    %814 = vmatmul.mubr.f32.gmra.mrb[0].mxu0 %v747
    %v815 = vpop.f32.mrb[0].mxu0
    %v816 = vadd.f32 0.0, %v815
    %v817 = vpop.f32.mrb[0].mxu0
    %818 = vdwg.mxu0
    %v820 = vrot.slane %v816, 6
    %v822 = vadd.f32 %v258, %v820
    %v823 = vxor.u32 %v822, 2147483648
    %v824 = vmul.f32 %v823, 1.442695
    %v825 = vpow.pop %v824
    %v826 = vadd.f32 %v825, 1.0
    %v827 = vrcp.pop %v826
    %v828 = vmul.f32 1.0, %v827
    %829 = vmatprep.subr.mxu0 0.0
    %830 = vmatpush1.msra.mxu0 %v495
    %831 = vmatprep.subr.mxu0 0.0
    %832 = vmatpush1.msra.mxu0 %v496
    %833 = vmatprep.subr.mxu0 0.0
    %834 = vmatpush1.msra.mxu0 %v497
    %835 = vmatprep.subr.mxu0 0.0
    %836 = vmatpush1.msra.mxu0 %v498
    %837 = vmatprep.subr.mxu0 0.0
    %838 = vmatpush1.msra.mxu0 0.0
    %839 = vmatprep.subr.mxu0 0.0
    %840 = vmatpush1.msra.mxu0 0.0
    %841 = vmatprep.subr.mxu0 0.0
    %842 = vmatpush1.msra.mxu0 0.0
    %843 = vmatprep.subr.mxu0 0.0
    %844 = vmatpush1.msra.mxu0 0.0
    %845 = vmatprep.subr.mxu0 0.0
    %846 = vmatpush1.msra.mxu0 0.0
    %847 = vmatprep.subr.mxu0 0.0
    %848 = vmatpush1.msra.mxu0 0.0
    %849 = vmatprep.subr.mxu0 0.0
    %850 = vmatpush1.msra.mxu0 0.0
    %851 = vmatprep.subr.mxu0 0.0
    %852 = vmatpush1.msra.mxu0 0.0
    %853 = vmatprep.subr.mxu0 0.0
    %854 = vmatpush1.msra.mxu0 0.0
    %855 = vmatprep.subr.mxu0 0.0
    %856 = vmatpush1.msra.mxu0 0.0
    %857 = vmatprep.subr.mxu0 0.0
    %858 = vmatpush1.msra.mxu0 0.0
    %859 = vmatprep.subr.mxu0 0.0
    %860 = vmatpush1.msra.mxu0 0.0
    %861 = vmatprep.subr.mxu0 0.0
    %862 = vmatpush1.msra.mxu0 0.0
    %863 = vmatprep.subr.mxu0 0.0
    %864 = vmatpush1.msra.mxu0 0.0
    %865 = vmatprep.subr.mxu0 0.0
    %866 = vmatpush1.msra.mxu0 0.0
    %867 = vmatprep.subr.mxu0 0.0
    %868 = vmatpush1.msra.mxu0 0.0
    %869 = vmatprep.subr.mxu0 0.0
    %870 = vmatpush1.msra.mxu0 0.0
    %871 = vmatprep.subr.mxu0 0.0
    %872 = vmatpush1.msra.mxu0 0.0
    %873 = vmatprep.subr.mxu0 0.0
    %874 = vmatpush1.msra.mxu0 0.0
    %875 = vmatprep.subr.mxu0 0.0
    %876 = vmatpush1.msra.mxu0 0.0
    %877 = vmatprep.subr.mxu0 0.0
    %878 = vmatpush1.msra.mxu0 0.0
    %879 = vmatprep.subr.mxu0 0.0
    %880 = vmatpush1.msra.mxu0 0.0
    %881 = vmatprep.subr.mxu0 0.0
    %882 = vmatpush1.msra.mxu0 0.0
    %883 = vmatprep.subr.mxu0 0.0
    %884 = vmatpush1.msra.mxu0 0.0
    %885 = vmatprep.subr.mxu0 0.0
    %886 = vmatpush1.msra.mxu0 0.0
    %887 = vmatprep.subr.mxu0 0.0
    %888 = vmatpush1.msra.mxu0 0.0
    %889 = vmatprep.subr.mxu0 0.0
    %890 = vmatpush1.msra.mxu0 0.0
    %891 = vmatprep.subr.mxu0 0.0
    %892 = vmatpush1.msra.mxu0 0.0
    %893 = vmatprep.mubr.f32.mxu0 0.0
    %894 = vmatmul.mubr.f32.gmra.mrb[0].mxu0 %v747
    %v895 = vpop.f32.mrb[0].mxu0
    %v896 = vadd.f32 0.0, %v895
    %v897 = vpop.f32.mrb[0].mxu0
    %898 = vdwg.mxu0
    %v900 = vrot.slane %v896, 6
    %v902 = vadd.f32 %v365, %v900
    %v903 = vxor.u32 %v902, 2147483648
    %v904 = vmul.f32 %v903, 1.442695
    %v905 = vpow.pop %v904
    %v906 = vadd.f32 %v905, 1.0
    %v907 = vrcp.pop %v906
    %v908 = vmul.f32 1.0, %v907
    %909 = vmatprep.subr.mxu0 0.0
    %910 = vmatpush1.msra.mxu0 %v500
    %911 = vmatprep.subr.mxu0 0.0
    %912 = vmatpush1.msra.mxu0 %v501
    %913 = vmatprep.subr.mxu0 0.0
    %914 = vmatpush1.msra.mxu0 %v502
    %915 = vmatprep.subr.mxu0 0.0
    %916 = vmatpush1.msra.mxu0 %v503
    %917 = vmatprep.subr.mxu0 0.0
    %918 = vmatpush1.msra.mxu0 0.0
    %919 = vmatprep.subr.mxu0 0.0
    %920 = vmatpush1.msra.mxu0 0.0
    %921 = vmatprep.subr.mxu0 0.0
    %922 = vmatpush1.msra.mxu0 0.0
    %923 = vmatprep.subr.mxu0 0.0
    %924 = vmatpush1.msra.mxu0 0.0
    %925 = vmatprep.subr.mxu0 0.0
    %926 = vmatpush1.msra.mxu0 0.0
    %927 = vmatprep.subr.mxu0 0.0
    %928 = vmatpush1.msra.mxu0 0.0
    %929 = vmatprep.subr.mxu0 0.0
    %930 = vmatpush1.msra.mxu0 0.0
    %931 = vmatprep.subr.mxu0 0.0
    %932 = vmatpush1.msra.mxu0 0.0
    %933 = vmatprep.subr.mxu0 0.0
    %934 = vmatpush1.msra.mxu0 0.0
    %935 = vmatprep.subr.mxu0 0.0
    %936 = vmatpush1.msra.mxu0 0.0
    %937 = vmatprep.subr.mxu0 0.0
    %938 = vmatpush1.msra.mxu0 0.0
    %939 = vmatprep.subr.mxu0 0.0
    %940 = vmatpush1.msra.mxu0 0.0
    %941 = vmatprep.subr.mxu0 0.0
    %942 = vmatpush1.msra.mxu0 0.0
    %943 = vmatprep.subr.mxu0 0.0
    %944 = vmatpush1.msra.mxu0 0.0
    %945 = vmatprep.subr.mxu0 0.0
    %946 = vmatpush1.msra.mxu0 0.0
    %947 = vmatprep.subr.mxu0 0.0
    %948 = vmatpush1.msra.mxu0 0.0
    %949 = vmatprep.subr.mxu0 0.0
    %950 = vmatpush1.msra.mxu0 0.0
    %951 = vmatprep.subr.mxu0 0.0
    %952 = vmatpush1.msra.mxu0 0.0
    %953 = vmatprep.subr.mxu0 0.0
    %954 = vmatpush1.msra.mxu0 0.0
    %955 = vmatprep.subr.mxu0 0.0
    %956 = vmatpush1.msra.mxu0 0.0
    %957 = vmatprep.subr.mxu0 0.0
    %958 = vmatpush1.msra.mxu0 0.0
    %959 = vmatprep.subr.mxu0 0.0
    %960 = vmatpush1.msra.mxu0 0.0
    %961 = vmatprep.subr.mxu0 0.0
    %962 = vmatpush1.msra.mxu0 0.0
    %963 = vmatprep.subr.mxu0 0.0
    %964 = vmatpush1.msra.mxu0 0.0
    %965 = vmatprep.subr.mxu0 0.0
    %966 = vmatpush1.msra.mxu0 0.0
    %967 = vmatprep.subr.mxu0 0.0
    %968 = vmatpush1.msra.mxu0 0.0
    %969 = vmatprep.subr.mxu0 0.0
    %970 = vmatpush1.msra.mxu0 0.0
    %971 = vmatprep.subr.mxu0 0.0
    %972 = vmatpush1.msra.mxu0 0.0
    %973 = vmatprep.mubr.f32.mxu0 0.0
    %974 = vmatmul.mubr.f32.gmra.mrb[0].mxu0 %v747
    %v975 = vpop.f32.mrb[0].mxu0
    %v976 = vadd.f32 %v666, %v975
    %v977 = vpop.f32.mrb[0].mxu0
    %978 = vdwg.mxu0
    %v980 = vrot.slane %v976, 6
    %v982 = vmul.f32 %v828, %v980
    %v983 = vadd.f32 %v472, %v982
    %v984 = vtanh.pop %v983
    %v985 = vsub.f32 1.0, %v908
    %v986 = vmul.f32 %v985, %v984
    %v987 = vrot.slane %v743, 6
    %v989 = vmul.f32 %v908, %v987
    %v990 = vadd.f32 %v986, %v989
    %s991 = scalar_lea.vmem %s6, 2
    %vm992 = vcmask 257026
    %993 = vst.msk [vmem:[%s991 - $0x2] sm:$0xc] %vm992, %v990
    %v995 = vrot.slane %v990, 2
    %v996 = vsel %vm505, %v995, 0
    %998 = vmatprep.subr.mxu0 0.0
    %999 = vmatpush1.msra.mxu0 %v490
    %1000 = vmatprep.subr.mxu0 0.0
    %1001 = vmatpush1.msra.mxu0 %v491
    %1002 = vmatprep.subr.mxu0 0.0
    %1003 = vmatpush1.msra.mxu0 %v492
    %1004 = vmatprep.subr.mxu0 0.0
    %1005 = vmatpush1.msra.mxu0 %v493
    %1006 = vmatprep.subr.mxu0 0.0
    %1007 = vmatpush1.msra.mxu0 0.0
    %1008 = vmatprep.subr.mxu0 0.0
    %1009 = vmatpush1.msra.mxu0 0.0
    %1010 = vmatprep.subr.mxu0 0.0
    %1011 = vmatpush1.msra.mxu0 0.0
    %1012 = vmatprep.subr.mxu0 0.0
    %1013 = vmatpush1.msra.mxu0 0.0
    %1014 = vmatprep.subr.mxu0 0.0
    %1015 = vmatpush1.msra.mxu0 0.0
    %1016 = vmatprep.subr.mxu0 0.0
    %1017 = vmatpush1.msra.mxu0 0.0
    %1018 = vmatprep.subr.mxu0 0.0
    %1019 = vmatpush1.msra.mxu0 0.0
    %1020 = vmatprep.subr.mxu0 0.0
    %1021 = vmatpush1.msra.mxu0 0.0
    %1022 = vmatprep.subr.mxu0 0.0
    %1023 = vmatpush1.msra.mxu0 0.0
    %1024 = vmatprep.subr.mxu0 0.0
    %1025 = vmatpush1.msra.mxu0 0.0
    %1026 = vmatprep.subr.mxu0 0.0
    %1027 = vmatpush1.msra.mxu0 0.0
    %1028 = vmatprep.subr.mxu0 0.0
    %1029 = vmatpush1.msra.mxu0 0.0
    %1030 = vmatprep.subr.mxu0 0.0
    %1031 = vmatpush1.msra.mxu0 0.0
    %1032 = vmatprep.subr.mxu0 0.0
    %1033 = vmatpush1.msra.mxu0 0.0
    %1034 = vmatprep.subr.mxu0 0.0
    %1035 = vmatpush1.msra.mxu0 0.0
    %1036 = vmatprep.subr.mxu0 0.0
    %1037 = vmatpush1.msra.mxu0 0.0
    %1038 = vmatprep.subr.mxu0 0.0
    %1039 = vmatpush1.msra.mxu0 0.0
    %1040 = vmatprep.subr.mxu0 0.0
    %1041 = vmatpush1.msra.mxu0 0.0
    %1042 = vmatprep.subr.mxu0 0.0
    %1043 = vmatpush1.msra.mxu0 0.0
    %1044 = vmatprep.subr.mxu0 0.0
    %1045 = vmatpush1.msra.mxu0 0.0
    %1046 = vmatprep.subr.mxu0 0.0
    %1047 = vmatpush1.msra.mxu0 0.0
    %1048 = vmatprep.subr.mxu0 0.0
    %1049 = vmatpush1.msra.mxu0 0.0
    %1050 = vmatprep.subr.mxu0 0.0
    %1051 = vmatpush1.msra.mxu0 0.0
    %1052 = vmatprep.subr.mxu0 0.0
    %1053 = vmatpush1.msra.mxu0 0.0
    %1054 = vmatprep.subr.mxu0 0.0
    %1055 = vmatpush1.msra.mxu0 0.0
    %1056 = vmatprep.subr.mxu0 0.0
    %1057 = vmatpush1.msra.mxu0 0.0
    %1058 = vmatprep.subr.mxu0 0.0
    %1059 = vmatpush1.msra.mxu0 0.0
    %1060 = vmatprep.subr.mxu0 0.0
    %1061 = vmatpush1.msra.mxu0 0.0
    %1062 = vmatprep.mubr.f32.mxu0 0.0
    %1063 = vmatmul.mubr.f32.gmra.mrb[0].mxu0 %v996
    %v1064 = vpop.f32.mrb[0].mxu0
    %v1065 = vadd.f32 0.0, %v1064
    %v1066 = vpop.f32.mrb[0].mxu0
    %1067 = vdwg.mxu0
    %v1069 = vrot.slane %v1065, 4
    %v1071 = vadd.f32 %v258, %v1069
    %v1072 = vxor.u32 %v1071, 2147483648
    %v1073 = vmul.f32 %v1072, 1.442695
    %v1074 = vpow.pop %v1073
    %v1075 = vadd.f32 %v1074, 1.0
    %v1076 = vrcp.pop %v1075
    %v1077 = vmul.f32 1.0, %v1076
    %1078 = vmatprep.subr.mxu0 0.0
    %1079 = vmatpush1.msra.mxu0 %v495
    %1080 = vmatprep.subr.mxu0 0.0
    %1081 = vmatpush1.msra.mxu0 %v496
    %1082 = vmatprep.subr.mxu0 0.0
    %1083 = vmatpush1.msra.mxu0 %v497
    %1084 = vmatprep.subr.mxu0 0.0
    %1085 = vmatpush1.msra.mxu0 %v498
    %1086 = vmatprep.subr.mxu0 0.0
    %1087 = vmatpush1.msra.mxu0 0.0
    %1088 = vmatprep.subr.mxu0 0.0
    %1089 = vmatpush1.msra.mxu0 0.0
    %1090 = vmatprep.subr.mxu0 0.0
    %1091 = vmatpush1.msra.mxu0 0.0
    %1092 = vmatprep.subr.mxu0 0.0
    %1093 = vmatpush1.msra.mxu0 0.0
    %1094 = vmatprep.subr.mxu0 0.0
    %1095 = vmatpush1.msra.mxu0 0.0
    %1096 = vmatprep.subr.mxu0 0.0
    %1097 = vmatpush1.msra.mxu0 0.0
    %1098 = vmatprep.subr.mxu0 0.0
    %1099 = vmatpush1.msra.mxu0 0.0
    %1100 = vmatprep.subr.mxu0 0.0
    %1101 = vmatpush1.msra.mxu0 0.0
    %1102 = vmatprep.subr.mxu0 0.0
    %1103 = vmatpush1.msra.mxu0 0.0
    %1104 = vmatprep.subr.mxu0 0.0
    %1105 = vmatpush1.msra.mxu0 0.0
    %1106 = vmatprep.subr.mxu0 0.0
    %1107 = vmatpush1.msra.mxu0 0.0
    %1108 = vmatprep.subr.mxu0 0.0
    %1109 = vmatpush1.msra.mxu0 0.0
    %1110 = vmatprep.subr.mxu0 0.0
    %1111 = vmatpush1.msra.mxu0 0.0
    %1112 = vmatprep.subr.mxu0 0.0
    %1113 = vmatpush1.msra.mxu0 0.0
    %1114 = vmatprep.subr.mxu0 0.0
    %1115 = vmatpush1.msra.mxu0 0.0
    %1116 = vmatprep.subr.mxu0 0.0
    %1117 = vmatpush1.msra.mxu0 0.0
    %1118 = vmatprep.subr.mxu0 0.0
    %1119 = vmatpush1.msra.mxu0 0.0
    %1120 = vmatprep.subr.mxu0 0.0
    %1121 = vmatpush1.msra.mxu0 0.0
    %1122 = vmatprep.subr.mxu0 0.0
    %1123 = vmatpush1.msra.mxu0 0.0
    %1124 = vmatprep.subr.mxu0 0.0
    %1125 = vmatpush1.msra.mxu0 0.0
    %1126 = vmatprep.subr.mxu0 0.0
    %1127 = vmatpush1.msra.mxu0 0.0
    %1128 = vmatprep.subr.mxu0 0.0
    %1129 = vmatpush1.msra.mxu0 0.0
    %1130 = vmatprep.subr.mxu0 0.0
    %1131 = vmatpush1.msra.mxu0 0.0
    %1132 = vmatprep.subr.mxu0 0.0
    %1133 = vmatpush1.msra.mxu0 0.0
    %1134 = vmatprep.subr.mxu0 0.0
    %1135 = vmatpush1.msra.mxu0 0.0
    %1136 = vmatprep.subr.mxu0 0.0
    %1137 = vmatpush1.msra.mxu0 0.0
    %1138 = vmatprep.subr.mxu0 0.0
    %1139 = vmatpush1.msra.mxu0 0.0
    %1140 = vmatprep.subr.mxu0 0.0
    %1141 = vmatpush1.msra.mxu0 0.0
    %1142 = vmatprep.mubr.f32.mxu0 0.0
    %1143 = vmatmul.mubr.f32.gmra.mrb[0].mxu0 %v996
    %v1144 = vpop.f32.mrb[0].mxu0
    %v1145 = vadd.f32 0.0, %v1144
    %v1146 = vpop.f32.mrb[0].mxu0
    %1147 = vdwg.mxu0
    %v1149 = vrot.slane %v1145, 4
    %v1151 = vadd.f32 %v365, %v1149
    %v1152 = vxor.u32 %v1151, 2147483648
    %v1153 = vmul.f32 %v1152, 1.442695
    %v1154 = vpow.pop %v1153
    %v1155 = vadd.f32 %v1154, 1.0
    %v1156 = vrcp.pop %v1155
    %v1157 = vmul.f32 1.0, %v1156
    %1158 = vmatprep.subr.mxu0 0.0
    %1159 = vmatpush1.msra.mxu0 %v500
    %1160 = vmatprep.subr.mxu0 0.0
    %1161 = vmatpush1.msra.mxu0 %v501
    %1162 = vmatprep.subr.mxu0 0.0
    %1163 = vmatpush1.msra.mxu0 %v502
    %1164 = vmatprep.subr.mxu0 0.0
    %1165 = vmatpush1.msra.mxu0 %v503
    %1166 = vmatprep.subr.mxu0 0.0
    %1167 = vmatpush1.msra.mxu0 0.0
    %1168 = vmatprep.subr.mxu0 0.0
    %1169 = vmatpush1.msra.mxu0 0.0
    %1170 = vmatprep.subr.mxu0 0.0
    %1171 = vmatpush1.msra.mxu0 0.0
    %1172 = vmatprep.subr.mxu0 0.0
    %1173 = vmatpush1.msra.mxu0 0.0
    %1174 = vmatprep.subr.mxu0 0.0
    %1175 = vmatpush1.msra.mxu0 0.0
    %1176 = vmatprep.subr.mxu0 0.0
    %1177 = vmatpush1.msra.mxu0 0.0
    %1178 = vmatprep.subr.mxu0 0.0
    %1179 = vmatpush1.msra.mxu0 0.0
    %1180 = vmatprep.subr.mxu0 0.0
    %1181 = vmatpush1.msra.mxu0 0.0
    %1182 = vmatprep.subr.mxu0 0.0
    %1183 = vmatpush1.msra.mxu0 0.0
    %1184 = vmatprep.subr.mxu0 0.0
    %1185 = vmatpush1.msra.mxu0 0.0
    %1186 = vmatprep.subr.mxu0 0.0
    %1187 = vmatpush1.msra.mxu0 0.0
    %1188 = vmatprep.subr.mxu0 0.0
    %1189 = vmatpush1.msra.mxu0 0.0
    %1190 = vmatprep.subr.mxu0 0.0
    %1191 = vmatpush1.msra.mxu0 0.0
    %1192 = vmatprep.subr.mxu0 0.0
    %1193 = vmatpush1.msra.mxu0 0.0
    %1194 = vmatprep.subr.mxu0 0.0
    %1195 = vmatpush1.msra.mxu0 0.0
    %1196 = vmatprep.subr.mxu0 0.0
    %1197 = vmatpush1.msra.mxu0 0.0
    %1198 = vmatprep.subr.mxu0 0.0
    %1199 = vmatpush1.msra.mxu0 0.0
    %1200 = vmatprep.subr.mxu0 0.0
    %1201 = vmatpush1.msra.mxu0 0.0
    %1202 = vmatprep.subr.mxu0 0.0
    %1203 = vmatpush1.msra.mxu0 0.0
    %1204 = vmatprep.subr.mxu0 0.0
    %1205 = vmatpush1.msra.mxu0 0.0
    %1206 = vmatprep.subr.mxu0 0.0
    %1207 = vmatpush1.msra.mxu0 0.0
    %1208 = vmatprep.subr.mxu0 0.0
    %1209 = vmatpush1.msra.mxu0 0.0
    %1210 = vmatprep.subr.mxu0 0.0
    %1211 = vmatpush1.msra.mxu0 0.0
    %1212 = vmatprep.subr.mxu0 0.0
    %1213 = vmatpush1.msra.mxu0 0.0
    %1214 = vmatprep.subr.mxu0 0.0
    %1215 = vmatpush1.msra.mxu0 0.0
    %1216 = vmatprep.subr.mxu0 0.0
    %1217 = vmatpush1.msra.mxu0 0.0
    %1218 = vmatprep.subr.mxu0 0.0
    %1219 = vmatpush1.msra.mxu0 0.0
    %1220 = vmatprep.subr.mxu0 0.0
    %1221 = vmatpush1.msra.mxu0 0.0
    %1222 = vmatprep.mubr.f32.mxu0 0.0
    %1223 = vmatmul.mubr.f32.gmra.mrb[0].mxu0 %v996
    %v1224 = vpop.f32.mrb[0].mxu0
    %v1225 = vadd.f32 %v666, %v1224
    %v1226 = vpop.f32.mrb[0].mxu0
    %1227 = vdwg.mxu0
    %v1229 = vrot.slane %v1225, 4
    %v1231 = vmul.f32 %v1077, %v1229
    %v1232 = vadd.f32 %v472, %v1231
    %v1233 = vtanh.pop %v1232
    %v1234 = vsub.f32 1.0, %v1157
    %v1235 = vmul.f32 %v1234, %v1233
    %v1236 = vrot.slane %v990, 6
    %v1238 = vmul.f32 %v1157, %v1236
    %v1239 = vadd.f32 %v1235, %v1238
    %s1240 = scalar_lea.vmem %s6, 4
    %vm1241 = vcmask 259076
    %1242 = vst.msk [vmem:[%s1240 - $0x4] sm:$0x30] %vm1241, %v1239
    %v1244 = vrot.slane %v1239, 4
    %v1245 = vsel %vm505, %v1244, 0
    %1247 = vmatprep.subr.mxu0 0.0
    %1248 = vmatpush1.msra.mxu0 %v490
    %1249 = vmatprep.subr.mxu0 0.0
    %1250 = vmatpush1.msra.mxu0 %v491
    %1251 = vmatprep.subr.mxu0 0.0
    %1252 = vmatpush1.msra.mxu0 %v492
    %1253 = vmatprep.subr.mxu0 0.0
    %1254 = vmatpush1.msra.mxu0 %v493
    %1255 = vmatprep.subr.mxu0 0.0
    %1256 = vmatpush1.msra.mxu0 0.0
    %1257 = vmatprep.subr.mxu0 0.0
    %1258 = vmatpush1.msra.mxu0 0.0
    %1259 = vmatprep.subr.mxu0 0.0
    %1260 = vmatpush1.msra.mxu0 0.0
    %1261 = vmatprep.subr.mxu0 0.0
    %1262 = vmatpush1.msra.mxu0 0.0
    %1263 = vmatprep.subr.mxu0 0.0
    %1264 = vmatpush1.msra.mxu0 0.0
    %1265 = vmatprep.subr.mxu0 0.0
    %1266 = vmatpush1.msra.mxu0 0.0
    %1267 = vmatprep.subr.mxu0 0.0
    %1268 = vmatpush1.msra.mxu0 0.0
    %1269 = vmatprep.subr.mxu0 0.0
    %1270 = vmatpush1.msra.mxu0 0.0
    %1271 = vmatprep.subr.mxu0 0.0
    %1272 = vmatpush1.msra.mxu0 0.0
    %1273 = vmatprep.subr.mxu0 0.0
    %1274 = vmatpush1.msra.mxu0 0.0
    %1275 = vmatprep.subr.mxu0 0.0
    %1276 = vmatpush1.msra.mxu0 0.0
    %1277 = vmatprep.subr.mxu0 0.0
    %1278 = vmatpush1.msra.mxu0 0.0
    %1279 = vmatprep.subr.mxu0 0.0
    %1280 = vmatpush1.msra.mxu0 0.0
    %1281 = vmatprep.subr.mxu0 0.0
    %1282 = vmatpush1.msra.mxu0 0.0
    %1283 = vmatprep.subr.mxu0 0.0
    %1284 = vmatpush1.msra.mxu0 0.0
    %1285 = vmatprep.subr.mxu0 0.0
    %1286 = vmatpush1.msra.mxu0 0.0
    %1287 = vmatprep.subr.mxu0 0.0
    %1288 = vmatpush1.msra.mxu0 0.0
    %1289 = vmatprep.subr.mxu0 0.0
    %1290 = vmatpush1.msra.mxu0 0.0
    %1291 = vmatprep.subr.mxu0 0.0
    %1292 = vmatpush1.msra.mxu0 0.0
    %1293 = vmatprep.subr.mxu0 0.0
    %1294 = vmatpush1.msra.mxu0 0.0
    %1295 = vmatprep.subr.mxu0 0.0
    %1296 = vmatpush1.msra.mxu0 0.0
    %1297 = vmatprep.subr.mxu0 0.0
    %1298 = vmatpush1.msra.mxu0 0.0
    %1299 = vmatprep.subr.mxu0 0.0
    %1300 = vmatpush1.msra.mxu0 0.0
    %1301 = vmatprep.subr.mxu0 0.0
    %1302 = vmatpush1.msra.mxu0 0.0
    %1303 = vmatprep.subr.mxu0 0.0
    %1304 = vmatpush1.msra.mxu0 0.0
    %1305 = vmatprep.subr.mxu0 0.0
    %1306 = vmatpush1.msra.mxu0 0.0
    %1307 = vmatprep.subr.mxu0 0.0
    %1308 = vmatpush1.msra.mxu0 0.0
    %1309 = vmatprep.subr.mxu0 0.0
    %1310 = vmatpush1.msra.mxu0 0.0
    %1311 = vmatprep.mubr.f32.mxu0 0.0
    %1312 = vmatmul.mubr.f32.gmra.mrb[0].mxu0 %v1245
    %v1313 = vpop.f32.mrb[0].mxu0
    %v1314 = vadd.f32 0.0, %v1313
    %v1315 = vpop.f32.mrb[0].mxu0
    %1316 = vdwg.mxu0
    %v1318 = vrot.slane %v1314, 2
    %v1320 = vadd.f32 %v258, %v1318
    %v1321 = vxor.u32 %v1320, 2147483648
    %v1322 = vmul.f32 %v1321, 1.442695
    %v1323 = vpow.pop %v1322
    %v1324 = vadd.f32 %v1323, 1.0
    %v1325 = vrcp.pop %v1324
    %v1326 = vmul.f32 1.0, %v1325
    %1327 = vmatprep.subr.mxu0 0.0
    %1328 = vmatpush1.msra.mxu0 %v495
    %1329 = vmatprep.subr.mxu0 0.0
    %1330 = vmatpush1.msra.mxu0 %v496
    %1331 = vmatprep.subr.mxu0 0.0
    %1332 = vmatpush1.msra.mxu0 %v497
    %1333 = vmatprep.subr.mxu0 0.0
    %1334 = vmatpush1.msra.mxu0 %v498
    %1335 = vmatprep.subr.mxu0 0.0
    %1336 = vmatpush1.msra.mxu0 0.0
    %1337 = vmatprep.subr.mxu0 0.0
    %1338 = vmatpush1.msra.mxu0 0.0
    %1339 = vmatprep.subr.mxu0 0.0
    %1340 = vmatpush1.msra.mxu0 0.0
    %1341 = vmatprep.subr.mxu0 0.0
    %1342 = vmatpush1.msra.mxu0 0.0
    %1343 = vmatprep.subr.mxu0 0.0
    %1344 = vmatpush1.msra.mxu0 0.0
    %1345 = vmatprep.subr.mxu0 0.0
    %1346 = vmatpush1.msra.mxu0 0.0
    %1347 = vmatprep.subr.mxu0 0.0
    %1348 = vmatpush1.msra.mxu0 0.0
    %1349 = vmatprep.subr.mxu0 0.0
    %1350 = vmatpush1.msra.mxu0 0.0
    %1351 = vmatprep.subr.mxu0 0.0
    %1352 = vmatpush1.msra.mxu0 0.0
    %1353 = vmatprep.subr.mxu0 0.0
    %1354 = vmatpush1.msra.mxu0 0.0
    %1355 = vmatprep.subr.mxu0 0.0
    %1356 = vmatpush1.msra.mxu0 0.0
    %1357 = vmatprep.subr.mxu0 0.0
    %1358 = vmatpush1.msra.mxu0 0.0
    %1359 = vmatprep.subr.mxu0 0.0
    %1360 = vmatpush1.msra.mxu0 0.0
    %1361 = vmatprep.subr.mxu0 0.0
    %1362 = vmatpush1.msra.mxu0 0.0
    %1363 = vmatprep.subr.mxu0 0.0
    %1364 = vmatpush1.msra.mxu0 0.0
    %1365 = vmatprep.subr.mxu0 0.0
    %1366 = vmatpush1.msra.mxu0 0.0
    %1367 = vmatprep.subr.mxu0 0.0
    %1368 = vmatpush1.msra.mxu0 0.0
    %1369 = vmatprep.subr.mxu0 0.0
    %1370 = vmatpush1.msra.mxu0 0.0
    %1371 = vmatprep.subr.mxu0 0.0
    %1372 = vmatpush1.msra.mxu0 0.0
    %1373 = vmatprep.subr.mxu0 0.0
    %1374 = vmatpush1.msra.mxu0 0.0
    %1375 = vmatprep.subr.mxu0 0.0
    %1376 = vmatpush1.msra.mxu0 0.0
    %1377 = vmatprep.subr.mxu0 0.0
    %1378 = vmatpush1.msra.mxu0 0.0
    %1379 = vmatprep.subr.mxu0 0.0
    %1380 = vmatpush1.msra.mxu0 0.0
    %1381 = vmatprep.subr.mxu0 0.0
    %1382 = vmatpush1.msra.mxu0 0.0
    %1383 = vmatprep.subr.mxu0 0.0
    %1384 = vmatpush1.msra.mxu0 0.0
    %1385 = vmatprep.subr.mxu0 0.0
    %1386 = vmatpush1.msra.mxu0 0.0
    %1387 = vmatprep.subr.mxu0 0.0
    %1388 = vmatpush1.msra.mxu0 0.0
    %1389 = vmatprep.subr.mxu0 0.0
    %1390 = vmatpush1.msra.mxu0 0.0
    %1391 = vmatprep.mubr.f32.mxu0 0.0
    %1392 = vmatmul.mubr.f32.gmra.mrb[0].mxu0 %v1245
    %v1393 = vpop.f32.mrb[0].mxu0
    %v1394 = vadd.f32 0.0, %v1393
    %v1395 = vpop.f32.mrb[0].mxu0
    %1396 = vdwg.mxu0
    %v1398 = vrot.slane %v1394, 2
    %v1400 = vadd.f32 %v365, %v1398
    %v1401 = vxor.u32 %v1400, 2147483648
    %v1402 = vmul.f32 %v1401, 1.442695
    %v1403 = vpow.pop %v1402
    %v1404 = vadd.f32 %v1403, 1.0
    %v1405 = vrcp.pop %v1404
    %v1406 = vmul.f32 1.0, %v1405
    %1407 = vmatprep.subr.mxu0 0.0
    %1408 = vmatpush1.msra.mxu0 %v500
    %1409 = vmatprep.subr.mxu0 0.0
    %1410 = vmatpush1.msra.mxu0 %v501
    %1411 = vmatprep.subr.mxu0 0.0
    %1412 = vmatpush1.msra.mxu0 %v502
    %1413 = vmatprep.subr.mxu0 0.0
    %1414 = vmatpush1.msra.mxu0 %v503
    %1415 = vmatprep.subr.mxu0 0.0
    %1416 = vmatpush1.msra.mxu0 0.0
    %1417 = vmatprep.subr.mxu0 0.0
    %1418 = vmatpush1.msra.mxu0 0.0
    %1419 = vmatprep.subr.mxu0 0.0
    %1420 = vmatpush1.msra.mxu0 0.0
    %1421 = vmatprep.subr.mxu0 0.0
    %1422 = vmatpush1.msra.mxu0 0.0
    %1423 = vmatprep.subr.mxu0 0.0
    %1424 = vmatpush1.msra.mxu0 0.0
    %1425 = vmatprep.subr.mxu0 0.0
    %1426 = vmatpush1.msra.mxu0 0.0
    %1427 = vmatprep.subr.mxu0 0.0
    %1428 = vmatpush1.msra.mxu0 0.0
    %1429 = vmatprep.subr.mxu0 0.0
    %1430 = vmatpush1.msra.mxu0 0.0
    %1431 = vmatprep.subr.mxu0 0.0
    %1432 = vmatpush1.msra.mxu0 0.0
    %1433 = vmatprep.subr.mxu0 0.0
    %1434 = vmatpush1.msra.mxu0 0.0
    %1435 = vmatprep.subr.mxu0 0.0
    %1436 = vmatpush1.msra.mxu0 0.0
    %1437 = vmatprep.subr.mxu0 0.0
    %1438 = vmatpush1.msra.mxu0 0.0
    %1439 = vmatprep.subr.mxu0 0.0
    %1440 = vmatpush1.msra.mxu0 0.0
    %1441 = vmatprep.subr.mxu0 0.0
    %1442 = vmatpush1.msra.mxu0 0.0
    %1443 = vmatprep.subr.mxu0 0.0
    %1444 = vmatpush1.msra.mxu0 0.0
    %1445 = vmatprep.subr.mxu0 0.0
    %1446 = vmatpush1.msra.mxu0 0.0
    %1447 = vmatprep.subr.mxu0 0.0
    %1448 = vmatpush1.msra.mxu0 0.0
    %1449 = vmatprep.subr.mxu0 0.0
    %1450 = vmatpush1.msra.mxu0 0.0
    %1451 = vmatprep.subr.mxu0 0.0
    %1452 = vmatpush1.msra.mxu0 0.0
    %1453 = vmatprep.subr.mxu0 0.0
    %1454 = vmatpush1.msra.mxu0 0.0
    %1455 = vmatprep.subr.mxu0 0.0
    %1456 = vmatpush1.msra.mxu0 0.0
    %1457 = vmatprep.subr.mxu0 0.0
    %1458 = vmatpush1.msra.mxu0 0.0
    %1459 = vmatprep.subr.mxu0 0.0
    %1460 = vmatpush1.msra.mxu0 0.0
    %1461 = vmatprep.subr.mxu0 0.0
    %1462 = vmatpush1.msra.mxu0 0.0
    %1463 = vmatprep.subr.mxu0 0.0
    %1464 = vmatpush1.msra.mxu0 0.0
    %1465 = vmatprep.subr.mxu0 0.0
    %1466 = vmatpush1.msra.mxu0 0.0
    %1467 = vmatprep.subr.mxu0 0.0
    %1468 = vmatpush1.msra.mxu0 0.0
    %1469 = vmatprep.subr.mxu0 0.0
    %1470 = vmatpush1.msra.mxu0 0.0
    %1471 = vmatprep.mubr.f32.mxu0 0.0
    %1472 = vmatmul.mubr.f32.gmra.mrb[0].mxu0 %v1245
    %v1473 = vpop.f32.mrb[0].mxu0
    %v1474 = vadd.f32 %v666, %v1473
    %v1475 = vpop.f32.mrb[0].mxu0
    %1476 = vdwg.mxu0
    %v1478 = vrot.slane %v1474, 2
    %v1480 = vmul.f32 %v1326, %v1478
    %v1481 = vadd.f32 %v472, %v1480
    %v1482 = vtanh.pop %v1481
    %v1483 = vsub.f32 1.0, %v1406
    %v1484 = vmul.f32 %v1483, %v1482
    %v1485 = vrot.slane %v1239, 6
    %v1487 = vmul.f32 %v1406, %v1485
    %v1488 = vadd.f32 %v1484, %v1487
    %s1489 = scalar_lea.vmem %s6, 6
    %vm1490 = vcmask 261126
    %1491 = vst.msk [vmem:[%s1489 - $0x6] sm:$0xc0] %vm1490, %v1488
    %v1493 = vrot.slane %v1488, 6
    %v1494 = vsel %vm505, %v1493, 0
    %1496 = vmatprep.subr.mxu0 0.0
    %1497 = vmatpush1.msra.mxu0 %v490
    %1498 = vmatprep.subr.mxu0 0.0
    %1499 = vmatpush1.msra.mxu0 %v491
    %1500 = vmatprep.subr.mxu0 0.0
    %1501 = vmatpush1.msra.mxu0 %v492
    %1502 = vmatprep.subr.mxu0 0.0
    %1503 = vmatpush1.msra.mxu0 %v493
    %1504 = vmatprep.subr.mxu0 0.0
    %1505 = vmatpush1.msra.mxu0 0.0
    %1506 = vmatprep.subr.mxu0 0.0
    %1507 = vmatpush1.msra.mxu0 0.0
    %1508 = vmatprep.subr.mxu0 0.0
    %1509 = vmatpush1.msra.mxu0 0.0
    %1510 = vmatprep.subr.mxu0 0.0
    %1511 = vmatpush1.msra.mxu0 0.0
    %1512 = vmatprep.subr.mxu0 0.0
    %1513 = vmatpush1.msra.mxu0 0.0
    %1514 = vmatprep.subr.mxu0 0.0
    %1515 = vmatpush1.msra.mxu0 0.0
    %1516 = vmatprep.subr.mxu0 0.0
    %1517 = vmatpush1.msra.mxu0 0.0
    %1518 = vmatprep.subr.mxu0 0.0
    %1519 = vmatpush1.msra.mxu0 0.0
    %1520 = vmatprep.subr.mxu0 0.0
    %1521 = vmatpush1.msra.mxu0 0.0
    %1522 = vmatprep.subr.mxu0 0.0
    %1523 = vmatpush1.msra.mxu0 0.0
    %1524 = vmatprep.subr.mxu0 0.0
    %1525 = vmatpush1.msra.mxu0 0.0
    %1526 = vmatprep.subr.mxu0 0.0
    %1527 = vmatpush1.msra.mxu0 0.0
    %1528 = vmatprep.subr.mxu0 0.0
    %1529 = vmatpush1.msra.mxu0 0.0
    %1530 = vmatprep.subr.mxu0 0.0
    %1531 = vmatpush1.msra.mxu0 0.0
    %1532 = vmatprep.subr.mxu0 0.0
    %1533 = vmatpush1.msra.mxu0 0.0
    %1534 = vmatprep.subr.mxu0 0.0
    %1535 = vmatpush1.msra.mxu0 0.0
    %1536 = vmatprep.subr.mxu0 0.0
    %1537 = vmatpush1.msra.mxu0 0.0
    %1538 = vmatprep.subr.mxu0 0.0
    %1539 = vmatpush1.msra.mxu0 0.0
    %1540 = vmatprep.subr.mxu0 0.0
    %1541 = vmatpush1.msra.mxu0 0.0
    %1542 = vmatprep.subr.mxu0 0.0
    %1543 = vmatpush1.msra.mxu0 0.0
    %1544 = vmatprep.subr.mxu0 0.0
    %1545 = vmatpush1.msra.mxu0 0.0
    %1546 = vmatprep.subr.mxu0 0.0
    %1547 = vmatpush1.msra.mxu0 0.0
    %1548 = vmatprep.subr.mxu0 0.0
    %1549 = vmatpush1.msra.mxu0 0.0
    %1550 = vmatprep.subr.mxu0 0.0
    %1551 = vmatpush1.msra.mxu0 0.0
    %1552 = vmatprep.subr.mxu0 0.0
    %1553 = vmatpush1.msra.mxu0 0.0
    %1554 = vmatprep.subr.mxu0 0.0
    %1555 = vmatpush1.msra.mxu0 0.0
    %1556 = vmatprep.subr.mxu0 0.0
    %1557 = vmatpush1.msra.mxu0 0.0
    %1558 = vmatprep.subr.mxu0 0.0
    %1559 = vmatpush1.msra.mxu0 0.0
    %1560 = vmatprep.mubr.f32.mxu0 0.0
    %1561 = vmatmul.mubr.f32.gmra.mrb[0].mxu0 %v1494
    %v1562 = vpop.f32.mrb[0].mxu0
    %v1563 = vadd.f32 0.0, %v1562
    %v1564 = vpop.f32.mrb[0].mxu0
    %1565 = vdwg.mxu0
    %v1566 = vadd.f32 %v263, %v1563
    %v1567 = vxor.u32 %v1566, 2147483648
    %v1568 = vmul.f32 %v1567, 1.442695
    %v1569 = vpow.pop %v1568
    %v1570 = vadd.f32 %v1569, 1.0
    %v1571 = vrcp.pop %v1570
    %v1572 = vmul.f32 1.0, %v1571
    %1573 = vmatprep.subr.mxu0 0.0
    %1574 = vmatpush1.msra.mxu0 %v495
    %1575 = vmatprep.subr.mxu0 0.0
    %1576 = vmatpush1.msra.mxu0 %v496
    %1577 = vmatprep.subr.mxu0 0.0
    %1578 = vmatpush1.msra.mxu0 %v497
    %1579 = vmatprep.subr.mxu0 0.0
    %1580 = vmatpush1.msra.mxu0 %v498
    %1581 = vmatprep.subr.mxu0 0.0
    %1582 = vmatpush1.msra.mxu0 0.0
    %1583 = vmatprep.subr.mxu0 0.0
    %1584 = vmatpush1.msra.mxu0 0.0
    %1585 = vmatprep.subr.mxu0 0.0
    %1586 = vmatpush1.msra.mxu0 0.0
    %1587 = vmatprep.subr.mxu0 0.0
    %1588 = vmatpush1.msra.mxu0 0.0
    %1589 = vmatprep.subr.mxu0 0.0
    %1590 = vmatpush1.msra.mxu0 0.0
    %1591 = vmatprep.subr.mxu0 0.0
    %1592 = vmatpush1.msra.mxu0 0.0
    %1593 = vmatprep.subr.mxu0 0.0
    %1594 = vmatpush1.msra.mxu0 0.0
    %1595 = vmatprep.subr.mxu0 0.0
    %1596 = vmatpush1.msra.mxu0 0.0
    %1597 = vmatprep.subr.mxu0 0.0
    %1598 = vmatpush1.msra.mxu0 0.0
    %1599 = vmatprep.subr.mxu0 0.0
    %1600 = vmatpush1.msra.mxu0 0.0
    %1601 = vmatprep.subr.mxu0 0.0
    %1602 = vmatpush1.msra.mxu0 0.0
    %1603 = vmatprep.subr.mxu0 0.0
    %1604 = vmatpush1.msra.mxu0 0.0
    %1605 = vmatprep.subr.mxu0 0.0
    %1606 = vmatpush1.msra.mxu0 0.0
    %1607 = vmatprep.subr.mxu0 0.0
    %1608 = vmatpush1.msra.mxu0 0.0
    %1609 = vmatprep.subr.mxu0 0.0
    %1610 = vmatpush1.msra.mxu0 0.0
    %1611 = vmatprep.subr.mxu0 0.0
    %1612 = vmatpush1.msra.mxu0 0.0
    %1613 = vmatprep.subr.mxu0 0.0
    %1614 = vmatpush1.msra.mxu0 0.0
    %1615 = vmatprep.subr.mxu0 0.0
    %1616 = vmatpush1.msra.mxu0 0.0
    %1617 = vmatprep.subr.mxu0 0.0
    %1618 = vmatpush1.msra.mxu0 0.0
    %1619 = vmatprep.subr.mxu0 0.0
    %1620 = vmatpush1.msra.mxu0 0.0
    %1621 = vmatprep.subr.mxu0 0.0
    %1622 = vmatpush1.msra.mxu0 0.0
    %1623 = vmatprep.subr.mxu0 0.0
    %1624 = vmatpush1.msra.mxu0 0.0
    %1625 = vmatprep.subr.mxu0 0.0
    %1626 = vmatpush1.msra.mxu0 0.0
    %1627 = vmatprep.subr.mxu0 0.0
    %1628 = vmatpush1.msra.mxu0 0.0
    %1629 = vmatprep.subr.mxu0 0.0
    %1630 = vmatpush1.msra.mxu0 0.0
    %1631 = vmatprep.subr.mxu0 0.0
    %1632 = vmatpush1.msra.mxu0 0.0
    %1633 = vmatprep.subr.mxu0 0.0
    %1634 = vmatpush1.msra.mxu0 0.0
    %1635 = vmatprep.subr.mxu0 0.0
    %1636 = vmatpush1.msra.mxu0 0.0
    %1637 = vmatprep.mubr.f32.mxu0 0.0
    %1638 = vmatmul.mubr.f32.gmra.mrb[0].mxu0 %v1494
    %v1639 = vpop.f32.mrb[0].mxu0
    %v1640 = vadd.f32 0.0, %v1639
    %v1641 = vpop.f32.mrb[0].mxu0
    %1642 = vdwg.mxu0
    %v1643 = vadd.f32 %v370, %v1640
    %v1644 = vxor.u32 %v1643, 2147483648
    %v1645 = vmul.f32 %v1644, 1.442695
    %v1646 = vpow.pop %v1645
    %v1647 = vadd.f32 %v1646, 1.0
    %v1648 = vrcp.pop %v1647
    %v1649 = vmul.f32 1.0, %v1648
    %1650 = vmatprep.subr.mxu0 0.0
    %1651 = vmatpush1.msra.mxu0 %v500
    %1652 = vmatprep.subr.mxu0 0.0
    %1653 = vmatpush1.msra.mxu0 %v501
    %1654 = vmatprep.subr.mxu0 0.0
    %1655 = vmatpush1.msra.mxu0 %v502
    %1656 = vmatprep.subr.mxu0 0.0
    %1657 = vmatpush1.msra.mxu0 %v503
    %1658 = vmatprep.subr.mxu0 0.0
    %1659 = vmatpush1.msra.mxu0 0.0
    %1660 = vmatprep.subr.mxu0 0.0
    %1661 = vmatpush1.msra.mxu0 0.0
    %1662 = vmatprep.subr.mxu0 0.0
    %1663 = vmatpush1.msra.mxu0 0.0
    %1664 = vmatprep.subr.mxu0 0.0
    %1665 = vmatpush1.msra.mxu0 0.0
    %1666 = vmatprep.subr.mxu0 0.0
    %1667 = vmatpush1.msra.mxu0 0.0
    %1668 = vmatprep.subr.mxu0 0.0
    %1669 = vmatpush1.msra.mxu0 0.0
    %1670 = vmatprep.subr.mxu0 0.0
    %1671 = vmatpush1.msra.mxu0 0.0
    %1672 = vmatprep.subr.mxu0 0.0
    %1673 = vmatpush1.msra.mxu0 0.0
    %1674 = vmatprep.subr.mxu0 0.0
    %1675 = vmatpush1.msra.mxu0 0.0
    %1676 = vmatprep.subr.mxu0 0.0
    %1677 = vmatpush1.msra.mxu0 0.0
    %1678 = vmatprep.subr.mxu0 0.0
    %1679 = vmatpush1.msra.mxu0 0.0
    %1680 = vmatprep.subr.mxu0 0.0
    %1681 = vmatpush1.msra.mxu0 0.0
    %1682 = vmatprep.subr.mxu0 0.0
    %1683 = vmatpush1.msra.mxu0 0.0
    %1684 = vmatprep.subr.mxu0 0.0
    %1685 = vmatpush1.msra.mxu0 0.0
    %1686 = vmatprep.subr.mxu0 0.0
    %1687 = vmatpush1.msra.mxu0 0.0
    %1688 = vmatprep.subr.mxu0 0.0
    %1689 = vmatpush1.msra.mxu0 0.0
    %1690 = vmatprep.subr.mxu0 0.0
    %1691 = vmatpush1.msra.mxu0 0.0
    %1692 = vmatprep.subr.mxu0 0.0
    %1693 = vmatpush1.msra.mxu0 0.0
    %1694 = vmatprep.subr.mxu0 0.0
    %1695 = vmatpush1.msra.mxu0 0.0
    %1696 = vmatprep.subr.mxu0 0.0
    %1697 = vmatpush1.msra.mxu0 0.0
    %1698 = vmatprep.subr.mxu0 0.0
    %1699 = vmatpush1.msra.mxu0 0.0
    %1700 = vmatprep.subr.mxu0 0.0
    %1701 = vmatpush1.msra.mxu0 0.0
    %1702 = vmatprep.subr.mxu0 0.0
    %1703 = vmatpush1.msra.mxu0 0.0
    %1704 = vmatprep.subr.mxu0 0.0
    %1705 = vmatpush1.msra.mxu0 0.0
    %1706 = vmatprep.subr.mxu0 0.0
    %1707 = vmatpush1.msra.mxu0 0.0
    %1708 = vmatprep.subr.mxu0 0.0
    %1709 = vmatpush1.msra.mxu0 0.0
    %1710 = vmatprep.subr.mxu0 0.0
    %1711 = vmatpush1.msra.mxu0 0.0
    %1712 = vmatprep.subr.mxu0 0.0
    %1713 = vmatpush1.msra.mxu0 0.0
    %1714 = vmatprep.mubr.f32.mxu0 0.0
    %1715 = vmatmul.mubr.f32.gmra.mrb[0].mxu0 %v1494
    %v1716 = vpop.f32.mrb[0].mxu0
    %v1717 = vadd.f32 %v666, %v1716
    %v1718 = vpop.f32.mrb[0].mxu0
    %1719 = vdwg.mxu0
    %v1720 = vmul.f32 %v1572, %v1717
    %v1721 = vadd.f32 %v477, %v1720
    %v1722 = vtanh.pop %v1721
    %v1723 = vsub.f32 1.0, %v1649
    %v1724 = vmul.f32 %v1723, %v1722
    %v1726 = vmul.f32 %v1649, %v1493
    %v1727 = vadd.f32 %v1724, %v1726
    %s1728 = scalar_lea.vmem %s6, 8
    %1729 = vst.msk [vmem:[%s1728] sm:$0x3] %vm744, %v1727
    %v1731 = vsel %vm505, %v1727, 0
    %1733 = vmatprep.subr.mxu0 0.0
    %1734 = vmatpush1.msra.mxu0 %v490
    %1735 = vmatprep.subr.mxu0 0.0
    %1736 = vmatpush1.msra.mxu0 %v491
    %1737 = vmatprep.subr.mxu0 0.0
    %1738 = vmatpush1.msra.mxu0 %v492
    %1739 = vmatprep.subr.mxu0 0.0
    %1740 = vmatpush1.msra.mxu0 %v493
    %1741 = vmatprep.subr.mxu0 0.0
    %1742 = vmatpush1.msra.mxu0 0.0
    %1743 = vmatprep.subr.mxu0 0.0
    %1744 = vmatpush1.msra.mxu0 0.0
    %1745 = vmatprep.subr.mxu0 0.0
    %1746 = vmatpush1.msra.mxu0 0.0
    %1747 = vmatprep.subr.mxu0 0.0
    %1748 = vmatpush1.msra.mxu0 0.0
    %1749 = vmatprep.subr.mxu0 0.0
    %1750 = vmatpush1.msra.mxu0 0.0
    %1751 = vmatprep.subr.mxu0 0.0
    %1752 = vmatpush1.msra.mxu0 0.0
    %1753 = vmatprep.subr.mxu0 0.0
    %1754 = vmatpush1.msra.mxu0 0.0
    %1755 = vmatprep.subr.mxu0 0.0
    %1756 = vmatpush1.msra.mxu0 0.0
    %1757 = vmatprep.subr.mxu0 0.0
    %1758 = vmatpush1.msra.mxu0 0.0
    %1759 = vmatprep.subr.mxu0 0.0
    %1760 = vmatpush1.msra.mxu0 0.0
    %1761 = vmatprep.subr.mxu0 0.0
    %1762 = vmatpush1.msra.mxu0 0.0
    %1763 = vmatprep.subr.mxu0 0.0
    %1764 = vmatpush1.msra.mxu0 0.0
    %1765 = vmatprep.subr.mxu0 0.0
    %1766 = vmatpush1.msra.mxu0 0.0
    %1767 = vmatprep.subr.mxu0 0.0
    %1768 = vmatpush1.msra.mxu0 0.0
    %1769 = vmatprep.subr.mxu0 0.0
    %1770 = vmatpush1.msra.mxu0 0.0
    %1771 = vmatprep.subr.mxu0 0.0
    %1772 = vmatpush1.msra.mxu0 0.0
    %1773 = vmatprep.subr.mxu0 0.0
    %1774 = vmatpush1.msra.mxu0 0.0
    %1775 = vmatprep.subr.mxu0 0.0
    %1776 = vmatpush1.msra.mxu0 0.0
    %1777 = vmatprep.subr.mxu0 0.0
    %1778 = vmatpush1.msra.mxu0 0.0
    %1779 = vmatprep.subr.mxu0 0.0
    %1780 = vmatpush1.msra.mxu0 0.0
    %1781 = vmatprep.subr.mxu0 0.0
    %1782 = vmatpush1.msra.mxu0 0.0
    %1783 = vmatprep.subr.mxu0 0.0
    %1784 = vmatpush1.msra.mxu0 0.0
    %1785 = vmatprep.subr.mxu0 0.0
    %1786 = vmatpush1.msra.mxu0 0.0
    %1787 = vmatprep.subr.mxu0 0.0
    %1788 = vmatpush1.msra.mxu0 0.0
    %1789 = vmatprep.subr.mxu0 0.0
    %1790 = vmatpush1.msra.mxu0 0.0
    %1791 = vmatprep.subr.mxu0 0.0
    %1792 = vmatpush1.msra.mxu0 0.0
    %1793 = vmatprep.subr.mxu0 0.0
    %1794 = vmatpush1.msra.mxu0 0.0
    %1795 = vmatprep.subr.mxu0 0.0
    %1796 = vmatpush1.msra.mxu0 0.0
    %1797 = vmatprep.mubr.f32.mxu0 0.0
    %1798 = vmatmul.mubr.f32.gmra.mrb[0].mxu0 %v1731
    %v1799 = vpop.f32.mrb[0].mxu0
    %v1800 = vadd.f32 0.0, %v1799
    %v1801 = vpop.f32.mrb[0].mxu0
    %1802 = vdwg.mxu0
    %v1804 = vrot.slane %v1800, 6
    %v1806 = vadd.f32 %v263, %v1804
    %v1807 = vxor.u32 %v1806, 2147483648
    %v1808 = vmul.f32 %v1807, 1.442695
    %v1809 = vpow.pop %v1808
    %v1810 = vadd.f32 %v1809, 1.0
    %v1811 = vrcp.pop %v1810
    %v1812 = vmul.f32 1.0, %v1811
    %1813 = vmatprep.subr.mxu0 0.0
    %1814 = vmatpush1.msra.mxu0 %v495
    %1815 = vmatprep.subr.mxu0 0.0
    %1816 = vmatpush1.msra.mxu0 %v496
    %1817 = vmatprep.subr.mxu0 0.0
    %1818 = vmatpush1.msra.mxu0 %v497
    %1819 = vmatprep.subr.mxu0 0.0
    %1820 = vmatpush1.msra.mxu0 %v498
    %1821 = vmatprep.subr.mxu0 0.0
    %1822 = vmatpush1.msra.mxu0 0.0
    %1823 = vmatprep.subr.mxu0 0.0
    %1824 = vmatpush1.msra.mxu0 0.0
    %1825 = vmatprep.subr.mxu0 0.0
    %1826 = vmatpush1.msra.mxu0 0.0
    %1827 = vmatprep.subr.mxu0 0.0
    %1828 = vmatpush1.msra.mxu0 0.0
    %1829 = vmatprep.subr.mxu0 0.0
    %1830 = vmatpush1.msra.mxu0 0.0
    %1831 = vmatprep.subr.mxu0 0.0
    %1832 = vmatpush1.msra.mxu0 0.0
    %1833 = vmatprep.subr.mxu0 0.0
    %1834 = vmatpush1.msra.mxu0 0.0
    %1835 = vmatprep.subr.mxu0 0.0
    %1836 = vmatpush1.msra.mxu0 0.0
    %1837 = vmatprep.subr.mxu0 0.0
    %1838 = vmatpush1.msra.mxu0 0.0
    %1839 = vmatprep.subr.mxu0 0.0
    %1840 = vmatpush1.msra.mxu0 0.0
    %1841 = vmatprep.subr.mxu0 0.0
    %1842 = vmatpush1.msra.mxu0 0.0
    %1843 = vmatprep.subr.mxu0 0.0
    %1844 = vmatpush1.msra.mxu0 0.0
    %1845 = vmatprep.subr.mxu0 0.0
    %1846 = vmatpush1.msra.mxu0 0.0
    %1847 = vmatprep.subr.mxu0 0.0
    %1848 = vmatpush1.msra.mxu0 0.0
    %1849 = vmatprep.subr.mxu0 0.0
    %1850 = vmatpush1.msra.mxu0 0.0
    %1851 = vmatprep.subr.mxu0 0.0
    %1852 = vmatpush1.msra.mxu0 0.0
    %1853 = vmatprep.subr.mxu0 0.0
    %1854 = vmatpush1.msra.mxu0 0.0
    %1855 = vmatprep.subr.mxu0 0.0
    %1856 = vmatpush1.msra.mxu0 0.0
    %1857 = vmatprep.subr.mxu0 0.0
    %1858 = vmatpush1.msra.mxu0 0.0
    %1859 = vmatprep.subr.mxu0 0.0
    %1860 = vmatpush1.msra.mxu0 0.0
    %1861 = vmatprep.subr.mxu0 0.0
    %1862 = vmatpush1.msra.mxu0 0.0
    %1863 = vmatprep.subr.mxu0 0.0
    %1864 = vmatpush1.msra.mxu0 0.0
    %1865 = vmatprep.subr.mxu0 0.0
    %1866 = vmatpush1.msra.mxu0 0.0
    %1867 = vmatprep.subr.mxu0 0.0
    %1868 = vmatpush1.msra.mxu0 0.0
    %1869 = vmatprep.subr.mxu0 0.0
    %1870 = vmatpush1.msra.mxu0 0.0
    %1871 = vmatprep.subr.mxu0 0.0
    %1872 = vmatpush1.msra.mxu0 0.0
    %1873 = vmatprep.subr.mxu0 0.0
    %1874 = vmatpush1.msra.mxu0 0.0
    %1875 = vmatprep.subr.mxu0 0.0
    %1876 = vmatpush1.msra.mxu0 0.0
    %1877 = vmatprep.mubr.f32.mxu0 0.0
    %1878 = vmatmul.mubr.f32.gmra.mrb[0].mxu0 %v1731
    %v1879 = vpop.f32.mrb[0].mxu0
    %v1880 = vadd.f32 0.0, %v1879
    %v1881 = vpop.f32.mrb[0].mxu0
    %1882 = vdwg.mxu0
    %v1884 = vrot.slane %v1880, 6
    %v1886 = vadd.f32 %v370, %v1884
    %v1887 = vxor.u32 %v1886, 2147483648
    %v1888 = vmul.f32 %v1887, 1.442695
    %v1889 = vpow.pop %v1888
    %v1890 = vadd.f32 %v1889, 1.0
    %v1891 = vrcp.pop %v1890
    %v1892 = vmul.f32 1.0, %v1891
    %1893 = vmatprep.subr.mxu0 0.0
    %1894 = vmatpush1.msra.mxu0 %v500
    %1895 = vmatprep.subr.mxu0 0.0
    %1896 = vmatpush1.msra.mxu0 %v501
    %1897 = vmatprep.subr.mxu0 0.0
    %1898 = vmatpush1.msra.mxu0 %v502
    %1899 = vmatprep.subr.mxu0 0.0
    %1900 = vmatpush1.msra.mxu0 %v503
    %1901 = vmatprep.subr.mxu0 0.0
    %1902 = vmatpush1.msra.mxu0 0.0
    %1903 = vmatprep.subr.mxu0 0.0
    %1904 = vmatpush1.msra.mxu0 0.0
    %1905 = vmatprep.subr.mxu0 0.0
    %1906 = vmatpush1.msra.mxu0 0.0
    %1907 = vmatprep.subr.mxu0 0.0
    %1908 = vmatpush1.msra.mxu0 0.0
    %1909 = vmatprep.subr.mxu0 0.0
    %1910 = vmatpush1.msra.mxu0 0.0
    %1911 = vmatprep.subr.mxu0 0.0
    %1912 = vmatpush1.msra.mxu0 0.0
    %1913 = vmatprep.subr.mxu0 0.0
    %1914 = vmatpush1.msra.mxu0 0.0
    %1915 = vmatprep.subr.mxu0 0.0
    %1916 = vmatpush1.msra.mxu0 0.0
    %1917 = vmatprep.subr.mxu0 0.0
    %1918 = vmatpush1.msra.mxu0 0.0
    %1919 = vmatprep.subr.mxu0 0.0
    %1920 = vmatpush1.msra.mxu0 0.0
    %1921 = vmatprep.subr.mxu0 0.0
    %1922 = vmatpush1.msra.mxu0 0.0
    %1923 = vmatprep.subr.mxu0 0.0
    %1924 = vmatpush1.msra.mxu0 0.0
    %1925 = vmatprep.subr.mxu0 0.0
    %1926 = vmatpush1.msra.mxu0 0.0
    %1927 = vmatprep.subr.mxu0 0.0
    %1928 = vmatpush1.msra.mxu0 0.0
    %1929 = vmatprep.subr.mxu0 0.0
    %1930 = vmatpush1.msra.mxu0 0.0
    %1931 = vmatprep.subr.mxu0 0.0
    %1932 = vmatpush1.msra.mxu0 0.0
    %1933 = vmatprep.subr.mxu0 0.0
    %1934 = vmatpush1.msra.mxu0 0.0
    %1935 = vmatprep.subr.mxu0 0.0
    %1936 = vmatpush1.msra.mxu0 0.0
    %1937 = vmatprep.subr.mxu0 0.0
    %1938 = vmatpush1.msra.mxu0 0.0
    %1939 = vmatprep.subr.mxu0 0.0
    %1940 = vmatpush1.msra.mxu0 0.0
    %1941 = vmatprep.subr.mxu0 0.0
    %1942 = vmatpush1.msra.mxu0 0.0
    %1943 = vmatprep.subr.mxu0 0.0
    %1944 = vmatpush1.msra.mxu0 0.0
    %1945 = vmatprep.subr.mxu0 0.0
    %1946 = vmatpush1.msra.mxu0 0.0
    %1947 = vmatprep.subr.mxu0 0.0
    %1948 = vmatpush1.msra.mxu0 0.0
    %1949 = vmatprep.subr.mxu0 0.0
    %1950 = vmatpush1.msra.mxu0 0.0
    %1951 = vmatprep.subr.mxu0 0.0
    %1952 = vmatpush1.msra.mxu0 0.0
    %1953 = vmatprep.subr.mxu0 0.0
    %1954 = vmatpush1.msra.mxu0 0.0
    %1955 = vmatprep.subr.mxu0 0.0
    %1956 = vmatpush1.msra.mxu0 0.0
    %1957 = vmatprep.mubr.f32.mxu0 0.0
    %1958 = vmatmul.mubr.f32.gmra.mrb[0].mxu0 %v1731
    %v1959 = vpop.f32.mrb[0].mxu0
    %v1960 = vadd.f32 %v666, %v1959
    %v1961 = vpop.f32.mrb[0].mxu0
    %1962 = vdwg.mxu0
    %v1964 = vrot.slane %v1960, 6
    %v1966 = vmul.f32 %v1812, %v1964
    %v1967 = vadd.f32 %v477, %v1966
    %v1968 = vtanh.pop %v1967
    %v1969 = vsub.f32 1.0, %v1892
    %v1970 = vmul.f32 %v1969, %v1968
    %v1971 = vrot.slane %v1727, 6
    %v1973 = vmul.f32 %v1892, %v1971
    %v1974 = vadd.f32 %v1970, %v1973
    %s1975 = scalar_lea.vmem %s6, 10
    %1976 = vst.msk [vmem:[%s1975 - $0x2] sm:$0xc] %vm992, %v1974
    %v1978 = vrot.slane %v1974, 2
    %v1979 = vsel %vm505, %v1978, 0
    %1981 = vmatprep.subr.mxu0 0.0
    %1982 = vmatpush1.msra.mxu0 %v490
    %1983 = vmatprep.subr.mxu0 0.0
    %1984 = vmatpush1.msra.mxu0 %v491
    %1985 = vmatprep.subr.mxu0 0.0
    %1986 = vmatpush1.msra.mxu0 %v492
    %1987 = vmatprep.subr.mxu0 0.0
    %1988 = vmatpush1.msra.mxu0 %v493
    %1989 = vmatprep.subr.mxu0 0.0
    %1990 = vmatpush1.msra.mxu0 0.0
    %1991 = vmatprep.subr.mxu0 0.0
    %1992 = vmatpush1.msra.mxu0 0.0
    %1993 = vmatprep.subr.mxu0 0.0
    %1994 = vmatpush1.msra.mxu0 0.0
    %1995 = vmatprep.subr.mxu0 0.0
    %1996 = vmatpush1.msra.mxu0 0.0
    %1997 = vmatprep.subr.mxu0 0.0
    %1998 = vmatpush1.msra.mxu0 0.0
    %1999 = vmatprep.subr.mxu0 0.0
    %2000 = vmatpush1.msra.mxu0 0.0
    %2001 = vmatprep.subr.mxu0 0.0
    %2002 = vmatpush1.msra.mxu0 0.0
    %2003 = vmatprep.subr.mxu0 0.0
    %2004 = vmatpush1.msra.mxu0 0.0
    %2005 = vmatprep.subr.mxu0 0.0
    %2006 = vmatpush1.msra.mxu0 0.0
    %2007 = vmatprep.subr.mxu0 0.0
    %2008 = vmatpush1.msra.mxu0 0.0
    %2009 = vmatprep.subr.mxu0 0.0
    %2010 = vmatpush1.msra.mxu0 0.0
    %2011 = vmatprep.subr.mxu0 0.0
    %2012 = vmatpush1.msra.mxu0 0.0
    %2013 = vmatprep.subr.mxu0 0.0
    %2014 = vmatpush1.msra.mxu0 0.0
    %2015 = vmatprep.subr.mxu0 0.0
    %2016 = vmatpush1.msra.mxu0 0.0
    %2017 = vmatprep.subr.mxu0 0.0
    %2018 = vmatpush1.msra.mxu0 0.0
    %2019 = vmatprep.subr.mxu0 0.0
    %2020 = vmatpush1.msra.mxu0 0.0
    %2021 = vmatprep.subr.mxu0 0.0
    %2022 = vmatpush1.msra.mxu0 0.0
    %2023 = vmatprep.subr.mxu0 0.0
    %2024 = vmatpush1.msra.mxu0 0.0
    %2025 = vmatprep.subr.mxu0 0.0
    %2026 = vmatpush1.msra.mxu0 0.0
    %2027 = vmatprep.subr.mxu0 0.0
    %2028 = vmatpush1.msra.mxu0 0.0
    %2029 = vmatprep.subr.mxu0 0.0
    %2030 = vmatpush1.msra.mxu0 0.0
    %2031 = vmatprep.subr.mxu0 0.0
    %2032 = vmatpush1.msra.mxu0 0.0
    %2033 = vmatprep.subr.mxu0 0.0
    %2034 = vmatpush1.msra.mxu0 0.0
    %2035 = vmatprep.subr.mxu0 0.0
    %2036 = vmatpush1.msra.mxu0 0.0
    %2037 = vmatprep.subr.mxu0 0.0
    %2038 = vmatpush1.msra.mxu0 0.0
    %2039 = vmatprep.subr.mxu0 0.0
    %2040 = vmatpush1.msra.mxu0 0.0
    %2041 = vmatprep.subr.mxu0 0.0
    %2042 = vmatpush1.msra.mxu0 0.0
    %2043 = vmatprep.subr.mxu0 0.0
    %2044 = vmatpush1.msra.mxu0 0.0
    %2045 = vmatprep.mubr.f32.mxu0 0.0
    %2046 = vmatmul.mubr.f32.gmra.mrb[0].mxu0 %v1979
    %v2047 = vpop.f32.mrb[0].mxu0
    %v2048 = vadd.f32 0.0, %v2047
    %v2049 = vpop.f32.mrb[0].mxu0
    %2050 = vdwg.mxu0
    %v2052 = vrot.slane %v2048, 4
    %v2054 = vadd.f32 %v263, %v2052
    %v2055 = vxor.u32 %v2054, 2147483648
    %v2056 = vmul.f32 %v2055, 1.442695
    %v2057 = vpow.pop %v2056
    %v2058 = vadd.f32 %v2057, 1.0
    %v2059 = vrcp.pop %v2058
    %v2060 = vmul.f32 1.0, %v2059
    %2061 = vmatprep.subr.mxu0 0.0
    %2062 = vmatpush1.msra.mxu0 %v495
    %2063 = vmatprep.subr.mxu0 0.0
    %2064 = vmatpush1.msra.mxu0 %v496
    %2065 = vmatprep.subr.mxu0 0.0
    %2066 = vmatpush1.msra.mxu0 %v497
    %2067 = vmatprep.subr.mxu0 0.0
    %2068 = vmatpush1.msra.mxu0 %v498
    %2069 = vmatprep.subr.mxu0 0.0
    %2070 = vmatpush1.msra.mxu0 0.0
    %2071 = vmatprep.subr.mxu0 0.0
    %2072 = vmatpush1.msra.mxu0 0.0
    %2073 = vmatprep.subr.mxu0 0.0
    %2074 = vmatpush1.msra.mxu0 0.0
    %2075 = vmatprep.subr.mxu0 0.0
    %2076 = vmatpush1.msra.mxu0 0.0
    %2077 = vmatprep.subr.mxu0 0.0
    %2078 = vmatpush1.msra.mxu0 0.0
    %2079 = vmatprep.subr.mxu0 0.0
    %2080 = vmatpush1.msra.mxu0 0.0
    %2081 = vmatprep.subr.mxu0 0.0
    %2082 = vmatpush1.msra.mxu0 0.0
    %2083 = vmatprep.subr.mxu0 0.0
    %2084 = vmatpush1.msra.mxu0 0.0
    %2085 = vmatprep.subr.mxu0 0.0
    %2086 = vmatpush1.msra.mxu0 0.0
    %2087 = vmatprep.subr.mxu0 0.0
    %2088 = vmatpush1.msra.mxu0 0.0
    %2089 = vmatprep.subr.mxu0 0.0
    %2090 = vmatpush1.msra.mxu0 0.0
    %2091 = vmatprep.subr.mxu0 0.0
    %2092 = vmatpush1.msra.mxu0 0.0
    %2093 = vmatprep.subr.mxu0 0.0
    %2094 = vmatpush1.msra.mxu0 0.0
    %2095 = vmatprep.subr.mxu0 0.0
    %2096 = vmatpush1.msra.mxu0 0.0
    %2097 = vmatprep.subr.mxu0 0.0
    %2098 = vmatpush1.msra.mxu0 0.0
    %2099 = vmatprep.subr.mxu0 0.0
    %2100 = vmatpush1.msra.mxu0 0.0
    %2101 = vmatprep.subr.mxu0 0.0
    %2102 = vmatpush1.msra.mxu0 0.0
    %2103 = vmatprep.subr.mxu0 0.0
    %2104 = vmatpush1.msra.mxu0 0.0
    %2105 = vmatprep.subr.mxu0 0.0
    %2106 = vmatpush1.msra.mxu0 0.0
    %2107 = vmatprep.subr.mxu0 0.0
    %2108 = vmatpush1.msra.mxu0 0.0
    %2109 = vmatprep.subr.mxu0 0.0
    %2110 = vmatpush1.msra.mxu0 0.0
    %2111 = vmatprep.subr.mxu0 0.0
    %2112 = vmatpush1.msra.mxu0 0.0
    %2113 = vmatprep.subr.mxu0 0.0
    %2114 = vmatpush1.msra.mxu0 0.0
    %2115 = vmatprep.subr.mxu0 0.0
    %2116 = vmatpush1.msra.mxu0 0.0
    %2117 = vmatprep.subr.mxu0 0.0
    %2118 = vmatpush1.msra.mxu0 0.0
    %2119 = vmatprep.subr.mxu0 0.0
    %2120 = vmatpush1.msra.mxu0 0.0
    %2121 = vmatprep.subr.mxu0 0.0
    %2122 = vmatpush1.msra.mxu0 0.0
    %2123 = vmatprep.subr.mxu0 0.0
    %2124 = vmatpush1.msra.mxu0 0.0
    %2125 = vmatprep.mubr.f32.mxu0 0.0
    %2126 = vmatmul.mubr.f32.gmra.mrb[0].mxu0 %v1979
    %v2127 = vpop.f32.mrb[0].mxu0
    %v2128 = vadd.f32 0.0, %v2127
    %v2129 = vpop.f32.mrb[0].mxu0
    %2130 = vdwg.mxu0
    %v2132 = vrot.slane %v2128, 4
    %v2134 = vadd.f32 %v370, %v2132
    %v2135 = vxor.u32 %v2134, 2147483648
    %v2136 = vmul.f32 %v2135, 1.442695
    %v2137 = vpow.pop %v2136
    %v2138 = vadd.f32 %v2137, 1.0
    %v2139 = vrcp.pop %v2138
    %v2140 = vmul.f32 1.0, %v2139
    %2141 = vmatprep.subr.mxu0 0.0
    %2142 = vmatpush1.msra.mxu0 %v500
    %2143 = vmatprep.subr.mxu0 0.0
    %2144 = vmatpush1.msra.mxu0 %v501
    %2145 = vmatprep.subr.mxu0 0.0
    %2146 = vmatpush1.msra.mxu0 %v502
    %2147 = vmatprep.subr.mxu0 0.0
    %2148 = vmatpush1.msra.mxu0 %v503
    %2149 = vmatprep.subr.mxu0 0.0
    %2150 = vmatpush1.msra.mxu0 0.0
    %2151 = vmatprep.subr.mxu0 0.0
    %2152 = vmatpush1.msra.mxu0 0.0
    %2153 = vmatprep.subr.mxu0 0.0
    %2154 = vmatpush1.msra.mxu0 0.0
    %2155 = vmatprep.subr.mxu0 0.0
    %2156 = vmatpush1.msra.mxu0 0.0
    %2157 = vmatprep.subr.mxu0 0.0
    %2158 = vmatpush1.msra.mxu0 0.0
    %2159 = vmatprep.subr.mxu0 0.0
    %2160 = vmatpush1.msra.mxu0 0.0
    %2161 = vmatprep.subr.mxu0 0.0
    %2162 = vmatpush1.msra.mxu0 0.0
    %2163 = vmatprep.subr.mxu0 0.0
    %2164 = vmatpush1.msra.mxu0 0.0
    %2165 = vmatprep.subr.mxu0 0.0
    %2166 = vmatpush1.msra.mxu0 0.0
    %2167 = vmatprep.subr.mxu0 0.0
    %2168 = vmatpush1.msra.mxu0 0.0
    %2169 = vmatprep.subr.mxu0 0.0
    %2170 = vmatpush1.msra.mxu0 0.0
    %2171 = vmatprep.subr.mxu0 0.0
    %2172 = vmatpush1.msra.mxu0 0.0
    %2173 = vmatprep.subr.mxu0 0.0
    %2174 = vmatpush1.msra.mxu0 0.0
    %2175 = vmatprep.subr.mxu0 0.0
    %2176 = vmatpush1.msra.mxu0 0.0
    %2177 = vmatprep.subr.mxu0 0.0
    %2178 = vmatpush1.msra.mxu0 0.0
    %2179 = vmatprep.subr.mxu0 0.0
    %2180 = vmatpush1.msra.mxu0 0.0
    %2181 = vmatprep.subr.mxu0 0.0
    %2182 = vmatpush1.msra.mxu0 0.0
    %2183 = vmatprep.subr.mxu0 0.0
    %2184 = vmatpush1.msra.mxu0 0.0
    %2185 = vmatprep.subr.mxu0 0.0
    %2186 = vmatpush1.msra.mxu0 0.0
    %2187 = vmatprep.subr.mxu0 0.0
    %2188 = vmatpush1.msra.mxu0 0.0
    %2189 = vmatprep.subr.mxu0 0.0
    %2190 = vmatpush1.msra.mxu0 0.0
    %2191 = vmatprep.subr.mxu0 0.0
    %2192 = vmatpush1.msra.mxu0 0.0
    %2193 = vmatprep.subr.mxu0 0.0
    %2194 = vmatpush1.msra.mxu0 0.0
    %2195 = vmatprep.subr.mxu0 0.0
    %2196 = vmatpush1.msra.mxu0 0.0
    %2197 = vmatprep.subr.mxu0 0.0
    %2198 = vmatpush1.msra.mxu0 0.0
    %2199 = vmatprep.subr.mxu0 0.0
    %2200 = vmatpush1.msra.mxu0 0.0
    %2201 = vmatprep.subr.mxu0 0.0
    %2202 = vmatpush1.msra.mxu0 0.0
    %2203 = vmatprep.subr.mxu0 0.0
    %2204 = vmatpush1.msra.mxu0 0.0
    %2205 = vmatprep.mubr.f32.mxu0 0.0
    %2206 = vmatmul.mubr.f32.gmra.mrb[0].mxu0 %v1979
    %v2207 = vpop.f32.mrb[0].mxu0
    %v2208 = vadd.f32 %v666, %v2207
    %v2209 = vpop.f32.mrb[0].mxu0
    %2210 = vdwg.mxu0
    %v2212 = vrot.slane %v2208, 4
    %v2214 = vmul.f32 %v2060, %v2212
    %v2215 = vadd.f32 %v477, %v2214
    %v2216 = vtanh.pop %v2215
    %v2217 = vsub.f32 1.0, %v2140
    %v2218 = vmul.f32 %v2217, %v2216
    %v2219 = vrot.slane %v1974, 6
    %v2221 = vmul.f32 %v2140, %v2219
    %v2222 = vadd.f32 %v2218, %v2221
    %s2223 = scalar_lea.vmem %s6, 12
    %2224 = vst.msk [vmem:[%s2223 - $0x4] sm:$0x30] %vm1241, %v2222
    %v2226 = vrot.slane %v2222, 4
    %v2227 = vsel %vm505, %v2226, 0
    %2229 = vmatprep.subr.mxu0 0.0
    %2230 = vmatpush1.msra.mxu0 %v490
    %2231 = vmatprep.subr.mxu0 0.0
    %2232 = vmatpush1.msra.mxu0 %v491
    %2233 = vmatprep.subr.mxu0 0.0
    %2234 = vmatpush1.msra.mxu0 %v492
    %2235 = vmatprep.subr.mxu0 0.0
    %2236 = vmatpush1.msra.mxu0 %v493
    %2237 = vmatprep.subr.mxu0 0.0
    %2238 = vmatpush1.msra.mxu0 0.0
    %2239 = vmatprep.subr.mxu0 0.0
    %2240 = vmatpush1.msra.mxu0 0.0
    %2241 = vmatprep.subr.mxu0 0.0
    %2242 = vmatpush1.msra.mxu0 0.0
    %2243 = vmatprep.subr.mxu0 0.0
    %2244 = vmatpush1.msra.mxu0 0.0
    %2245 = vmatprep.subr.mxu0 0.0
    %2246 = vmatpush1.msra.mxu0 0.0
    %2247 = vmatprep.subr.mxu0 0.0
    %2248 = vmatpush1.msra.mxu0 0.0
    %2249 = vmatprep.subr.mxu0 0.0
    %2250 = vmatpush1.msra.mxu0 0.0
    %2251 = vmatprep.subr.mxu0 0.0
    %2252 = vmatpush1.msra.mxu0 0.0
    %2253 = vmatprep.subr.mxu0 0.0
    %2254 = vmatpush1.msra.mxu0 0.0
    %2255 = vmatprep.subr.mxu0 0.0
    %2256 = vmatpush1.msra.mxu0 0.0
    %2257 = vmatprep.subr.mxu0 0.0
    %2258 = vmatpush1.msra.mxu0 0.0
    %2259 = vmatprep.subr.mxu0 0.0
    %2260 = vmatpush1.msra.mxu0 0.0
    %2261 = vmatprep.subr.mxu0 0.0
    %2262 = vmatpush1.msra.mxu0 0.0
    %2263 = vmatprep.subr.mxu0 0.0
    %2264 = vmatpush1.msra.mxu0 0.0
    %2265 = vmatprep.subr.mxu0 0.0
    %2266 = vmatpush1.msra.mxu0 0.0
    %2267 = vmatprep.subr.mxu0 0.0
    %2268 = vmatpush1.msra.mxu0 0.0
    %2269 = vmatprep.subr.mxu0 0.0
    %2270 = vmatpush1.msra.mxu0 0.0
    %2271 = vmatprep.subr.mxu0 0.0
    %2272 = vmatpush1.msra.mxu0 0.0
    %2273 = vmatprep.subr.mxu0 0.0
    %2274 = vmatpush1.msra.mxu0 0.0
    %2275 = vmatprep.subr.mxu0 0.0
    %2276 = vmatpush1.msra.mxu0 0.0
    %2277 = vmatprep.subr.mxu0 0.0
    %2278 = vmatpush1.msra.mxu0 0.0
    %2279 = vmatprep.subr.mxu0 0.0
    %2280 = vmatpush1.msra.mxu0 0.0
    %2281 = vmatprep.subr.mxu0 0.0
    %2282 = vmatpush1.msra.mxu0 0.0
    %2283 = vmatprep.subr.mxu0 0.0
    %2284 = vmatpush1.msra.mxu0 0.0
    %2285 = vmatprep.subr.mxu0 0.0
    %2286 = vmatpush1.msra.mxu0 0.0
    %2287 = vmatprep.subr.mxu0 0.0
    %2288 = vmatpush1.msra.mxu0 0.0
    %2289 = vmatprep.subr.mxu0 0.0
    %2290 = vmatpush1.msra.mxu0 0.0
    %2291 = vmatprep.subr.mxu0 0.0
    %2292 = vmatpush1.msra.mxu0 0.0
    %2293 = vmatprep.mubr.f32.mxu0 0.0
    %2294 = vmatmul.mubr.f32.gmra.mrb[0].mxu0 %v2227
    %v2295 = vpop.f32.mrb[0].mxu0
    %v2296 = vadd.f32 0.0, %v2295
    %v2297 = vpop.f32.mrb[0].mxu0
    %2298 = vdwg.mxu0
    %v2300 = vrot.slane %v2296, 2
    %v2302 = vadd.f32 %v263, %v2300
    %v2303 = vxor.u32 %v2302, 2147483648
    %v2304 = vmul.f32 %v2303, 1.442695
    %v2305 = vpow.pop %v2304
    %v2306 = vadd.f32 %v2305, 1.0
    %v2307 = vrcp.pop %v2306
    %v2308 = vmul.f32 1.0, %v2307
    %2309 = vmatprep.subr.mxu0 0.0
    %2310 = vmatpush1.msra.mxu0 %v495
    %2311 = vmatprep.subr.mxu0 0.0
    %2312 = vmatpush1.msra.mxu0 %v496
    %2313 = vmatprep.subr.mxu0 0.0
    %2314 = vmatpush1.msra.mxu0 %v497
    %2315 = vmatprep.subr.mxu0 0.0
    %2316 = vmatpush1.msra.mxu0 %v498
    %2317 = vmatprep.subr.mxu0 0.0
    %2318 = vmatpush1.msra.mxu0 0.0
    %2319 = vmatprep.subr.mxu0 0.0
    %2320 = vmatpush1.msra.mxu0 0.0
    %2321 = vmatprep.subr.mxu0 0.0
    %2322 = vmatpush1.msra.mxu0 0.0
    %2323 = vmatprep.subr.mxu0 0.0
    %2324 = vmatpush1.msra.mxu0 0.0
    %2325 = vmatprep.subr.mxu0 0.0
    %2326 = vmatpush1.msra.mxu0 0.0
    %2327 = vmatprep.subr.mxu0 0.0
    %2328 = vmatpush1.msra.mxu0 0.0
    %2329 = vmatprep.subr.mxu0 0.0
    %2330 = vmatpush1.msra.mxu0 0.0
    %2331 = vmatprep.subr.mxu0 0.0
    %2332 = vmatpush1.msra.mxu0 0.0
    %2333 = vmatprep.subr.mxu0 0.0
    %2334 = vmatpush1.msra.mxu0 0.0
    %2335 = vmatprep.subr.mxu0 0.0
    %2336 = vmatpush1.msra.mxu0 0.0
    %2337 = vmatprep.subr.mxu0 0.0
    %2338 = vmatpush1.msra.mxu0 0.0
    %2339 = vmatprep.subr.mxu0 0.0
    %2340 = vmatpush1.msra.mxu0 0.0
    %2341 = vmatprep.subr.mxu0 0.0
    %2342 = vmatpush1.msra.mxu0 0.0
    %2343 = vmatprep.subr.mxu0 0.0
    %2344 = vmatpush1.msra.mxu0 0.0
    %2345 = vmatprep.subr.mxu0 0.0
    %2346 = vmatpush1.msra.mxu0 0.0
    %2347 = vmatprep.subr.mxu0 0.0
    %2348 = vmatpush1.msra.mxu0 0.0
    %2349 = vmatprep.subr.mxu0 0.0
    %2350 = vmatpush1.msra.mxu0 0.0
    %2351 = vmatprep.subr.mxu0 0.0
    %2352 = vmatpush1.msra.mxu0 0.0
    %2353 = vmatprep.subr.mxu0 0.0
    %2354 = vmatpush1.msra.mxu0 0.0
    %2355 = vmatprep.subr.mxu0 0.0
    %2356 = vmatpush1.msra.mxu0 0.0
    %2357 = vmatprep.subr.mxu0 0.0
    %2358 = vmatpush1.msra.mxu0 0.0
    %2359 = vmatprep.subr.mxu0 0.0
    %2360 = vmatpush1.msra.mxu0 0.0
    %2361 = vmatprep.subr.mxu0 0.0
    %2362 = vmatpush1.msra.mxu0 0.0
    %2363 = vmatprep.subr.mxu0 0.0
    %2364 = vmatpush1.msra.mxu0 0.0
    %2365 = vmatprep.subr.mxu0 0.0
    %2366 = vmatpush1.msra.mxu0 0.0
    %2367 = vmatprep.subr.mxu0 0.0
    %2368 = vmatpush1.msra.mxu0 0.0
    %2369 = vmatprep.subr.mxu0 0.0
    %2370 = vmatpush1.msra.mxu0 0.0
    %2371 = vmatprep.subr.mxu0 0.0
    %2372 = vmatpush1.msra.mxu0 0.0
    %2373 = vmatprep.mubr.f32.mxu0 0.0
    %2374 = vmatmul.mubr.f32.gmra.mrb[0].mxu0 %v2227
    %v2375 = vpop.f32.mrb[0].mxu0
    %v2376 = vadd.f32 0.0, %v2375
    %v2377 = vpop.f32.mrb[0].mxu0
    %2378 = vdwg.mxu0
    %v2380 = vrot.slane %v2376, 2
    %v2382 = vadd.f32 %v370, %v2380
    %v2383 = vxor.u32 %v2382, 2147483648
    %v2384 = vmul.f32 %v2383, 1.442695
    %v2385 = vpow.pop %v2384
    %v2386 = vadd.f32 %v2385, 1.0
    %v2387 = vrcp.pop %v2386
    %v2388 = vmul.f32 1.0, %v2387
    %2389 = vmatprep.subr.mxu0 0.0
    %2390 = vmatpush1.msra.mxu0 %v500
    %2391 = vmatprep.subr.mxu0 0.0
    %2392 = vmatpush1.msra.mxu0 %v501
    %2393 = vmatprep.subr.mxu0 0.0
    %2394 = vmatpush1.msra.mxu0 %v502
    %2395 = vmatprep.subr.mxu0 0.0
    %2396 = vmatpush1.msra.mxu0 %v503
    %2397 = vmatprep.subr.mxu0 0.0
    %2398 = vmatpush1.msra.mxu0 0.0
    %2399 = vmatprep.subr.mxu0 0.0
    %2400 = vmatpush1.msra.mxu0 0.0
    %2401 = vmatprep.subr.mxu0 0.0
    %2402 = vmatpush1.msra.mxu0 0.0
    %2403 = vmatprep.subr.mxu0 0.0
    %2404 = vmatpush1.msra.mxu0 0.0
    %2405 = vmatprep.subr.mxu0 0.0
    %2406 = vmatpush1.msra.mxu0 0.0
    %2407 = vmatprep.subr.mxu0 0.0
    %2408 = vmatpush1.msra.mxu0 0.0
    %2409 = vmatprep.subr.mxu0 0.0
    %2410 = vmatpush1.msra.mxu0 0.0
    %2411 = vmatprep.subr.mxu0 0.0
    %2412 = vmatpush1.msra.mxu0 0.0
    %2413 = vmatprep.subr.mxu0 0.0
    %2414 = vmatpush1.msra.mxu0 0.0
    %2415 = vmatprep.subr.mxu0 0.0
    %2416 = vmatpush1.msra.mxu0 0.0
    %2417 = vmatprep.subr.mxu0 0.0
    %2418 = vmatpush1.msra.mxu0 0.0
    %2419 = vmatprep.subr.mxu0 0.0
    %2420 = vmatpush1.msra.mxu0 0.0
    %2421 = vmatprep.subr.mxu0 0.0
    %2422 = vmatpush1.msra.mxu0 0.0
    %2423 = vmatprep.subr.mxu0 0.0
    %2424 = vmatpush1.msra.mxu0 0.0
    %2425 = vmatprep.subr.mxu0 0.0
    %2426 = vmatpush1.msra.mxu0 0.0
    %2427 = vmatprep.subr.mxu0 0.0
    %2428 = vmatpush1.msra.mxu0 0.0
    %2429 = vmatprep.subr.mxu0 0.0
    %2430 = vmatpush1.msra.mxu0 0.0
    %2431 = vmatprep.subr.mxu0 0.0
    %2432 = vmatpush1.msra.mxu0 0.0
    %2433 = vmatprep.subr.mxu0 0.0
    %2434 = vmatpush1.msra.mxu0 0.0
    %2435 = vmatprep.subr.mxu0 0.0
    %2436 = vmatpush1.msra.mxu0 0.0
    %2437 = vmatprep.subr.mxu0 0.0
    %2438 = vmatpush1.msra.mxu0 0.0
    %2439 = vmatprep.subr.mxu0 0.0
    %2440 = vmatpush1.msra.mxu0 0.0
    %2441 = vmatprep.subr.mxu0 0.0
    %2442 = vmatpush1.msra.mxu0 0.0
    %2443 = vmatprep.subr.mxu0 0.0
    %2444 = vmatpush1.msra.mxu0 0.0
    %2445 = vmatprep.subr.mxu0 0.0
    %2446 = vmatpush1.msra.mxu0 0.0
    %2447 = vmatprep.subr.mxu0 0.0
    %2448 = vmatpush1.msra.mxu0 0.0
    %2449 = vmatprep.subr.mxu0 0.0
    %2450 = vmatpush1.msra.mxu0 0.0
    %2451 = vmatprep.subr.mxu0 0.0
    %2452 = vmatpush1.msra.mxu0 0.0
    %2453 = vmatprep.mubr.f32.mxu0 0.0
    %2454 = vmatmul.mubr.f32.gmra.mrb[0].mxu0 %v2227
    %v2455 = vpop.f32.mrb[0].mxu0
    %v2456 = vadd.f32 %v666, %v2455
    %v2457 = vpop.f32.mrb[0].mxu0
    %2458 = vdwg.mxu0
    %v2460 = vrot.slane %v2456, 2
    %v2462 = vmul.f32 %v2308, %v2460
    %v2463 = vadd.f32 %v477, %v2462
    %v2464 = vtanh.pop %v2463
    %v2465 = vsub.f32 1.0, %v2388
    %v2466 = vmul.f32 %v2465, %v2464
    %v2467 = vrot.slane %v2222, 6
    %v2469 = vmul.f32 %v2388, %v2467
    %v2470 = vadd.f32 %v2466, %v2469
    %s2471 = scalar_lea.vmem %s6, 14
    %2472 = vst.msk [vmem:[%s2471 - $0x6] sm:$0xc0] %vm1490, %v2470
    %v2474 = vrot.slane %v2470, 6
    %v2475 = vsel %vm505, %v2474, 0
    %2477 = vmatprep.subr.mxu0 0.0
    %2478 = vmatpush1.msra.mxu0 %v490
    %2479 = vmatprep.subr.mxu0 0.0
    %2480 = vmatpush1.msra.mxu0 %v491
    %2481 = vmatprep.subr.mxu0 0.0
    %2482 = vmatpush1.msra.mxu0 %v492
    %2483 = vmatprep.subr.mxu0 0.0
    %2484 = vmatpush1.msra.mxu0 %v493
    %2485 = vmatprep.subr.mxu0 0.0
    %2486 = vmatpush1.msra.mxu0 0.0
    %2487 = vmatprep.subr.mxu0 0.0
    %2488 = vmatpush1.msra.mxu0 0.0
    %2489 = vmatprep.subr.mxu0 0.0
    %2490 = vmatpush1.msra.mxu0 0.0
    %2491 = vmatprep.subr.mxu0 0.0
    %2492 = vmatpush1.msra.mxu0 0.0
    %2493 = vmatprep.subr.mxu0 0.0
    %2494 = vmatpush1.msra.mxu0 0.0
    %2495 = vmatprep.subr.mxu0 0.0
    %2496 = vmatpush1.msra.mxu0 0.0
    %2497 = vmatprep.subr.mxu0 0.0
    %2498 = vmatpush1.msra.mxu0 0.0
    %2499 = vmatprep.subr.mxu0 0.0
    %2500 = vmatpush1.msra.mxu0 0.0
    %2501 = vmatprep.subr.mxu0 0.0
    %2502 = vmatpush1.msra.mxu0 0.0
    %2503 = vmatprep.subr.mxu0 0.0
    %2504 = vmatpush1.msra.mxu0 0.0
    %2505 = vmatprep.subr.mxu0 0.0
    %2506 = vmatpush1.msra.mxu0 0.0
    %2507 = vmatprep.subr.mxu0 0.0
    %2508 = vmatpush1.msra.mxu0 0.0
    %2509 = vmatprep.subr.mxu0 0.0
    %2510 = vmatpush1.msra.mxu0 0.0
    %2511 = vmatprep.subr.mxu0 0.0
    %2512 = vmatpush1.msra.mxu0 0.0
    %2513 = vmatprep.subr.mxu0 0.0
    %2514 = vmatpush1.msra.mxu0 0.0
    %2515 = vmatprep.subr.mxu0 0.0
    %2516 = vmatpush1.msra.mxu0 0.0
    %2517 = vmatprep.subr.mxu0 0.0
    %2518 = vmatpush1.msra.mxu0 0.0
    %2519 = vmatprep.subr.mxu0 0.0
    %2520 = vmatpush1.msra.mxu0 0.0
    %2521 = vmatprep.subr.mxu0 0.0
    %2522 = vmatpush1.msra.mxu0 0.0
    %2523 = vmatprep.subr.mxu0 0.0
    %2524 = vmatpush1.msra.mxu0 0.0
    %2525 = vmatprep.subr.mxu0 0.0
    %2526 = vmatpush1.msra.mxu0 0.0
    %2527 = vmatprep.subr.mxu0 0.0
    %2528 = vmatpush1.msra.mxu0 0.0
    %2529 = vmatprep.subr.mxu0 0.0
    %2530 = vmatpush1.msra.mxu0 0.0
    %2531 = vmatprep.subr.mxu0 0.0
    %2532 = vmatpush1.msra.mxu0 0.0
    %2533 = vmatprep.subr.mxu0 0.0
    %2534 = vmatpush1.msra.mxu0 0.0
    %2535 = vmatprep.subr.mxu0 0.0
    %2536 = vmatpush1.msra.mxu0 0.0
    %2537 = vmatprep.subr.mxu0 0.0
    %2538 = vmatpush1.msra.mxu0 0.0
    %2539 = vmatprep.subr.mxu0 0.0
    %2540 = vmatpush1.msra.mxu0 0.0
    %2541 = vmatprep.mubr.f32.mxu0 0.0
    %2542 = vmatmul.mubr.f32.gmra.mrb[0].mxu0 %v2475
    %v2543 = vpop.f32.mrb[0].mxu0
    %v2544 = vadd.f32 0.0, %v2543
    %v2545 = vpop.f32.mrb[0].mxu0
    %2546 = vdwg.mxu0
    %v2547 = vadd.f32 %v268, %v2544
    %v2548 = vxor.u32 %v2547, 2147483648
    %v2549 = vmul.f32 %v2548, 1.442695
    %v2550 = vpow.pop %v2549
    %v2551 = vadd.f32 %v2550, 1.0
    %v2552 = vrcp.pop %v2551
    %v2553 = vmul.f32 1.0, %v2552
    %2554 = vmatprep.subr.mxu0 0.0
    %2555 = vmatpush1.msra.mxu0 %v495
    %2556 = vmatprep.subr.mxu0 0.0
    %2557 = vmatpush1.msra.mxu0 %v496
    %2558 = vmatprep.subr.mxu0 0.0
    %2559 = vmatpush1.msra.mxu0 %v497
    %2560 = vmatprep.subr.mxu0 0.0
    %2561 = vmatpush1.msra.mxu0 %v498
    %2562 = vmatprep.subr.mxu0 0.0
    %2563 = vmatpush1.msra.mxu0 0.0
    %2564 = vmatprep.subr.mxu0 0.0
    %2565 = vmatpush1.msra.mxu0 0.0
    %2566 = vmatprep.subr.mxu0 0.0
    %2567 = vmatpush1.msra.mxu0 0.0
    %2568 = vmatprep.subr.mxu0 0.0
    %2569 = vmatpush1.msra.mxu0 0.0
    %2570 = vmatprep.subr.mxu0 0.0
    %2571 = vmatpush1.msra.mxu0 0.0
    %2572 = vmatprep.subr.mxu0 0.0
    %2573 = vmatpush1.msra.mxu0 0.0
    %2574 = vmatprep.subr.mxu0 0.0
    %2575 = vmatpush1.msra.mxu0 0.0
    %2576 = vmatprep.subr.mxu0 0.0
    %2577 = vmatpush1.msra.mxu0 0.0
    %2578 = vmatprep.subr.mxu0 0.0
    %2579 = vmatpush1.msra.mxu0 0.0
    %2580 = vmatprep.subr.mxu0 0.0
    %2581 = vmatpush1.msra.mxu0 0.0
    %2582 = vmatprep.subr.mxu0 0.0
    %2583 = vmatpush1.msra.mxu0 0.0
    %2584 = vmatprep.subr.mxu0 0.0
    %2585 = vmatpush1.msra.mxu0 0.0
    %2586 = vmatprep.subr.mxu0 0.0
    %2587 = vmatpush1.msra.mxu0 0.0
    %2588 = vmatprep.subr.mxu0 0.0
    %2589 = vmatpush1.msra.mxu0 0.0
    %2590 = vmatprep.subr.mxu0 0.0
    %2591 = vmatpush1.msra.mxu0 0.0
    %2592 = vmatprep.subr.mxu0 0.0
    %2593 = vmatpush1.msra.mxu0 0.0
    %2594 = vmatprep.subr.mxu0 0.0
    %2595 = vmatpush1.msra.mxu0 0.0
    %2596 = vmatprep.subr.mxu0 0.0
    %2597 = vmatpush1.msra.mxu0 0.0
    %2598 = vmatprep.subr.mxu0 0.0
    %2599 = vmatpush1.msra.mxu0 0.0
    %2600 = vmatprep.subr.mxu0 0.0
    %2601 = vmatpush1.msra.mxu0 0.0
    %2602 = vmatprep.subr.mxu0 0.0
    %2603 = vmatpush1.msra.mxu0 0.0
    %2604 = vmatprep.subr.mxu0 0.0
    %2605 = vmatpush1.msra.mxu0 0.0
    %2606 = vmatprep.subr.mxu0 0.0
    %2607 = vmatpush1.msra.mxu0 0.0
    %2608 = vmatprep.subr.mxu0 0.0
    %2609 = vmatpush1.msra.mxu0 0.0
    %2610 = vmatprep.subr.mxu0 0.0
    %2611 = vmatpush1.msra.mxu0 0.0
    %2612 = vmatprep.subr.mxu0 0.0
    %2613 = vmatpush1.msra.mxu0 0.0
    %2614 = vmatprep.subr.mxu0 0.0
    %2615 = vmatpush1.msra.mxu0 0.0
    %2616 = vmatprep.subr.mxu0 0.0
    %2617 = vmatpush1.msra.mxu0 0.0
    %2618 = vmatprep.mubr.f32.mxu0 0.0
    %2619 = vmatmul.mubr.f32.gmra.mrb[0].mxu0 %v2475
    %v2620 = vpop.f32.mrb[0].mxu0
    %v2621 = vadd.f32 0.0, %v2620
    %v2622 = vpop.f32.mrb[0].mxu0
    %2623 = vdwg.mxu0
    %v2624 = vadd.f32 %v375, %v2621
    %v2625 = vxor.u32 %v2624, 2147483648
    %v2626 = vmul.f32 %v2625, 1.442695
    %v2627 = vpow.pop %v2626
    %v2628 = vadd.f32 %v2627, 1.0
    %v2629 = vrcp.pop %v2628
    %v2630 = vmul.f32 1.0, %v2629
    %2631 = vmatprep.subr.mxu0 0.0
    %2632 = vmatpush1.msra.mxu0 %v500
    %2633 = vmatprep.subr.mxu0 0.0
    %2634 = vmatpush1.msra.mxu0 %v501
    %2635 = vmatprep.subr.mxu0 0.0
    %2636 = vmatpush1.msra.mxu0 %v502
    %2637 = vmatprep.subr.mxu0 0.0
    %2638 = vmatpush1.msra.mxu0 %v503
    %2639 = vmatprep.subr.mxu0 0.0
    %2640 = vmatpush1.msra.mxu0 0.0
    %2641 = vmatprep.subr.mxu0 0.0
    %2642 = vmatpush1.msra.mxu0 0.0
    %2643 = vmatprep.subr.mxu0 0.0
    %2644 = vmatpush1.msra.mxu0 0.0
    %2645 = vmatprep.subr.mxu0 0.0
    %2646 = vmatpush1.msra.mxu0 0.0
    %2647 = vmatprep.subr.mxu0 0.0
    %2648 = vmatpush1.msra.mxu0 0.0
    %2649 = vmatprep.subr.mxu0 0.0
    %2650 = vmatpush1.msra.mxu0 0.0
    %2651 = vmatprep.subr.mxu0 0.0
    %2652 = vmatpush1.msra.mxu0 0.0
    %2653 = vmatprep.subr.mxu0 0.0
    %2654 = vmatpush1.msra.mxu0 0.0
    %2655 = vmatprep.subr.mxu0 0.0
    %2656 = vmatpush1.msra.mxu0 0.0
    %2657 = vmatprep.subr.mxu0 0.0
    %2658 = vmatpush1.msra.mxu0 0.0
    %2659 = vmatprep.subr.mxu0 0.0
    %2660 = vmatpush1.msra.mxu0 0.0
    %2661 = vmatprep.subr.mxu0 0.0
    %2662 = vmatpush1.msra.mxu0 0.0
    %2663 = vmatprep.subr.mxu0 0.0
    %2664 = vmatpush1.msra.mxu0 0.0
    %2665 = vmatprep.subr.mxu0 0.0
    %2666 = vmatpush1.msra.mxu0 0.0
    %2667 = vmatprep.subr.mxu0 0.0
    %2668 = vmatpush1.msra.mxu0 0.0
    %2669 = vmatprep.subr.mxu0 0.0
    %2670 = vmatpush1.msra.mxu0 0.0
    %2671 = vmatprep.subr.mxu0 0.0
    %2672 = vmatpush1.msra.mxu0 0.0
    %2673 = vmatprep.subr.mxu0 0.0
    %2674 = vmatpush1.msra.mxu0 0.0
    %2675 = vmatprep.subr.mxu0 0.0
    %2676 = vmatpush1.msra.mxu0 0.0
    %2677 = vmatprep.subr.mxu0 0.0
    %2678 = vmatpush1.msra.mxu0 0.0
    %2679 = vmatprep.subr.mxu0 0.0
    %2680 = vmatpush1.msra.mxu0 0.0
    %2681 = vmatprep.subr.mxu0 0.0
    %2682 = vmatpush1.msra.mxu0 0.0
    %2683 = vmatprep.subr.mxu0 0.0
    %2684 = vmatpush1.msra.mxu0 0.0
    %2685 = vmatprep.subr.mxu0 0.0
    %2686 = vmatpush1.msra.mxu0 0.0
    %2687 = vmatprep.subr.mxu0 0.0
    %2688 = vmatpush1.msra.mxu0 0.0
    %2689 = vmatprep.subr.mxu0 0.0
    %2690 = vmatpush1.msra.mxu0 0.0
    %2691 = vmatprep.subr.mxu0 0.0
    %2692 = vmatpush1.msra.mxu0 0.0
    %2693 = vmatprep.subr.mxu0 0.0
    %2694 = vmatpush1.msra.mxu0 0.0
    %2695 = vmatprep.mubr.f32.mxu0 0.0
    %2696 = vmatmul.mubr.f32.gmra.mrb[0].mxu0 %v2475
    %v2697 = vpop.f32.mrb[0].mxu0
    %v2698 = vadd.f32 %v666, %v2697
    %v2699 = vpop.f32.mrb[0].mxu0
    %2700 = vdwg.mxu0
    %v2701 = vmul.f32 %v2553, %v2698
    %v2702 = vadd.f32 %v482, %v2701
    %v2703 = vtanh.pop %v2702
    %v2704 = vsub.f32 1.0, %v2630
    %v2705 = vmul.f32 %v2704, %v2703
    %v2707 = vmul.f32 %v2630, %v2474
    %v2708 = vadd.f32 %v2705, %v2707
    %s2709 = scalar_lea.vmem %s6, 16
    %2710 = vst.msk [vmem:[%s2709] sm:$0x3] %vm744, %v2708
    %v2712 = vsel %vm505, %v2708, 0
    %2714 = vmatprep.subr.mxu0 0.0
    %2715 = vmatpush1.msra.mxu0 %v490
    %2716 = vmatprep.subr.mxu0 0.0
    %2717 = vmatpush1.msra.mxu0 %v491
    %2718 = vmatprep.subr.mxu0 0.0
    %2719 = vmatpush1.msra.mxu0 %v492
    %2720 = vmatprep.subr.mxu0 0.0
    %2721 = vmatpush1.msra.mxu0 %v493
    %2722 = vmatprep.subr.mxu0 0.0
    %2723 = vmatpush1.msra.mxu0 0.0
    %2724 = vmatprep.subr.mxu0 0.0
    %2725 = vmatpush1.msra.mxu0 0.0
    %2726 = vmatprep.subr.mxu0 0.0
    %2727 = vmatpush1.msra.mxu0 0.0
    %2728 = vmatprep.subr.mxu0 0.0
    %2729 = vmatpush1.msra.mxu0 0.0
    %2730 = vmatprep.subr.mxu0 0.0
    %2731 = vmatpush1.msra.mxu0 0.0
    %2732 = vmatprep.subr.mxu0 0.0
    %2733 = vmatpush1.msra.mxu0 0.0
    %2734 = vmatprep.subr.mxu0 0.0
    %2735 = vmatpush1.msra.mxu0 0.0
    %2736 = vmatprep.subr.mxu0 0.0
    %2737 = vmatpush1.msra.mxu0 0.0
    %2738 = vmatprep.subr.mxu0 0.0
    %2739 = vmatpush1.msra.mxu0 0.0
    %2740 = vmatprep.subr.mxu0 0.0
    %2741 = vmatpush1.msra.mxu0 0.0
    %2742 = vmatprep.subr.mxu0 0.0
    %2743 = vmatpush1.msra.mxu0 0.0
    %2744 = vmatprep.subr.mxu0 0.0
    %2745 = vmatpush1.msra.mxu0 0.0
    %2746 = vmatprep.subr.mxu0 0.0
    %2747 = vmatpush1.msra.mxu0 0.0
    %2748 = vmatprep.subr.mxu0 0.0
    %2749 = vmatpush1.msra.mxu0 0.0
    %2750 = vmatprep.subr.mxu0 0.0
    %2751 = vmatpush1.msra.mxu0 0.0
    %2752 = vmatprep.subr.mxu0 0.0
    %2753 = vmatpush1.msra.mxu0 0.0
    %2754 = vmatprep.subr.mxu0 0.0
    %2755 = vmatpush1.msra.mxu0 0.0
    %2756 = vmatprep.subr.mxu0 0.0
    %2757 = vmatpush1.msra.mxu0 0.0
    %2758 = vmatprep.subr.mxu0 0.0
    %2759 = vmatpush1.msra.mxu0 0.0
    %2760 = vmatprep.subr.mxu0 0.0
    %2761 = vmatpush1.msra.mxu0 0.0
    %2762 = vmatprep.subr.mxu0 0.0
    %2763 = vmatpush1.msra.mxu0 0.0
    %2764 = vmatprep.subr.mxu0 0.0
    %2765 = vmatpush1.msra.mxu0 0.0
    %2766 = vmatprep.subr.mxu0 0.0
    %2767 = vmatpush1.msra.mxu0 0.0
    %2768 = vmatprep.subr.mxu0 0.0
    %2769 = vmatpush1.msra.mxu0 0.0
    %2770 = vmatprep.subr.mxu0 0.0
    %2771 = vmatpush1.msra.mxu0 0.0
    %2772 = vmatprep.subr.mxu0 0.0
    %2773 = vmatpush1.msra.mxu0 0.0
    %2774 = vmatprep.subr.mxu0 0.0
    %2775 = vmatpush1.msra.mxu0 0.0
    %2776 = vmatprep.subr.mxu0 0.0
    %2777 = vmatpush1.msra.mxu0 0.0
    %2778 = vmatprep.mubr.f32.mxu0 0.0
    %2779 = vmatmul.mubr.f32.gmra.mrb[0].mxu0 %v2712
    %v2780 = vpop.f32.mrb[0].mxu0
    %v2781 = vadd.f32 0.0, %v2780
    %v2782 = vpop.f32.mrb[0].mxu0
    %2783 = vdwg.mxu0
    %v2785 = vrot.slane %v2781, 6
    %v2787 = vadd.f32 %v268, %v2785
    %v2788 = vxor.u32 %v2787, 2147483648
    %v2789 = vmul.f32 %v2788, 1.442695
    %v2790 = vpow.pop %v2789
    %v2791 = vadd.f32 %v2790, 1.0
    %v2792 = vrcp.pop %v2791
    %v2793 = vmul.f32 1.0, %v2792
    %2794 = vmatprep.subr.mxu0 0.0
    %2795 = vmatpush1.msra.mxu0 %v495
    %2796 = vmatprep.subr.mxu0 0.0
    %2797 = vmatpush1.msra.mxu0 %v496
    %2798 = vmatprep.subr.mxu0 0.0
    %2799 = vmatpush1.msra.mxu0 %v497
    %2800 = vmatprep.subr.mxu0 0.0
    %2801 = vmatpush1.msra.mxu0 %v498
    %2802 = vmatprep.subr.mxu0 0.0
    %2803 = vmatpush1.msra.mxu0 0.0
    %2804 = vmatprep.subr.mxu0 0.0
    %2805 = vmatpush1.msra.mxu0 0.0
    %2806 = vmatprep.subr.mxu0 0.0
    %2807 = vmatpush1.msra.mxu0 0.0
    %2808 = vmatprep.subr.mxu0 0.0
    %2809 = vmatpush1.msra.mxu0 0.0
    %2810 = vmatprep.subr.mxu0 0.0
    %2811 = vmatpush1.msra.mxu0 0.0
    %2812 = vmatprep.subr.mxu0 0.0
    %2813 = vmatpush1.msra.mxu0 0.0
    %2814 = vmatprep.subr.mxu0 0.0
    %2815 = vmatpush1.msra.mxu0 0.0
    %2816 = vmatprep.subr.mxu0 0.0
    %2817 = vmatpush1.msra.mxu0 0.0
    %2818 = vmatprep.subr.mxu0 0.0
    %2819 = vmatpush1.msra.mxu0 0.0
    %2820 = vmatprep.subr.mxu0 0.0
    %2821 = vmatpush1.msra.mxu0 0.0
    %2822 = vmatprep.subr.mxu0 0.0
    %2823 = vmatpush1.msra.mxu0 0.0
    %2824 = vmatprep.subr.mxu0 0.0
    %2825 = vmatpush1.msra.mxu0 0.0
    %2826 = vmatprep.subr.mxu0 0.0
    %2827 = vmatpush1.msra.mxu0 0.0
    %2828 = vmatprep.subr.mxu0 0.0
    %2829 = vmatpush1.msra.mxu0 0.0
    %2830 = vmatprep.subr.mxu0 0.0
    %2831 = vmatpush1.msra.mxu0 0.0
    %2832 = vmatprep.subr.mxu0 0.0
    %2833 = vmatpush1.msra.mxu0 0.0
    %2834 = vmatprep.subr.mxu0 0.0
    %2835 = vmatpush1.msra.mxu0 0.0
    %2836 = vmatprep.subr.mxu0 0.0
    %2837 = vmatpush1.msra.mxu0 0.0
    %2838 = vmatprep.subr.mxu0 0.0
    %2839 = vmatpush1.msra.mxu0 0.0
    %2840 = vmatprep.subr.mxu0 0.0
    %2841 = vmatpush1.msra.mxu0 0.0
    %2842 = vmatprep.subr.mxu0 0.0
    %2843 = vmatpush1.msra.mxu0 0.0
    %2844 = vmatprep.subr.mxu0 0.0
    %2845 = vmatpush1.msra.mxu0 0.0
    %2846 = vmatprep.subr.mxu0 0.0
    %2847 = vmatpush1.msra.mxu0 0.0
    %2848 = vmatprep.subr.mxu0 0.0
    %2849 = vmatpush1.msra.mxu0 0.0
    %2850 = vmatprep.subr.mxu0 0.0
    %2851 = vmatpush1.msra.mxu0 0.0
    %2852 = vmatprep.subr.mxu0 0.0
    %2853 = vmatpush1.msra.mxu0 0.0
    %2854 = vmatprep.subr.mxu0 0.0
    %2855 = vmatpush1.msra.mxu0 0.0
    %2856 = vmatprep.subr.mxu0 0.0
    %2857 = vmatpush1.msra.mxu0 0.0
    %2858 = vmatprep.mubr.f32.mxu0 0.0
    %2859 = vmatmul.mubr.f32.gmra.mrb[0].mxu0 %v2712
    %v2860 = vpop.f32.mrb[0].mxu0
    %v2861 = vadd.f32 0.0, %v2860
    %v2862 = vpop.f32.mrb[0].mxu0
    %2863 = vdwg.mxu0
    %v2865 = vrot.slane %v2861, 6
    %v2867 = vadd.f32 %v375, %v2865
    %v2868 = vxor.u32 %v2867, 2147483648
    %v2869 = vmul.f32 %v2868, 1.442695
    %v2870 = vpow.pop %v2869
    %v2871 = vadd.f32 %v2870, 1.0
    %v2872 = vrcp.pop %v2871
    %v2873 = vmul.f32 1.0, %v2872
    %2874 = vmatprep.subr.mxu0 0.0
    %2875 = vmatpush1.msra.mxu0 %v500
    %2876 = vmatprep.subr.mxu0 0.0
    %2877 = vmatpush1.msra.mxu0 %v501
    %2878 = vmatprep.subr.mxu0 0.0
    %2879 = vmatpush1.msra.mxu0 %v502
    %2880 = vmatprep.subr.mxu0 0.0
    %2881 = vmatpush1.msra.mxu0 %v503
    %2882 = vmatprep.subr.mxu0 0.0
    %2883 = vmatpush1.msra.mxu0 0.0
    %2884 = vmatprep.subr.mxu0 0.0
    %2885 = vmatpush1.msra.mxu0 0.0
    %2886 = vmatprep.subr.mxu0 0.0
    %2887 = vmatpush1.msra.mxu0 0.0
    %2888 = vmatprep.subr.mxu0 0.0
    %2889 = vmatpush1.msra.mxu0 0.0
    %2890 = vmatprep.subr.mxu0 0.0
    %2891 = vmatpush1.msra.mxu0 0.0
    %2892 = vmatprep.subr.mxu0 0.0
    %2893 = vmatpush1.msra.mxu0 0.0
    %2894 = vmatprep.subr.mxu0 0.0
    %2895 = vmatpush1.msra.mxu0 0.0
    %2896 = vmatprep.subr.mxu0 0.0
    %2897 = vmatpush1.msra.mxu0 0.0
    %2898 = vmatprep.subr.mxu0 0.0
    %2899 = vmatpush1.msra.mxu0 0.0
    %2900 = vmatprep.subr.mxu0 0.0
    %2901 = vmatpush1.msra.mxu0 0.0
    %2902 = vmatprep.subr.mxu0 0.0
    %2903 = vmatpush1.msra.mxu0 0.0
    %2904 = vmatprep.subr.mxu0 0.0
    %2905 = vmatpush1.msra.mxu0 0.0
    %2906 = vmatprep.subr.mxu0 0.0
    %2907 = vmatpush1.msra.mxu0 0.0
    %2908 = vmatprep.subr.mxu0 0.0
    %2909 = vmatpush1.msra.mxu0 0.0
    %2910 = vmatprep.subr.mxu0 0.0
    %2911 = vmatpush1.msra.mxu0 0.0
    %2912 = vmatprep.subr.mxu0 0.0
    %2913 = vmatpush1.msra.mxu0 0.0
    %2914 = vmatprep.subr.mxu0 0.0
    %2915 = vmatpush1.msra.mxu0 0.0
    %2916 = vmatprep.subr.mxu0 0.0
    %2917 = vmatpush1.msra.mxu0 0.0
    %2918 = vmatprep.subr.mxu0 0.0
    %2919 = vmatpush1.msra.mxu0 0.0
    %2920 = vmatprep.subr.mxu0 0.0
    %2921 = vmatpush1.msra.mxu0 0.0
    %2922 = vmatprep.subr.mxu0 0.0
    %2923 = vmatpush1.msra.mxu0 0.0
    %2924 = vmatprep.subr.mxu0 0.0
    %2925 = vmatpush1.msra.mxu0 0.0
    %2926 = vmatprep.subr.mxu0 0.0
    %2927 = vmatpush1.msra.mxu0 0.0
    %2928 = vmatprep.subr.mxu0 0.0
    %2929 = vmatpush1.msra.mxu0 0.0
    %2930 = vmatprep.subr.mxu0 0.0
    %2931 = vmatpush1.msra.mxu0 0.0
    %2932 = vmatprep.subr.mxu0 0.0
    %2933 = vmatpush1.msra.mxu0 0.0
    %2934 = vmatprep.subr.mxu0 0.0
    %2935 = vmatpush1.msra.mxu0 0.0
    %2936 = vmatprep.subr.mxu0 0.0
    %2937 = vmatpush1.msra.mxu0 0.0
    %2938 = vmatprep.mubr.f32.mxu0 0.0
    %2939 = vmatmul.mubr.f32.gmra.mrb[0].mxu0 %v2712
    %v2940 = vpop.f32.mrb[0].mxu0
    %v2941 = vadd.f32 %v666, %v2940
    %v2942 = vpop.f32.mrb[0].mxu0
    %2943 = vdwg.mxu0
    %v2945 = vrot.slane %v2941, 6
    %v2947 = vmul.f32 %v2793, %v2945
    %v2948 = vadd.f32 %v482, %v2947
    %v2949 = vtanh.pop %v2948
    %v2950 = vsub.f32 1.0, %v2873
    %v2951 = vmul.f32 %v2950, %v2949
    %v2952 = vrot.slane %v2708, 6
    %v2954 = vmul.f32 %v2873, %v2952
    %v2955 = vadd.f32 %v2951, %v2954
    %s2956 = scalar_lea.vmem %s6, 18
    %2957 = vst.msk [vmem:[%s2956 - $0x2] sm:$0xc] %vm992, %v2955
    %v2959 = vrot.slane %v2955, 2
    %v2960 = vsel %vm505, %v2959, 0
    %2962 = vmatprep.subr.mxu0 0.0
    %2963 = vmatpush1.msra.mxu0 %v490
    %2964 = vmatprep.subr.mxu0 0.0
    %2965 = vmatpush1.msra.mxu0 %v491
    %2966 = vmatprep.subr.mxu0 0.0
    %2967 = vmatpush1.msra.mxu0 %v492
    %2968 = vmatprep.subr.mxu0 0.0
    %2969 = vmatpush1.msra.mxu0 %v493
    %2970 = vmatprep.subr.mxu0 0.0
    %2971 = vmatpush1.msra.mxu0 0.0
    %2972 = vmatprep.subr.mxu0 0.0
    %2973 = vmatpush1.msra.mxu0 0.0
    %2974 = vmatprep.subr.mxu0 0.0
    %2975 = vmatpush1.msra.mxu0 0.0
    %2976 = vmatprep.subr.mxu0 0.0
    %2977 = vmatpush1.msra.mxu0 0.0
    %2978 = vmatprep.subr.mxu0 0.0
    %2979 = vmatpush1.msra.mxu0 0.0
    %2980 = vmatprep.subr.mxu0 0.0
    %2981 = vmatpush1.msra.mxu0 0.0
    %2982 = vmatprep.subr.mxu0 0.0
    %2983 = vmatpush1.msra.mxu0 0.0
    %2984 = vmatprep.subr.mxu0 0.0
    %2985 = vmatpush1.msra.mxu0 0.0
    %2986 = vmatprep.subr.mxu0 0.0
    %2987 = vmatpush1.msra.mxu0 0.0
    %2988 = vmatprep.subr.mxu0 0.0
    %2989 = vmatpush1.msra.mxu0 0.0
    %2990 = vmatprep.subr.mxu0 0.0
    %2991 = vmatpush1.msra.mxu0 0.0
    %2992 = vmatprep.subr.mxu0 0.0
    %2993 = vmatpush1.msra.mxu0 0.0
    %2994 = vmatprep.subr.mxu0 0.0
    %2995 = vmatpush1.msra.mxu0 0.0
    %2996 = vmatprep.subr.mxu0 0.0
    %2997 = vmatpush1.msra.mxu0 0.0
    %2998 = vmatprep.subr.mxu0 0.0
    %2999 = vmatpush1.msra.mxu0 0.0
    %3000 = vmatprep.subr.mxu0 0.0
    %3001 = vmatpush1.msra.mxu0 0.0
    %3002 = vmatprep.subr.mxu0 0.0
    %3003 = vmatpush1.msra.mxu0 0.0
    %3004 = vmatprep.subr.mxu0 0.0
    %3005 = vmatpush1.msra.mxu0 0.0
    %3006 = vmatprep.subr.mxu0 0.0
    %3007 = vmatpush1.msra.mxu0 0.0
    %3008 = vmatprep.subr.mxu0 0.0
    %3009 = vmatpush1.msra.mxu0 0.0
    %3010 = vmatprep.subr.mxu0 0.0
    %3011 = vmatpush1.msra.mxu0 0.0
    %3012 = vmatprep.subr.mxu0 0.0
    %3013 = vmatpush1.msra.mxu0 0.0
    %3014 = vmatprep.subr.mxu0 0.0
    %3015 = vmatpush1.msra.mxu0 0.0
    %3016 = vmatprep.subr.mxu0 0.0
    %3017 = vmatpush1.msra.mxu0 0.0
    %3018 = vmatprep.subr.mxu0 0.0
    %3019 = vmatpush1.msra.mxu0 0.0
    %3020 = vmatprep.subr.mxu0 0.0
    %3021 = vmatpush1.msra.mxu0 0.0
    %3022 = vmatprep.subr.mxu0 0.0
    %3023 = vmatpush1.msra.mxu0 0.0
    %3024 = vmatprep.subr.mxu0 0.0
    %3025 = vmatpush1.msra.mxu0 0.0
    %3026 = vmatprep.mubr.f32.mxu0 0.0
    %3027 = vmatmul.mubr.f32.gmra.mrb[0].mxu0 %v2960
    %v3028 = vpop.f32.mrb[0].mxu0
    %v3029 = vadd.f32 0.0, %v3028
    %v3030 = vpop.f32.mrb[0].mxu0
    %3031 = vdwg.mxu0
    %v3033 = vrot.slane %v3029, 4
    %v3035 = vadd.f32 %v268, %v3033
    %v3036 = vxor.u32 %v3035, 2147483648
    %v3037 = vmul.f32 %v3036, 1.442695
    %v3038 = vpow.pop %v3037
    %v3039 = vadd.f32 %v3038, 1.0
    %v3040 = vrcp.pop %v3039
    %v3041 = vmul.f32 1.0, %v3040
    %3042 = vmatprep.subr.mxu0 0.0
    %3043 = vmatpush1.msra.mxu0 %v495
    %3044 = vmatprep.subr.mxu0 0.0
    %3045 = vmatpush1.msra.mxu0 %v496
    %3046 = vmatprep.subr.mxu0 0.0
    %3047 = vmatpush1.msra.mxu0 %v497
    %3048 = vmatprep.subr.mxu0 0.0
    %3049 = vmatpush1.msra.mxu0 %v498
    %3050 = vmatprep.subr.mxu0 0.0
    %3051 = vmatpush1.msra.mxu0 0.0
    %3052 = vmatprep.subr.mxu0 0.0
    %3053 = vmatpush1.msra.mxu0 0.0
    %3054 = vmatprep.subr.mxu0 0.0
    %3055 = vmatpush1.msra.mxu0 0.0
    %3056 = vmatprep.subr.mxu0 0.0
    %3057 = vmatpush1.msra.mxu0 0.0
    %3058 = vmatprep.subr.mxu0 0.0
    %3059 = vmatpush1.msra.mxu0 0.0
    %3060 = vmatprep.subr.mxu0 0.0
    %3061 = vmatpush1.msra.mxu0 0.0
    %3062 = vmatprep.subr.mxu0 0.0
    %3063 = vmatpush1.msra.mxu0 0.0
    %3064 = vmatprep.subr.mxu0 0.0
    %3065 = vmatpush1.msra.mxu0 0.0
    %3066 = vmatprep.subr.mxu0 0.0
    %3067 = vmatpush1.msra.mxu0 0.0
    %3068 = vmatprep.subr.mxu0 0.0
    %3069 = vmatpush1.msra.mxu0 0.0
    %3070 = vmatprep.subr.mxu0 0.0
    %3071 = vmatpush1.msra.mxu0 0.0
    %3072 = vmatprep.subr.mxu0 0.0
    %3073 = vmatpush1.msra.mxu0 0.0
    %3074 = vmatprep.subr.mxu0 0.0
    %3075 = vmatpush1.msra.mxu0 0.0
    %3076 = vmatprep.subr.mxu0 0.0
    %3077 = vmatpush1.msra.mxu0 0.0
    %3078 = vmatprep.subr.mxu0 0.0
    %3079 = vmatpush1.msra.mxu0 0.0
    %3080 = vmatprep.subr.mxu0 0.0
    %3081 = vmatpush1.msra.mxu0 0.0
    %3082 = vmatprep.subr.mxu0 0.0
    %3083 = vmatpush1.msra.mxu0 0.0
    %3084 = vmatprep.subr.mxu0 0.0
    %3085 = vmatpush1.msra.mxu0 0.0
    %3086 = vmatprep.subr.mxu0 0.0
    %3087 = vmatpush1.msra.mxu0 0.0
    %3088 = vmatprep.subr.mxu0 0.0
    %3089 = vmatpush1.msra.mxu0 0.0
    %3090 = vmatprep.subr.mxu0 0.0
    %3091 = vmatpush1.msra.mxu0 0.0
    %3092 = vmatprep.subr.mxu0 0.0
    %3093 = vmatpush1.msra.mxu0 0.0
    %3094 = vmatprep.subr.mxu0 0.0
    %3095 = vmatpush1.msra.mxu0 0.0
    %3096 = vmatprep.subr.mxu0 0.0
    %3097 = vmatpush1.msra.mxu0 0.0
    %3098 = vmatprep.subr.mxu0 0.0
    %3099 = vmatpush1.msra.mxu0 0.0
    %3100 = vmatprep.subr.mxu0 0.0
    %3101 = vmatpush1.msra.mxu0 0.0
    %3102 = vmatprep.subr.mxu0 0.0
    %3103 = vmatpush1.msra.mxu0 0.0
    %3104 = vmatprep.subr.mxu0 0.0
    %3105 = vmatpush1.msra.mxu0 0.0
    %3106 = vmatprep.mubr.f32.mxu0 0.0
    %3107 = vmatmul.mubr.f32.gmra.mrb[0].mxu0 %v2960
    %v3108 = vpop.f32.mrb[0].mxu0
    %v3109 = vadd.f32 0.0, %v3108
    %v3110 = vpop.f32.mrb[0].mxu0
    %3111 = vdwg.mxu0
    %v3113 = vrot.slane %v3109, 4
    %v3115 = vadd.f32 %v375, %v3113
    %v3116 = vxor.u32 %v3115, 2147483648
    %v3117 = vmul.f32 %v3116, 1.442695
    %v3118 = vpow.pop %v3117
    %v3119 = vadd.f32 %v3118, 1.0
    %v3120 = vrcp.pop %v3119
    %v3121 = vmul.f32 1.0, %v3120
    %3122 = vmatprep.subr.mxu0 0.0
    %3123 = vmatpush1.msra.mxu0 %v500
    %3124 = vmatprep.subr.mxu0 0.0
    %3125 = vmatpush1.msra.mxu0 %v501
    %3126 = vmatprep.subr.mxu0 0.0
    %3127 = vmatpush1.msra.mxu0 %v502
    %3128 = vmatprep.subr.mxu0 0.0
    %3129 = vmatpush1.msra.mxu0 %v503
    %3130 = vmatprep.subr.mxu0 0.0
    %3131 = vmatpush1.msra.mxu0 0.0
    %3132 = vmatprep.subr.mxu0 0.0
    %3133 = vmatpush1.msra.mxu0 0.0
    %3134 = vmatprep.subr.mxu0 0.0
    %3135 = vmatpush1.msra.mxu0 0.0
    %3136 = vmatprep.subr.mxu0 0.0
    %3137 = vmatpush1.msra.mxu0 0.0
    %3138 = vmatprep.subr.mxu0 0.0
    %3139 = vmatpush1.msra.mxu0 0.0
    %3140 = vmatprep.subr.mxu0 0.0
    %3141 = vmatpush1.msra.mxu0 0.0
    %3142 = vmatprep.subr.mxu0 0.0
    %3143 = vmatpush1.msra.mxu0 0.0
    %3144 = vmatprep.subr.mxu0 0.0
    %3145 = vmatpush1.msra.mxu0 0.0
    %3146 = vmatprep.subr.mxu0 0.0
    %3147 = vmatpush1.msra.mxu0 0.0
    %3148 = vmatprep.subr.mxu0 0.0
    %3149 = vmatpush1.msra.mxu0 0.0
    %3150 = vmatprep.subr.mxu0 0.0
    %3151 = vmatpush1.msra.mxu0 0.0
    %3152 = vmatprep.subr.mxu0 0.0
    %3153 = vmatpush1.msra.mxu0 0.0
    %3154 = vmatprep.subr.mxu0 0.0
    %3155 = vmatpush1.msra.mxu0 0.0
    %3156 = vmatprep.subr.mxu0 0.0
    %3157 = vmatpush1.msra.mxu0 0.0
    %3158 = vmatprep.subr.mxu0 0.0
    %3159 = vmatpush1.msra.mxu0 0.0
    %3160 = vmatprep.subr.mxu0 0.0
    %3161 = vmatpush1.msra.mxu0 0.0
    %3162 = vmatprep.subr.mxu0 0.0
    %3163 = vmatpush1.msra.mxu0 0.0
    %3164 = vmatprep.subr.mxu0 0.0
    %3165 = vmatpush1.msra.mxu0 0.0
    %3166 = vmatprep.subr.mxu0 0.0
    %3167 = vmatpush1.msra.mxu0 0.0
    %3168 = vmatprep.subr.mxu0 0.0
    %3169 = vmatpush1.msra.mxu0 0.0
    %3170 = vmatprep.subr.mxu0 0.0
    %3171 = vmatpush1.msra.mxu0 0.0
    %3172 = vmatprep.subr.mxu0 0.0
    %3173 = vmatpush1.msra.mxu0 0.0
    %3174 = vmatprep.subr.mxu0 0.0
    %3175 = vmatpush1.msra.mxu0 0.0
    %3176 = vmatprep.subr.mxu0 0.0
    %3177 = vmatpush1.msra.mxu0 0.0
    %3178 = vmatprep.subr.mxu0 0.0
    %3179 = vmatpush1.msra.mxu0 0.0
    %3180 = vmatprep.subr.mxu0 0.0
    %3181 = vmatpush1.msra.mxu0 0.0
    %3182 = vmatprep.subr.mxu0 0.0
    %3183 = vmatpush1.msra.mxu0 0.0
    %3184 = vmatprep.subr.mxu0 0.0
    %3185 = vmatpush1.msra.mxu0 0.0
    %3186 = vmatprep.mubr.f32.mxu0 0.0
    %3187 = vmatmul.mubr.f32.gmra.mrb[0].mxu0 %v2960
    %v3188 = vpop.f32.mrb[0].mxu0
    %v3189 = vadd.f32 %v666, %v3188
    %v3190 = vpop.f32.mrb[0].mxu0
    %3191 = vdwg.mxu0
    %v3193 = vrot.slane %v3189, 4
    %v3195 = vmul.f32 %v3041, %v3193
    %v3196 = vadd.f32 %v482, %v3195
    %v3197 = vtanh.pop %v3196
    %v3198 = vsub.f32 1.0, %v3121
    %v3199 = vmul.f32 %v3198, %v3197
    %v3200 = vrot.slane %v2955, 6
    %v3202 = vmul.f32 %v3121, %v3200
    %v3203 = vadd.f32 %v3199, %v3202
    %s3204 = scalar_lea.vmem %s6, 20
    %3205 = vst.msk [vmem:[%s3204 - $0x4] sm:$0x30] %vm1241, %v3203
    %v3207 = vrot.slane %v3203, 4
    %v3208 = vsel %vm505, %v3207, 0
    %3210 = vmatprep.subr.mxu0 0.0
    %3211 = vmatpush1.msra.mxu0 %v490
    %3212 = vmatprep.subr.mxu0 0.0
    %3213 = vmatpush1.msra.mxu0 %v491
    %3214 = vmatprep.subr.mxu0 0.0
    %3215 = vmatpush1.msra.mxu0 %v492
    %3216 = vmatprep.subr.mxu0 0.0
    %3217 = vmatpush1.msra.mxu0 %v493
    %3218 = vmatprep.subr.mxu0 0.0
    %3219 = vmatpush1.msra.mxu0 0.0
    %3220 = vmatprep.subr.mxu0 0.0
    %3221 = vmatpush1.msra.mxu0 0.0
    %3222 = vmatprep.subr.mxu0 0.0
    %3223 = vmatpush1.msra.mxu0 0.0
    %3224 = vmatprep.subr.mxu0 0.0
    %3225 = vmatpush1.msra.mxu0 0.0
    %3226 = vmatprep.subr.mxu0 0.0
    %3227 = vmatpush1.msra.mxu0 0.0
    %3228 = vmatprep.subr.mxu0 0.0
    %3229 = vmatpush1.msra.mxu0 0.0
    %3230 = vmatprep.subr.mxu0 0.0
    %3231 = vmatpush1.msra.mxu0 0.0
    %3232 = vmatprep.subr.mxu0 0.0
    %3233 = vmatpush1.msra.mxu0 0.0
    %3234 = vmatprep.subr.mxu0 0.0
    %3235 = vmatpush1.msra.mxu0 0.0
    %3236 = vmatprep.subr.mxu0 0.0
    %3237 = vmatpush1.msra.mxu0 0.0
    %3238 = vmatprep.subr.mxu0 0.0
    %3239 = vmatpush1.msra.mxu0 0.0
    %3240 = vmatprep.subr.mxu0 0.0
    %3241 = vmatpush1.msra.mxu0 0.0
    %3242 = vmatprep.subr.mxu0 0.0
    %3243 = vmatpush1.msra.mxu0 0.0
    %3244 = vmatprep.subr.mxu0 0.0
    %3245 = vmatpush1.msra.mxu0 0.0
    %3246 = vmatprep.subr.mxu0 0.0
    %3247 = vmatpush1.msra.mxu0 0.0
    %3248 = vmatprep.subr.mxu0 0.0
    %3249 = vmatpush1.msra.mxu0 0.0
    %3250 = vmatprep.subr.mxu0 0.0
    %3251 = vmatpush1.msra.mxu0 0.0
    %3252 = vmatprep.subr.mxu0 0.0
    %3253 = vmatpush1.msra.mxu0 0.0
    %3254 = vmatprep.subr.mxu0 0.0
    %3255 = vmatpush1.msra.mxu0 0.0
    %3256 = vmatprep.subr.mxu0 0.0
    %3257 = vmatpush1.msra.mxu0 0.0
    %3258 = vmatprep.subr.mxu0 0.0
    %3259 = vmatpush1.msra.mxu0 0.0
    %3260 = vmatprep.subr.mxu0 0.0
    %3261 = vmatpush1.msra.mxu0 0.0
    %3262 = vmatprep.subr.mxu0 0.0
    %3263 = vmatpush1.msra.mxu0 0.0
    %3264 = vmatprep.subr.mxu0 0.0
    %3265 = vmatpush1.msra.mxu0 0.0
    %3266 = vmatprep.subr.mxu0 0.0
    %3267 = vmatpush1.msra.mxu0 0.0
    %3268 = vmatprep.subr.mxu0 0.0
    %3269 = vmatpush1.msra.mxu0 0.0
    %3270 = vmatprep.subr.mxu0 0.0
    %3271 = vmatpush1.msra.mxu0 0.0
    %3272 = vmatprep.subr.mxu0 0.0
    %3273 = vmatpush1.msra.mxu0 0.0
    %3274 = vmatprep.mubr.f32.mxu0 0.0
    %3275 = vmatmul.mubr.f32.gmra.mrb[0].mxu0 %v3208
    %v3276 = vpop.f32.mrb[0].mxu0
    %v3277 = vadd.f32 0.0, %v3276
    %v3278 = vpop.f32.mrb[0].mxu0
    %3279 = vdwg.mxu0
    %v3281 = vrot.slane %v3277, 2
    %v3283 = vadd.f32 %v268, %v3281
    %v3284 = vxor.u32 %v3283, 2147483648
    %v3285 = vmul.f32 %v3284, 1.442695
    %v3286 = vpow.pop %v3285
    %v3287 = vadd.f32 %v3286, 1.0
    %v3288 = vrcp.pop %v3287
    %v3289 = vmul.f32 1.0, %v3288
    %3290 = vmatprep.subr.mxu0 0.0
    %3291 = vmatpush1.msra.mxu0 %v495
    %3292 = vmatprep.subr.mxu0 0.0
    %3293 = vmatpush1.msra.mxu0 %v496
    %3294 = vmatprep.subr.mxu0 0.0
    %3295 = vmatpush1.msra.mxu0 %v497
    %3296 = vmatprep.subr.mxu0 0.0
    %3297 = vmatpush1.msra.mxu0 %v498
    %3298 = vmatprep.subr.mxu0 0.0
    %3299 = vmatpush1.msra.mxu0 0.0
    %3300 = vmatprep.subr.mxu0 0.0
    %3301 = vmatpush1.msra.mxu0 0.0
    %3302 = vmatprep.subr.mxu0 0.0
    %3303 = vmatpush1.msra.mxu0 0.0
    %3304 = vmatprep.subr.mxu0 0.0
    %3305 = vmatpush1.msra.mxu0 0.0
    %3306 = vmatprep.subr.mxu0 0.0
    %3307 = vmatpush1.msra.mxu0 0.0
    %3308 = vmatprep.subr.mxu0 0.0
    %3309 = vmatpush1.msra.mxu0 0.0
    %3310 = vmatprep.subr.mxu0 0.0
    %3311 = vmatpush1.msra.mxu0 0.0
    %3312 = vmatprep.subr.mxu0 0.0
    %3313 = vmatpush1.msra.mxu0 0.0
    %3314 = vmatprep.subr.mxu0 0.0
    %3315 = vmatpush1.msra.mxu0 0.0
    %3316 = vmatprep.subr.mxu0 0.0
    %3317 = vmatpush1.msra.mxu0 0.0
    %3318 = vmatprep.subr.mxu0 0.0
    %3319 = vmatpush1.msra.mxu0 0.0
    %3320 = vmatprep.subr.mxu0 0.0
    %3321 = vmatpush1.msra.mxu0 0.0
    %3322 = vmatprep.subr.mxu0 0.0
    %3323 = vmatpush1.msra.mxu0 0.0
    %3324 = vmatprep.subr.mxu0 0.0
    %3325 = vmatpush1.msra.mxu0 0.0
    %3326 = vmatprep.subr.mxu0 0.0
    %3327 = vmatpush1.msra.mxu0 0.0
    %3328 = vmatprep.subr.mxu0 0.0
    %3329 = vmatpush1.msra.mxu0 0.0
    %3330 = vmatprep.subr.mxu0 0.0
    %3331 = vmatpush1.msra.mxu0 0.0
    %3332 = vmatprep.subr.mxu0 0.0
    %3333 = vmatpush1.msra.mxu0 0.0
    %3334 = vmatprep.subr.mxu0 0.0
    %3335 = vmatpush1.msra.mxu0 0.0
    %3336 = vmatprep.subr.mxu0 0.0
    %3337 = vmatpush1.msra.mxu0 0.0
    %3338 = vmatprep.subr.mxu0 0.0
    %3339 = vmatpush1.msra.mxu0 0.0
    %3340 = vmatprep.subr.mxu0 0.0
    %3341 = vmatpush1.msra.mxu0 0.0
    %3342 = vmatprep.subr.mxu0 0.0
    %3343 = vmatpush1.msra.mxu0 0.0
    %3344 = vmatprep.subr.mxu0 0.0
    %3345 = vmatpush1.msra.mxu0 0.0
    %3346 = vmatprep.subr.mxu0 0.0
    %3347 = vmatpush1.msra.mxu0 0.0
    %3348 = vmatprep.subr.mxu0 0.0
    %3349 = vmatpush1.msra.mxu0 0.0
    %3350 = vmatprep.subr.mxu0 0.0
    %3351 = vmatpush1.msra.mxu0 0.0
    %3352 = vmatprep.subr.mxu0 0.0
    %3353 = vmatpush1.msra.mxu0 0.0
    %3354 = vmatprep.mubr.f32.mxu0 0.0
    %3355 = vmatmul.mubr.f32.gmra.mrb[0].mxu0 %v3208
    %v3356 = vpop.f32.mrb[0].mxu0
    %v3357 = vadd.f32 0.0, %v3356
    %v3358 = vpop.f32.mrb[0].mxu0
    %3359 = vdwg.mxu0
    %v3361 = vrot.slane %v3357, 2
    %v3363 = vadd.f32 %v375, %v3361
    %v3364 = vxor.u32 %v3363, 2147483648
    %v3365 = vmul.f32 %v3364, 1.442695
    %v3366 = vpow.pop %v3365
    %v3367 = vadd.f32 %v3366, 1.0
    %v3368 = vrcp.pop %v3367
    %v3369 = vmul.f32 1.0, %v3368
    %3370 = vmatprep.subr.mxu0 0.0
    %3371 = vmatpush1.msra.mxu0 %v500
    %3372 = vmatprep.subr.mxu0 0.0
    %3373 = vmatpush1.msra.mxu0 %v501
    %3374 = vmatprep.subr.mxu0 0.0
    %3375 = vmatpush1.msra.mxu0 %v502
    %3376 = vmatprep.subr.mxu0 0.0
    %3377 = vmatpush1.msra.mxu0 %v503
    %3378 = vmatprep.subr.mxu0 0.0
    %3379 = vmatpush1.msra.mxu0 0.0
    %3380 = vmatprep.subr.mxu0 0.0
    %3381 = vmatpush1.msra.mxu0 0.0
    %3382 = vmatprep.subr.mxu0 0.0
    %3383 = vmatpush1.msra.mxu0 0.0
    %3384 = vmatprep.subr.mxu0 0.0
    %3385 = vmatpush1.msra.mxu0 0.0
    %3386 = vmatprep.subr.mxu0 0.0
    %3387 = vmatpush1.msra.mxu0 0.0
    %3388 = vmatprep.subr.mxu0 0.0
    %3389 = vmatpush1.msra.mxu0 0.0
    %3390 = vmatprep.subr.mxu0 0.0
    %3391 = vmatpush1.msra.mxu0 0.0
    %3392 = vmatprep.subr.mxu0 0.0
    %3393 = vmatpush1.msra.mxu0 0.0
    %3394 = vmatprep.subr.mxu0 0.0
    %3395 = vmatpush1.msra.mxu0 0.0
    %3396 = vmatprep.subr.mxu0 0.0
    %3397 = vmatpush1.msra.mxu0 0.0
    %3398 = vmatprep.subr.mxu0 0.0
    %3399 = vmatpush1.msra.mxu0 0.0
    %3400 = vmatprep.subr.mxu0 0.0
    %3401 = vmatpush1.msra.mxu0 0.0
    %3402 = vmatprep.subr.mxu0 0.0
    %3403 = vmatpush1.msra.mxu0 0.0
    %3404 = vmatprep.subr.mxu0 0.0
    %3405 = vmatpush1.msra.mxu0 0.0
    %3406 = vmatprep.subr.mxu0 0.0
    %3407 = vmatpush1.msra.mxu0 0.0
    %3408 = vmatprep.subr.mxu0 0.0
    %3409 = vmatpush1.msra.mxu0 0.0
    %3410 = vmatprep.subr.mxu0 0.0
    %3411 = vmatpush1.msra.mxu0 0.0
    %3412 = vmatprep.subr.mxu0 0.0
    %3413 = vmatpush1.msra.mxu0 0.0
    %3414 = vmatprep.subr.mxu0 0.0
    %3415 = vmatpush1.msra.mxu0 0.0
    %3416 = vmatprep.subr.mxu0 0.0
    %3417 = vmatpush1.msra.mxu0 0.0
    %3418 = vmatprep.subr.mxu0 0.0
    %3419 = vmatpush1.msra.mxu0 0.0
    %3420 = vmatprep.subr.mxu0 0.0
    %3421 = vmatpush1.msra.mxu0 0.0
    %3422 = vmatprep.subr.mxu0 0.0
    %3423 = vmatpush1.msra.mxu0 0.0
    %3424 = vmatprep.subr.mxu0 0.0
    %3425 = vmatpush1.msra.mxu0 0.0
    %3426 = vmatprep.subr.mxu0 0.0
    %3427 = vmatpush1.msra.mxu0 0.0
    %3428 = vmatprep.subr.mxu0 0.0
    %3429 = vmatpush1.msra.mxu0 0.0
    %3430 = vmatprep.subr.mxu0 0.0
    %3431 = vmatpush1.msra.mxu0 0.0
    %3432 = vmatprep.subr.mxu0 0.0
    %3433 = vmatpush1.msra.mxu0 0.0
    %3434 = vmatprep.mubr.f32.mxu0 0.0
    %3435 = vmatmul.mubr.f32.gmra.mrb[0].mxu0 %v3208
    %v3436 = vpop.f32.mrb[0].mxu0
    %v3437 = vadd.f32 %v666, %v3436
    %v3438 = vpop.f32.mrb[0].mxu0
    %3439 = vdwg.mxu0
    %v3441 = vrot.slane %v3437, 2
    %v3443 = vmul.f32 %v3289, %v3441
    %v3444 = vadd.f32 %v482, %v3443
    %v3445 = vtanh.pop %v3444
    %v3446 = vsub.f32 1.0, %v3369
    %v3447 = vmul.f32 %v3446, %v3445
    %v3448 = vrot.slane %v3203, 6
    %v3450 = vmul.f32 %v3369, %v3448
    %v3451 = vadd.f32 %v3447, %v3450
    %s3452 = scalar_lea.vmem %s6, 22
    %3453 = vst.msk [vmem:[%s3452 - $0x6] sm:$0xc0] %vm1490, %v3451
    %v3455 = vrot.slane %v3451, 6
    %v3456 = vsel %vm505, %v3455, 0
    %3458 = vmatprep.subr.mxu0 0.0
    %3459 = vmatpush1.msra.mxu0 %v490
    %3460 = vmatprep.subr.mxu0 0.0
    %3461 = vmatpush1.msra.mxu0 %v491
    %3462 = vmatprep.subr.mxu0 0.0
    %3463 = vmatpush1.msra.mxu0 %v492
    %3464 = vmatprep.subr.mxu0 0.0
    %3465 = vmatpush1.msra.mxu0 %v493
    %3466 = vmatprep.subr.mxu0 0.0
    %3467 = vmatpush1.msra.mxu0 0.0
    %3468 = vmatprep.subr.mxu0 0.0
    %3469 = vmatpush1.msra.mxu0 0.0
    %3470 = vmatprep.subr.mxu0 0.0
    %3471 = vmatpush1.msra.mxu0 0.0
    %3472 = vmatprep.subr.mxu0 0.0
    %3473 = vmatpush1.msra.mxu0 0.0
    %3474 = vmatprep.subr.mxu0 0.0
    %3475 = vmatpush1.msra.mxu0 0.0
    %3476 = vmatprep.subr.mxu0 0.0
    %3477 = vmatpush1.msra.mxu0 0.0
    %3478 = vmatprep.subr.mxu0 0.0
    %3479 = vmatpush1.msra.mxu0 0.0
    %3480 = vmatprep.subr.mxu0 0.0
    %3481 = vmatpush1.msra.mxu0 0.0
    %3482 = vmatprep.subr.mxu0 0.0
    %3483 = vmatpush1.msra.mxu0 0.0
    %3484 = vmatprep.subr.mxu0 0.0
    %3485 = vmatpush1.msra.mxu0 0.0
    %3486 = vmatprep.subr.mxu0 0.0
    %3487 = vmatpush1.msra.mxu0 0.0
    %3488 = vmatprep.subr.mxu0 0.0
    %3489 = vmatpush1.msra.mxu0 0.0
    %3490 = vmatprep.subr.mxu0 0.0
    %3491 = vmatpush1.msra.mxu0 0.0
    %3492 = vmatprep.subr.mxu0 0.0
    %3493 = vmatpush1.msra.mxu0 0.0
    %3494 = vmatprep.subr.mxu0 0.0
    %3495 = vmatpush1.msra.mxu0 0.0
    %3496 = vmatprep.subr.mxu0 0.0
    %3497 = vmatpush1.msra.mxu0 0.0
    %3498 = vmatprep.subr.mxu0 0.0
    %3499 = vmatpush1.msra.mxu0 0.0
    %3500 = vmatprep.subr.mxu0 0.0
    %3501 = vmatpush1.msra.mxu0 0.0
    %3502 = vmatprep.subr.mxu0 0.0
    %3503 = vmatpush1.msra.mxu0 0.0
    %3504 = vmatprep.subr.mxu0 0.0
    %3505 = vmatpush1.msra.mxu0 0.0
    %3506 = vmatprep.subr.mxu0 0.0
    %3507 = vmatpush1.msra.mxu0 0.0
    %3508 = vmatprep.subr.mxu0 0.0
    %3509 = vmatpush1.msra.mxu0 0.0
    %3510 = vmatprep.subr.mxu0 0.0
    %3511 = vmatpush1.msra.mxu0 0.0
    %3512 = vmatprep.subr.mxu0 0.0
    %3513 = vmatpush1.msra.mxu0 0.0
    %3514 = vmatprep.subr.mxu0 0.0
    %3515 = vmatpush1.msra.mxu0 0.0
    %3516 = vmatprep.subr.mxu0 0.0
    %3517 = vmatpush1.msra.mxu0 0.0
    %3518 = vmatprep.subr.mxu0 0.0
    %3519 = vmatpush1.msra.mxu0 0.0
    %3520 = vmatprep.subr.mxu0 0.0
    %3521 = vmatpush1.msra.mxu0 0.0
    %3522 = vmatprep.mubr.f32.mxu0 0.0
    %3523 = vmatmul.mubr.f32.gmra.mrb[0].mxu0 %v3456
    %v3524 = vpop.f32.mrb[0].mxu0
    %v3525 = vadd.f32 0.0, %v3524
    %v3526 = vpop.f32.mrb[0].mxu0
    %3527 = vdwg.mxu0
    %v3528 = vadd.f32 %v273, %v3525
    %v3529 = vxor.u32 %v3528, 2147483648
    %v3530 = vmul.f32 %v3529, 1.442695
    %v3531 = vpow.pop %v3530
    %v3532 = vadd.f32 %v3531, 1.0
    %v3533 = vrcp.pop %v3532
    %v3534 = vmul.f32 1.0, %v3533
    %3535 = vmatprep.subr.mxu0 0.0
    %3536 = vmatpush1.msra.mxu0 %v495
    %3537 = vmatprep.subr.mxu0 0.0
    %3538 = vmatpush1.msra.mxu0 %v496
    %3539 = vmatprep.subr.mxu0 0.0
    %3540 = vmatpush1.msra.mxu0 %v497
    %3541 = vmatprep.subr.mxu0 0.0
    %3542 = vmatpush1.msra.mxu0 %v498
    %3543 = vmatprep.subr.mxu0 0.0
    %3544 = vmatpush1.msra.mxu0 0.0
    %3545 = vmatprep.subr.mxu0 0.0
    %3546 = vmatpush1.msra.mxu0 0.0
    %3547 = vmatprep.subr.mxu0 0.0
    %3548 = vmatpush1.msra.mxu0 0.0
    %3549 = vmatprep.subr.mxu0 0.0
    %3550 = vmatpush1.msra.mxu0 0.0
    %3551 = vmatprep.subr.mxu0 0.0
    %3552 = vmatpush1.msra.mxu0 0.0
    %3553 = vmatprep.subr.mxu0 0.0
    %3554 = vmatpush1.msra.mxu0 0.0
    %3555 = vmatprep.subr.mxu0 0.0
    %3556 = vmatpush1.msra.mxu0 0.0
    %3557 = vmatprep.subr.mxu0 0.0
    %3558 = vmatpush1.msra.mxu0 0.0
    %3559 = vmatprep.subr.mxu0 0.0
    %3560 = vmatpush1.msra.mxu0 0.0
    %3561 = vmatprep.subr.mxu0 0.0
    %3562 = vmatpush1.msra.mxu0 0.0
    %3563 = vmatprep.subr.mxu0 0.0
    %3564 = vmatpush1.msra.mxu0 0.0
    %3565 = vmatprep.subr.mxu0 0.0
    %3566 = vmatpush1.msra.mxu0 0.0
    %3567 = vmatprep.subr.mxu0 0.0
    %3568 = vmatpush1.msra.mxu0 0.0
    %3569 = vmatprep.subr.mxu0 0.0
    %3570 = vmatpush1.msra.mxu0 0.0
    %3571 = vmatprep.subr.mxu0 0.0
    %3572 = vmatpush1.msra.mxu0 0.0
    %3573 = vmatprep.subr.mxu0 0.0
    %3574 = vmatpush1.msra.mxu0 0.0
    %3575 = vmatprep.subr.mxu0 0.0
    %3576 = vmatpush1.msra.mxu0 0.0
    %3577 = vmatprep.subr.mxu0 0.0
    %3578 = vmatpush1.msra.mxu0 0.0
    %3579 = vmatprep.subr.mxu0 0.0
    %3580 = vmatpush1.msra.mxu0 0.0
    %3581 = vmatprep.subr.mxu0 0.0
    %3582 = vmatpush1.msra.mxu0 0.0
    %3583 = vmatprep.subr.mxu0 0.0
    %3584 = vmatpush1.msra.mxu0 0.0
    %3585 = vmatprep.subr.mxu0 0.0
    %3586 = vmatpush1.msra.mxu0 0.0
    %3587 = vmatprep.subr.mxu0 0.0
    %3588 = vmatpush1.msra.mxu0 0.0
    %3589 = vmatprep.subr.mxu0 0.0
    %3590 = vmatpush1.msra.mxu0 0.0
    %3591 = vmatprep.subr.mxu0 0.0
    %3592 = vmatpush1.msra.mxu0 0.0
    %3593 = vmatprep.subr.mxu0 0.0
    %3594 = vmatpush1.msra.mxu0 0.0
    %3595 = vmatprep.subr.mxu0 0.0
    %3596 = vmatpush1.msra.mxu0 0.0
    %3597 = vmatprep.subr.mxu0 0.0
    %3598 = vmatpush1.msra.mxu0 0.0
    %3599 = vmatprep.mubr.f32.mxu0 0.0
    %3600 = vmatmul.mubr.f32.gmra.mrb[0].mxu0 %v3456
    %v3601 = vpop.f32.mrb[0].mxu0
    %v3602 = vadd.f32 0.0, %v3601
    %v3603 = vpop.f32.mrb[0].mxu0
    %3604 = vdwg.mxu0
    %v3605 = vadd.f32 %v380, %v3602
    %v3606 = vxor.u32 %v3605, 2147483648
    %v3607 = vmul.f32 %v3606, 1.442695
    %v3608 = vpow.pop %v3607
    %v3609 = vadd.f32 %v3608, 1.0
    %v3610 = vrcp.pop %v3609
    %v3611 = vmul.f32 1.0, %v3610
    %3612 = vmatprep.subr.mxu0 0.0
    %3613 = vmatpush1.msra.mxu0 %v500
    %3614 = vmatprep.subr.mxu0 0.0
    %3615 = vmatpush1.msra.mxu0 %v501
    %3616 = vmatprep.subr.mxu0 0.0
    %3617 = vmatpush1.msra.mxu0 %v502
    %3618 = vmatprep.subr.mxu0 0.0
    %3619 = vmatpush1.msra.mxu0 %v503
    %3620 = vmatprep.subr.mxu0 0.0
    %3621 = vmatpush1.msra.mxu0 0.0
    %3622 = vmatprep.subr.mxu0 0.0
    %3623 = vmatpush1.msra.mxu0 0.0
    %3624 = vmatprep.subr.mxu0 0.0
    %3625 = vmatpush1.msra.mxu0 0.0
    %3626 = vmatprep.subr.mxu0 0.0
    %3627 = vmatpush1.msra.mxu0 0.0
    %3628 = vmatprep.subr.mxu0 0.0
    %3629 = vmatpush1.msra.mxu0 0.0
    %3630 = vmatprep.subr.mxu0 0.0
    %3631 = vmatpush1.msra.mxu0 0.0
    %3632 = vmatprep.subr.mxu0 0.0
    %3633 = vmatpush1.msra.mxu0 0.0
    %3634 = vmatprep.subr.mxu0 0.0
    %3635 = vmatpush1.msra.mxu0 0.0
    %3636 = vmatprep.subr.mxu0 0.0
    %3637 = vmatpush1.msra.mxu0 0.0
    %3638 = vmatprep.subr.mxu0 0.0
    %3639 = vmatpush1.msra.mxu0 0.0
    %3640 = vmatprep.subr.mxu0 0.0
    %3641 = vmatpush1.msra.mxu0 0.0
    %3642 = vmatprep.subr.mxu0 0.0
    %3643 = vmatpush1.msra.mxu0 0.0
    %3644 = vmatprep.subr.mxu0 0.0
    %3645 = vmatpush1.msra.mxu0 0.0
    %3646 = vmatprep.subr.mxu0 0.0
    %3647 = vmatpush1.msra.mxu0 0.0
    %3648 = vmatprep.subr.mxu0 0.0
    %3649 = vmatpush1.msra.mxu0 0.0
    %3650 = vmatprep.subr.mxu0 0.0
    %3651 = vmatpush1.msra.mxu0 0.0
    %3652 = vmatprep.subr.mxu0 0.0
    %3653 = vmatpush1.msra.mxu0 0.0
    %3654 = vmatprep.subr.mxu0 0.0
    %3655 = vmatpush1.msra.mxu0 0.0
    %3656 = vmatprep.subr.mxu0 0.0
    %3657 = vmatpush1.msra.mxu0 0.0
    %3658 = vmatprep.subr.mxu0 0.0
    %3659 = vmatpush1.msra.mxu0 0.0
    %3660 = vmatprep.subr.mxu0 0.0
    %3661 = vmatpush1.msra.mxu0 0.0
    %3662 = vmatprep.subr.mxu0 0.0
    %3663 = vmatpush1.msra.mxu0 0.0
    %3664 = vmatprep.subr.mxu0 0.0
    %3665 = vmatpush1.msra.mxu0 0.0
    %3666 = vmatprep.subr.mxu0 0.0
    %3667 = vmatpush1.msra.mxu0 0.0
    %3668 = vmatprep.subr.mxu0 0.0
    %3669 = vmatpush1.msra.mxu0 0.0
    %3670 = vmatprep.subr.mxu0 0.0
    %3671 = vmatpush1.msra.mxu0 0.0
    %3672 = vmatprep.subr.mxu0 0.0
    %3673 = vmatpush1.msra.mxu0 0.0
    %3674 = vmatprep.subr.mxu0 0.0
    %3675 = vmatpush1.msra.mxu0 0.0
    %3676 = vmatprep.mubr.f32.mxu0 0.0
    %3677 = vmatmul.mubr.f32.gmra.mrb[0].mxu0 %v3456
    %v3678 = vpop.f32.mrb[0].mxu0
    %v3679 = vadd.f32 %v666, %v3678
    %v3680 = vpop.f32.mrb[0].mxu0
    %3681 = vdwg.mxu0
    %v3682 = vmul.f32 %v3534, %v3679
    %v3683 = vadd.f32 %v487, %v3682
    %v3684 = vtanh.pop %v3683
    %v3685 = vsub.f32 1.0, %v3611
    %v3686 = vmul.f32 %v3685, %v3684
    %v3688 = vmul.f32 %v3611, %v3455
    %v3689 = vadd.f32 %v3686, %v3688
    %s3690 = scalar_lea.vmem %s6, 24
    %3691 = vst.msk [vmem:[%s3690] sm:$0x3] %vm744, %v3689
    %v3693 = vsel %vm505, %v3689, 0
    %3695 = vmatprep.subr.mxu0 0.0
    %3696 = vmatpush1.msra.mxu0 %v490
    %3697 = vmatprep.subr.mxu0 0.0
    %3698 = vmatpush1.msra.mxu0 %v491
    %3699 = vmatprep.subr.mxu0 0.0
    %3700 = vmatpush1.msra.mxu0 %v492
    %3701 = vmatprep.subr.mxu0 0.0
    %3702 = vmatpush1.msra.mxu0 %v493
    %3703 = vmatprep.subr.mxu0 0.0
    %3704 = vmatpush1.msra.mxu0 0.0
    %3705 = vmatprep.subr.mxu0 0.0
    %3706 = vmatpush1.msra.mxu0 0.0
    %3707 = vmatprep.subr.mxu0 0.0
    %3708 = vmatpush1.msra.mxu0 0.0
    %3709 = vmatprep.subr.mxu0 0.0
    %3710 = vmatpush1.msra.mxu0 0.0
    %3711 = vmatprep.subr.mxu0 0.0
    %3712 = vmatpush1.msra.mxu0 0.0
    %3713 = vmatprep.subr.mxu0 0.0
    %3714 = vmatpush1.msra.mxu0 0.0
    %3715 = vmatprep.subr.mxu0 0.0
    %3716 = vmatpush1.msra.mxu0 0.0
    %3717 = vmatprep.subr.mxu0 0.0
    %3718 = vmatpush1.msra.mxu0 0.0
    %3719 = vmatprep.subr.mxu0 0.0
    %3720 = vmatpush1.msra.mxu0 0.0
    %3721 = vmatprep.subr.mxu0 0.0
    %3722 = vmatpush1.msra.mxu0 0.0
    %3723 = vmatprep.subr.mxu0 0.0
    %3724 = vmatpush1.msra.mxu0 0.0
    %3725 = vmatprep.subr.mxu0 0.0
    %3726 = vmatpush1.msra.mxu0 0.0
    %3727 = vmatprep.subr.mxu0 0.0
    %3728 = vmatpush1.msra.mxu0 0.0
    %3729 = vmatprep.subr.mxu0 0.0
    %3730 = vmatpush1.msra.mxu0 0.0
    %3731 = vmatprep.subr.mxu0 0.0
    %3732 = vmatpush1.msra.mxu0 0.0
    %3733 = vmatprep.subr.mxu0 0.0
    %3734 = vmatpush1.msra.mxu0 0.0
    %3735 = vmatprep.subr.mxu0 0.0
    %3736 = vmatpush1.msra.mxu0 0.0
    %3737 = vmatprep.subr.mxu0 0.0
    %3738 = vmatpush1.msra.mxu0 0.0
    %3739 = vmatprep.subr.mxu0 0.0
    %3740 = vmatpush1.msra.mxu0 0.0
    %3741 = vmatprep.subr.mxu0 0.0
    %3742 = vmatpush1.msra.mxu0 0.0
    %3743 = vmatprep.subr.mxu0 0.0
    %3744 = vmatpush1.msra.mxu0 0.0
    %3745 = vmatprep.subr.mxu0 0.0
    %3746 = vmatpush1.msra.mxu0 0.0
    %3747 = vmatprep.subr.mxu0 0.0
    %3748 = vmatpush1.msra.mxu0 0.0
    %3749 = vmatprep.subr.mxu0 0.0
    %3750 = vmatpush1.msra.mxu0 0.0
    %3751 = vmatprep.subr.mxu0 0.0
    %3752 = vmatpush1.msra.mxu0 0.0
    %3753 = vmatprep.subr.mxu0 0.0
    %3754 = vmatpush1.msra.mxu0 0.0
    %3755 = vmatprep.subr.mxu0 0.0
    %3756 = vmatpush1.msra.mxu0 0.0
    %3757 = vmatprep.subr.mxu0 0.0
    %3758 = vmatpush1.msra.mxu0 0.0
    %3759 = vmatprep.mubr.f32.mxu0 0.0
    %3760 = vmatmul.mubr.f32.gmra.mrb[0].mxu0 %v3693
    %v3761 = vpop.f32.mrb[0].mxu0
    %v3762 = vadd.f32 0.0, %v3761
    %v3763 = vpop.f32.mrb[0].mxu0
    %3764 = vdwg.mxu0
    %v3766 = vrot.slane %v3762, 6
    %v3768 = vadd.f32 %v273, %v3766
    %v3769 = vxor.u32 %v3768, 2147483648
    %v3770 = vmul.f32 %v3769, 1.442695
    %v3771 = vpow.pop %v3770
    %v3772 = vadd.f32 %v3771, 1.0
    %v3773 = vrcp.pop %v3772
    %v3774 = vmul.f32 1.0, %v3773
    %3775 = vmatprep.subr.mxu0 0.0
    %3776 = vmatpush1.msra.mxu0 %v495
    %3777 = vmatprep.subr.mxu0 0.0
    %3778 = vmatpush1.msra.mxu0 %v496
    %3779 = vmatprep.subr.mxu0 0.0
    %3780 = vmatpush1.msra.mxu0 %v497
    %3781 = vmatprep.subr.mxu0 0.0
    %3782 = vmatpush1.msra.mxu0 %v498
    %3783 = vmatprep.subr.mxu0 0.0
    %3784 = vmatpush1.msra.mxu0 0.0
    %3785 = vmatprep.subr.mxu0 0.0
    %3786 = vmatpush1.msra.mxu0 0.0
    %3787 = vmatprep.subr.mxu0 0.0
    %3788 = vmatpush1.msra.mxu0 0.0
    %3789 = vmatprep.subr.mxu0 0.0
    %3790 = vmatpush1.msra.mxu0 0.0
    %3791 = vmatprep.subr.mxu0 0.0
    %3792 = vmatpush1.msra.mxu0 0.0
    %3793 = vmatprep.subr.mxu0 0.0
    %3794 = vmatpush1.msra.mxu0 0.0
    %3795 = vmatprep.subr.mxu0 0.0
    %3796 = vmatpush1.msra.mxu0 0.0
    %3797 = vmatprep.subr.mxu0 0.0
    %3798 = vmatpush1.msra.mxu0 0.0
    %3799 = vmatprep.subr.mxu0 0.0
    %3800 = vmatpush1.msra.mxu0 0.0
    %3801 = vmatprep.subr.mxu0 0.0
    %3802 = vmatpush1.msra.mxu0 0.0
    %3803 = vmatprep.subr.mxu0 0.0
    %3804 = vmatpush1.msra.mxu0 0.0
    %3805 = vmatprep.subr.mxu0 0.0
    %3806 = vmatpush1.msra.mxu0 0.0
    %3807 = vmatprep.subr.mxu0 0.0
    %3808 = vmatpush1.msra.mxu0 0.0
    %3809 = vmatprep.subr.mxu0 0.0
    %3810 = vmatpush1.msra.mxu0 0.0
    %3811 = vmatprep.subr.mxu0 0.0
    %3812 = vmatpush1.msra.mxu0 0.0
    %3813 = vmatprep.subr.mxu0 0.0
    %3814 = vmatpush1.msra.mxu0 0.0
    %3815 = vmatprep.subr.mxu0 0.0
    %3816 = vmatpush1.msra.mxu0 0.0
    %3817 = vmatprep.subr.mxu0 0.0
    %3818 = vmatpush1.msra.mxu0 0.0
    %3819 = vmatprep.subr.mxu0 0.0
    %3820 = vmatpush1.msra.mxu0 0.0
    %3821 = vmatprep.subr.mxu0 0.0
    %3822 = vmatpush1.msra.mxu0 0.0
    %3823 = vmatprep.subr.mxu0 0.0
    %3824 = vmatpush1.msra.mxu0 0.0
    %3825 = vmatprep.subr.mxu0 0.0
    %3826 = vmatpush1.msra.mxu0 0.0
    %3827 = vmatprep.subr.mxu0 0.0
    %3828 = vmatpush1.msra.mxu0 0.0
    %3829 = vmatprep.subr.mxu0 0.0
    %3830 = vmatpush1.msra.mxu0 0.0
    %3831 = vmatprep.subr.mxu0 0.0
    %3832 = vmatpush1.msra.mxu0 0.0
    %3833 = vmatprep.subr.mxu0 0.0
    %3834 = vmatpush1.msra.mxu0 0.0
    %3835 = vmatprep.subr.mxu0 0.0
    %3836 = vmatpush1.msra.mxu0 0.0
    %3837 = vmatprep.subr.mxu0 0.0
    %3838 = vmatpush1.msra.mxu0 0.0
    %3839 = vmatprep.mubr.f32.mxu0 0.0
    %3840 = vmatmul.mubr.f32.gmra.mrb[0].mxu0 %v3693
    %v3841 = vpop.f32.mrb[0].mxu0
    %v3842 = vadd.f32 0.0, %v3841
    %v3843 = vpop.f32.mrb[0].mxu0
    %3844 = vdwg.mxu0
    %v3846 = vrot.slane %v3842, 6
    %v3848 = vadd.f32 %v380, %v3846
    %v3849 = vxor.u32 %v3848, 2147483648
    %v3850 = vmul.f32 %v3849, 1.442695
    %v3851 = vpow.pop %v3850
    %v3852 = vadd.f32 %v3851, 1.0
    %v3853 = vrcp.pop %v3852
    %v3854 = vmul.f32 1.0, %v3853
    %3855 = vmatprep.subr.mxu0 0.0
    %3856 = vmatpush1.msra.mxu0 %v500
    %3857 = vmatprep.subr.mxu0 0.0
    %3858 = vmatpush1.msra.mxu0 %v501
    %3859 = vmatprep.subr.mxu0 0.0
    %3860 = vmatpush1.msra.mxu0 %v502
    %3861 = vmatprep.subr.mxu0 0.0
    %3862 = vmatpush1.msra.mxu0 %v503
    %3863 = vmatprep.subr.mxu0 0.0
    %3864 = vmatpush1.msra.mxu0 0.0
    %3865 = vmatprep.subr.mxu0 0.0
    %3866 = vmatpush1.msra.mxu0 0.0
    %3867 = vmatprep.subr.mxu0 0.0
    %3868 = vmatpush1.msra.mxu0 0.0
    %3869 = vmatprep.subr.mxu0 0.0
    %3870 = vmatpush1.msra.mxu0 0.0
    %3871 = vmatprep.subr.mxu0 0.0
    %3872 = vmatpush1.msra.mxu0 0.0
    %3873 = vmatprep.subr.mxu0 0.0
    %3874 = vmatpush1.msra.mxu0 0.0
    %3875 = vmatprep.subr.mxu0 0.0
    %3876 = vmatpush1.msra.mxu0 0.0
    %3877 = vmatprep.subr.mxu0 0.0
    %3878 = vmatpush1.msra.mxu0 0.0
    %3879 = vmatprep.subr.mxu0 0.0
    %3880 = vmatpush1.msra.mxu0 0.0
    %3881 = vmatprep.subr.mxu0 0.0
    %3882 = vmatpush1.msra.mxu0 0.0
    %3883 = vmatprep.subr.mxu0 0.0
    %3884 = vmatpush1.msra.mxu0 0.0
    %3885 = vmatprep.subr.mxu0 0.0
    %3886 = vmatpush1.msra.mxu0 0.0
    %3887 = vmatprep.subr.mxu0 0.0
    %3888 = vmatpush1.msra.mxu0 0.0
    %3889 = vmatprep.subr.mxu0 0.0
    %3890 = vmatpush1.msra.mxu0 0.0
    %3891 = vmatprep.subr.mxu0 0.0
    %3892 = vmatpush1.msra.mxu0 0.0
    %3893 = vmatprep.subr.mxu0 0.0
    %3894 = vmatpush1.msra.mxu0 0.0
    %3895 = vmatprep.subr.mxu0 0.0
    %3896 = vmatpush1.msra.mxu0 0.0
    %3897 = vmatprep.subr.mxu0 0.0
    %3898 = vmatpush1.msra.mxu0 0.0
    %3899 = vmatprep.subr.mxu0 0.0
    %3900 = vmatpush1.msra.mxu0 0.0
    %3901 = vmatprep.subr.mxu0 0.0
    %3902 = vmatpush1.msra.mxu0 0.0
    %3903 = vmatprep.subr.mxu0 0.0
    %3904 = vmatpush1.msra.mxu0 0.0
    %3905 = vmatprep.subr.mxu0 0.0
    %3906 = vmatpush1.msra.mxu0 0.0
    %3907 = vmatprep.subr.mxu0 0.0
    %3908 = vmatpush1.msra.mxu0 0.0
    %3909 = vmatprep.subr.mxu0 0.0
    %3910 = vmatpush1.msra.mxu0 0.0
    %3911 = vmatprep.subr.mxu0 0.0
    %3912 = vmatpush1.msra.mxu0 0.0
    %3913 = vmatprep.subr.mxu0 0.0
    %3914 = vmatpush1.msra.mxu0 0.0
    %3915 = vmatprep.subr.mxu0 0.0
    %3916 = vmatpush1.msra.mxu0 0.0
    %3917 = vmatprep.subr.mxu0 0.0
    %3918 = vmatpush1.msra.mxu0 0.0
    %3919 = vmatprep.mubr.f32.mxu0 0.0
    %3920 = vmatmul.mubr.f32.gmra.mrb[0].mxu0 %v3693
    %v3921 = vpop.f32.mrb[0].mxu0
    %v3922 = vadd.f32 %v666, %v3921
    %v3923 = vpop.f32.mrb[0].mxu0
    %3924 = vdwg.mxu0
    %v3926 = vrot.slane %v3922, 6
    %v3928 = vmul.f32 %v3774, %v3926
    %v3929 = vadd.f32 %v487, %v3928
    %v3930 = vtanh.pop %v3929
    %v3931 = vsub.f32 1.0, %v3854
    %v3932 = vmul.f32 %v3931, %v3930
    %v3933 = vrot.slane %v3689, 6
    %v3935 = vmul.f32 %v3854, %v3933
    %v3936 = vadd.f32 %v3932, %v3935
    %s3937 = scalar_lea.vmem %s6, 26
    %3938 = vst.msk [vmem:[%s3937 - $0x2] sm:$0xc] %vm992, %v3936
    %v3940 = vrot.slane %v3936, 2
    %v3941 = vsel %vm505, %v3940, 0
    %3943 = vmatprep.subr.mxu0 0.0
    %3944 = vmatpush1.msra.mxu0 %v490
    %3945 = vmatprep.subr.mxu0 0.0
    %3946 = vmatpush1.msra.mxu0 %v491
    %3947 = vmatprep.subr.mxu0 0.0
    %3948 = vmatpush1.msra.mxu0 %v492
    %3949 = vmatprep.subr.mxu0 0.0
    %3950 = vmatpush1.msra.mxu0 %v493
    %3951 = vmatprep.subr.mxu0 0.0
    %3952 = vmatpush1.msra.mxu0 0.0
    %3953 = vmatprep.subr.mxu0 0.0
    %3954 = vmatpush1.msra.mxu0 0.0
    %3955 = vmatprep.subr.mxu0 0.0
    %3956 = vmatpush1.msra.mxu0 0.0
    %3957 = vmatprep.subr.mxu0 0.0
    %3958 = vmatpush1.msra.mxu0 0.0
    %3959 = vmatprep.subr.mxu0 0.0
    %3960 = vmatpush1.msra.mxu0 0.0
    %3961 = vmatprep.subr.mxu0 0.0
    %3962 = vmatpush1.msra.mxu0 0.0
    %3963 = vmatprep.subr.mxu0 0.0
    %3964 = vmatpush1.msra.mxu0 0.0
    %3965 = vmatprep.subr.mxu0 0.0
    %3966 = vmatpush1.msra.mxu0 0.0
    %3967 = vmatprep.subr.mxu0 0.0
    %3968 = vmatpush1.msra.mxu0 0.0
    %3969 = vmatprep.subr.mxu0 0.0
    %3970 = vmatpush1.msra.mxu0 0.0
    %3971 = vmatprep.subr.mxu0 0.0
    %3972 = vmatpush1.msra.mxu0 0.0
    %3973 = vmatprep.subr.mxu0 0.0
    %3974 = vmatpush1.msra.mxu0 0.0
    %3975 = vmatprep.subr.mxu0 0.0
    %3976 = vmatpush1.msra.mxu0 0.0
    %3977 = vmatprep.subr.mxu0 0.0
    %3978 = vmatpush1.msra.mxu0 0.0
    %3979 = vmatprep.subr.mxu0 0.0
    %3980 = vmatpush1.msra.mxu0 0.0
    %3981 = vmatprep.subr.mxu0 0.0
    %3982 = vmatpush1.msra.mxu0 0.0
    %3983 = vmatprep.subr.mxu0 0.0
    %3984 = vmatpush1.msra.mxu0 0.0
    %3985 = vmatprep.subr.mxu0 0.0
    %3986 = vmatpush1.msra.mxu0 0.0
    %3987 = vmatprep.subr.mxu0 0.0
    %3988 = vmatpush1.msra.mxu0 0.0
    %3989 = vmatprep.subr.mxu0 0.0
    %3990 = vmatpush1.msra.mxu0 0.0
    %3991 = vmatprep.subr.mxu0 0.0
    %3992 = vmatpush1.msra.mxu0 0.0
    %3993 = vmatprep.subr.mxu0 0.0
    %3994 = vmatpush1.msra.mxu0 0.0
    %3995 = vmatprep.subr.mxu0 0.0
    %3996 = vmatpush1.msra.mxu0 0.0
    %3997 = vmatprep.subr.mxu0 0.0
    %3998 = vmatpush1.msra.mxu0 0.0
    %3999 = vmatprep.subr.mxu0 0.0
    %4000 = vmatpush1.msra.mxu0 0.0
    %4001 = vmatprep.subr.mxu0 0.0
    %4002 = vmatpush1.msra.mxu0 0.0
    %4003 = vmatprep.subr.mxu0 0.0
    %4004 = vmatpush1.msra.mxu0 0.0
    %4005 = vmatprep.subr.mxu0 0.0
    %4006 = vmatpush1.msra.mxu0 0.0
    %4007 = vmatprep.mubr.f32.mxu0 0.0
    %4008 = vmatmul.mubr.f32.gmra.mrb[0].mxu0 %v3941
    %v4009 = vpop.f32.mrb[0].mxu0
    %v4010 = vadd.f32 0.0, %v4009
    %v4011 = vpop.f32.mrb[0].mxu0
    %4012 = vdwg.mxu0
    %v4014 = vrot.slane %v4010, 4
    %v4016 = vadd.f32 %v273, %v4014
    %v4017 = vxor.u32 %v4016, 2147483648
    %v4018 = vmul.f32 %v4017, 1.442695
    %v4019 = vpow.pop %v4018
    %v4020 = vadd.f32 %v4019, 1.0
    %v4021 = vrcp.pop %v4020
    %v4022 = vmul.f32 1.0, %v4021
    %4023 = vmatprep.subr.mxu0 0.0
    %4024 = vmatpush1.msra.mxu0 %v495
    %4025 = vmatprep.subr.mxu0 0.0
    %4026 = vmatpush1.msra.mxu0 %v496
    %4027 = vmatprep.subr.mxu0 0.0
    %4028 = vmatpush1.msra.mxu0 %v497
    %4029 = vmatprep.subr.mxu0 0.0
    %4030 = vmatpush1.msra.mxu0 %v498
    %4031 = vmatprep.subr.mxu0 0.0
    %4032 = vmatpush1.msra.mxu0 0.0
    %4033 = vmatprep.subr.mxu0 0.0
    %4034 = vmatpush1.msra.mxu0 0.0
    %4035 = vmatprep.subr.mxu0 0.0
    %4036 = vmatpush1.msra.mxu0 0.0
    %4037 = vmatprep.subr.mxu0 0.0
    %4038 = vmatpush1.msra.mxu0 0.0
    %4039 = vmatprep.subr.mxu0 0.0
    %4040 = vmatpush1.msra.mxu0 0.0
    %4041 = vmatprep.subr.mxu0 0.0
    %4042 = vmatpush1.msra.mxu0 0.0
    %4043 = vmatprep.subr.mxu0 0.0
    %4044 = vmatpush1.msra.mxu0 0.0
    %4045 = vmatprep.subr.mxu0 0.0
    %4046 = vmatpush1.msra.mxu0 0.0
    %4047 = vmatprep.subr.mxu0 0.0
    %4048 = vmatpush1.msra.mxu0 0.0
    %4049 = vmatprep.subr.mxu0 0.0
    %4050 = vmatpush1.msra.mxu0 0.0
    %4051 = vmatprep.subr.mxu0 0.0
    %4052 = vmatpush1.msra.mxu0 0.0
    %4053 = vmatprep.subr.mxu0 0.0
    %4054 = vmatpush1.msra.mxu0 0.0
    %4055 = vmatprep.subr.mxu0 0.0
    %4056 = vmatpush1.msra.mxu0 0.0
    %4057 = vmatprep.subr.mxu0 0.0
    %4058 = vmatpush1.msra.mxu0 0.0
    %4059 = vmatprep.subr.mxu0 0.0
    %4060 = vmatpush1.msra.mxu0 0.0
    %4061 = vmatprep.subr.mxu0 0.0
    %4062 = vmatpush1.msra.mxu0 0.0
    %4063 = vmatprep.subr.mxu0 0.0
    %4064 = vmatpush1.msra.mxu0 0.0
    %4065 = vmatprep.subr.mxu0 0.0
    %4066 = vmatpush1.msra.mxu0 0.0
    %4067 = vmatprep.subr.mxu0 0.0
    %4068 = vmatpush1.msra.mxu0 0.0
    %4069 = vmatprep.subr.mxu0 0.0
    %4070 = vmatpush1.msra.mxu0 0.0
    %4071 = vmatprep.subr.mxu0 0.0
    %4072 = vmatpush1.msra.mxu0 0.0
    %4073 = vmatprep.subr.mxu0 0.0
    %4074 = vmatpush1.msra.mxu0 0.0
    %4075 = vmatprep.subr.mxu0 0.0
    %4076 = vmatpush1.msra.mxu0 0.0
    %4077 = vmatprep.subr.mxu0 0.0
    %4078 = vmatpush1.msra.mxu0 0.0
    %4079 = vmatprep.subr.mxu0 0.0
    %4080 = vmatpush1.msra.mxu0 0.0
    %4081 = vmatprep.subr.mxu0 0.0
    %4082 = vmatpush1.msra.mxu0 0.0
    %4083 = vmatprep.subr.mxu0 0.0
    %4084 = vmatpush1.msra.mxu0 0.0
    %4085 = vmatprep.subr.mxu0 0.0
    %4086 = vmatpush1.msra.mxu0 0.0
    %4087 = vmatprep.mubr.f32.mxu0 0.0
    %4088 = vmatmul.mubr.f32.gmra.mrb[0].mxu0 %v3941
    %v4089 = vpop.f32.mrb[0].mxu0
    %v4090 = vadd.f32 0.0, %v4089
    %v4091 = vpop.f32.mrb[0].mxu0
    %4092 = vdwg.mxu0
    %v4094 = vrot.slane %v4090, 4
    %v4096 = vadd.f32 %v380, %v4094
    %v4097 = vxor.u32 %v4096, 2147483648
    %v4098 = vmul.f32 %v4097, 1.442695
    %v4099 = vpow.pop %v4098
    %v4100 = vadd.f32 %v4099, 1.0
    %v4101 = vrcp.pop %v4100
    %v4102 = vmul.f32 1.0, %v4101
    %4103 = vmatprep.subr.mxu0 0.0
    %4104 = vmatpush1.msra.mxu0 %v500
    %4105 = vmatprep.subr.mxu0 0.0
    %4106 = vmatpush1.msra.mxu0 %v501
    %4107 = vmatprep.subr.mxu0 0.0
    %4108 = vmatpush1.msra.mxu0 %v502
    %4109 = vmatprep.subr.mxu0 0.0
    %4110 = vmatpush1.msra.mxu0 %v503
    %4111 = vmatprep.subr.mxu0 0.0
    %4112 = vmatpush1.msra.mxu0 0.0
    %4113 = vmatprep.subr.mxu0 0.0
    %4114 = vmatpush1.msra.mxu0 0.0
    %4115 = vmatprep.subr.mxu0 0.0
    %4116 = vmatpush1.msra.mxu0 0.0
    %4117 = vmatprep.subr.mxu0 0.0
    %4118 = vmatpush1.msra.mxu0 0.0
    %4119 = vmatprep.subr.mxu0 0.0
    %4120 = vmatpush1.msra.mxu0 0.0
    %4121 = vmatprep.subr.mxu0 0.0
    %4122 = vmatpush1.msra.mxu0 0.0
    %4123 = vmatprep.subr.mxu0 0.0
    %4124 = vmatpush1.msra.mxu0 0.0
    %4125 = vmatprep.subr.mxu0 0.0
    %4126 = vmatpush1.msra.mxu0 0.0
    %4127 = vmatprep.subr.mxu0 0.0
    %4128 = vmatpush1.msra.mxu0 0.0
    %4129 = vmatprep.subr.mxu0 0.0
    %4130 = vmatpush1.msra.mxu0 0.0
    %4131 = vmatprep.subr.mxu0 0.0
    %4132 = vmatpush1.msra.mxu0 0.0
    %4133 = vmatprep.subr.mxu0 0.0
    %4134 = vmatpush1.msra.mxu0 0.0
    %4135 = vmatprep.subr.mxu0 0.0
    %4136 = vmatpush1.msra.mxu0 0.0
    %4137 = vmatprep.subr.mxu0 0.0
    %4138 = vmatpush1.msra.mxu0 0.0
    %4139 = vmatprep.subr.mxu0 0.0
    %4140 = vmatpush1.msra.mxu0 0.0
    %4141 = vmatprep.subr.mxu0 0.0
    %4142 = vmatpush1.msra.mxu0 0.0
    %4143 = vmatprep.subr.mxu0 0.0
    %4144 = vmatpush1.msra.mxu0 0.0
    %4145 = vmatprep.subr.mxu0 0.0
    %4146 = vmatpush1.msra.mxu0 0.0
    %4147 = vmatprep.subr.mxu0 0.0
    %4148 = vmatpush1.msra.mxu0 0.0
    %4149 = vmatprep.subr.mxu0 0.0
    %4150 = vmatpush1.msra.mxu0 0.0
    %4151 = vmatprep.subr.mxu0 0.0
    %4152 = vmatpush1.msra.mxu0 0.0
    %4153 = vmatprep.subr.mxu0 0.0
    %4154 = vmatpush1.msra.mxu0 0.0
    %4155 = vmatprep.subr.mxu0 0.0
    %4156 = vmatpush1.msra.mxu0 0.0
    %4157 = vmatprep.subr.mxu0 0.0
    %4158 = vmatpush1.msra.mxu0 0.0
    %4159 = vmatprep.subr.mxu0 0.0
    %4160 = vmatpush1.msra.mxu0 0.0
    %4161 = vmatprep.subr.mxu0 0.0
    %4162 = vmatpush1.msra.mxu0 0.0
    %4163 = vmatprep.subr.mxu0 0.0
    %4164 = vmatpush1.msra.mxu0 0.0
    %4165 = vmatprep.subr.mxu0 0.0
    %4166 = vmatpush1.msra.mxu0 0.0
    %4167 = vmatprep.mubr.f32.mxu0 0.0
    %4168 = vmatmul.mubr.f32.gmra.mrb[0].mxu0 %v3941
    %v4169 = vpop.f32.mrb[0].mxu0
    %v4170 = vadd.f32 %v666, %v4169
    %v4171 = vpop.f32.mrb[0].mxu0
    %4172 = vdwg.mxu0
    %v4174 = vrot.slane %v4170, 4
    %v4176 = vmul.f32 %v4022, %v4174
    %v4177 = vadd.f32 %v487, %v4176
    %v4178 = vtanh.pop %v4177
    %v4179 = vsub.f32 1.0, %v4102
    %v4180 = vmul.f32 %v4179, %v4178
    %v4181 = vrot.slane %v3936, 6
    %v4183 = vmul.f32 %v4102, %v4181
    %v4184 = vadd.f32 %v4180, %v4183
    %s4185 = scalar_lea.vmem %s6, 28
    %4186 = vst.msk [vmem:[%s4185 - $0x4] sm:$0x30] %vm1241, %v4184
    %v4188 = vrot.slane %v4184, 4
    %v4189 = vsel %vm505, %v4188, 0
    %4191 = vmatprep.subr.mxu0 0.0
    %4192 = vmatpush1.msra.mxu0 %v490
    %4193 = vmatprep.subr.mxu0 0.0
    %4194 = vmatpush1.msra.mxu0 %v491
    %4195 = vmatprep.subr.mxu0 0.0
    %4196 = vmatpush1.msra.mxu0 %v492
    %4197 = vmatprep.subr.mxu0 0.0
    %4198 = vmatpush1.msra.mxu0 %v493
    %4199 = vmatprep.subr.mxu0 0.0
    %4200 = vmatpush1.msra.mxu0 0.0
    %4201 = vmatprep.subr.mxu0 0.0
    %4202 = vmatpush1.msra.mxu0 0.0
    %4203 = vmatprep.subr.mxu0 0.0
    %4204 = vmatpush1.msra.mxu0 0.0
    %4205 = vmatprep.subr.mxu0 0.0
    %4206 = vmatpush1.msra.mxu0 0.0
    %4207 = vmatprep.subr.mxu0 0.0
    %4208 = vmatpush1.msra.mxu0 0.0
    %4209 = vmatprep.subr.mxu0 0.0
    %4210 = vmatpush1.msra.mxu0 0.0
    %4211 = vmatprep.subr.mxu0 0.0
    %4212 = vmatpush1.msra.mxu0 0.0
    %4213 = vmatprep.subr.mxu0 0.0
    %4214 = vmatpush1.msra.mxu0 0.0
    %4215 = vmatprep.subr.mxu0 0.0
    %4216 = vmatpush1.msra.mxu0 0.0
    %4217 = vmatprep.subr.mxu0 0.0
    %4218 = vmatpush1.msra.mxu0 0.0
    %4219 = vmatprep.subr.mxu0 0.0
    %4220 = vmatpush1.msra.mxu0 0.0
    %4221 = vmatprep.subr.mxu0 0.0
    %4222 = vmatpush1.msra.mxu0 0.0
    %4223 = vmatprep.subr.mxu0 0.0
    %4224 = vmatpush1.msra.mxu0 0.0
    %4225 = vmatprep.subr.mxu0 0.0
    %4226 = vmatpush1.msra.mxu0 0.0
    %4227 = vmatprep.subr.mxu0 0.0
    %4228 = vmatpush1.msra.mxu0 0.0
    %4229 = vmatprep.subr.mxu0 0.0
    %4230 = vmatpush1.msra.mxu0 0.0
    %4231 = vmatprep.subr.mxu0 0.0
    %4232 = vmatpush1.msra.mxu0 0.0
    %4233 = vmatprep.subr.mxu0 0.0
    %4234 = vmatpush1.msra.mxu0 0.0
    %4235 = vmatprep.subr.mxu0 0.0
    %4236 = vmatpush1.msra.mxu0 0.0
    %4237 = vmatprep.subr.mxu0 0.0
    %4238 = vmatpush1.msra.mxu0 0.0
    %4239 = vmatprep.subr.mxu0 0.0
    %4240 = vmatpush1.msra.mxu0 0.0
    %4241 = vmatprep.subr.mxu0 0.0
    %4242 = vmatpush1.msra.mxu0 0.0
    %4243 = vmatprep.subr.mxu0 0.0
    %4244 = vmatpush1.msra.mxu0 0.0
    %4245 = vmatprep.subr.mxu0 0.0
    %4246 = vmatpush1.msra.mxu0 0.0
    %4247 = vmatprep.subr.mxu0 0.0
    %4248 = vmatpush1.msra.mxu0 0.0
    %4249 = vmatprep.subr.mxu0 0.0
    %4250 = vmatpush1.msra.mxu0 0.0
    %4251 = vmatprep.subr.mxu0 0.0
    %4252 = vmatpush1.msra.mxu0 0.0
    %4253 = vmatprep.subr.mxu0 0.0
    %4254 = vmatpush1.msra.mxu0 0.0
    %4255 = vmatprep.mubr.f32.mxu0 0.0
    %4256 = vmatmul.mubr.f32.gmra.mrb[0].mxu0 %v4189
    %v4257 = vpop.f32.mrb[0].mxu0
    %v4258 = vadd.f32 0.0, %v4257
    %v4259 = vpop.f32.mrb[0].mxu0
    %4260 = vdwg.mxu0
    %v4262 = vrot.slane %v4258, 2
    %v4264 = vadd.f32 %v273, %v4262
    %v4265 = vxor.u32 %v4264, 2147483648
    %v4266 = vmul.f32 %v4265, 1.442695
    %v4267 = vpow.pop %v4266
    %v4268 = vadd.f32 %v4267, 1.0
    %v4269 = vrcp.pop %v4268
    %v4270 = vmul.f32 1.0, %v4269
    %4271 = vmatprep.subr.mxu0 0.0
    %4272 = vmatpush1.msra.mxu0 %v495
    %4273 = vmatprep.subr.mxu0 0.0
    %4274 = vmatpush1.msra.mxu0 %v496
    %4275 = vmatprep.subr.mxu0 0.0
    %4276 = vmatpush1.msra.mxu0 %v497
    %4277 = vmatprep.subr.mxu0 0.0
    %4278 = vmatpush1.msra.mxu0 %v498
    %4279 = vmatprep.subr.mxu0 0.0
    %4280 = vmatpush1.msra.mxu0 0.0
    %4281 = vmatprep.subr.mxu0 0.0
    %4282 = vmatpush1.msra.mxu0 0.0
    %4283 = vmatprep.subr.mxu0 0.0
    %4284 = vmatpush1.msra.mxu0 0.0
    %4285 = vmatprep.subr.mxu0 0.0
    %4286 = vmatpush1.msra.mxu0 0.0
    %4287 = vmatprep.subr.mxu0 0.0
    %4288 = vmatpush1.msra.mxu0 0.0
    %4289 = vmatprep.subr.mxu0 0.0
    %4290 = vmatpush1.msra.mxu0 0.0
    %4291 = vmatprep.subr.mxu0 0.0
    %4292 = vmatpush1.msra.mxu0 0.0
    %4293 = vmatprep.subr.mxu0 0.0
    %4294 = vmatpush1.msra.mxu0 0.0
    %4295 = vmatprep.subr.mxu0 0.0
    %4296 = vmatpush1.msra.mxu0 0.0
    %4297 = vmatprep.subr.mxu0 0.0
    %4298 = vmatpush1.msra.mxu0 0.0
    %4299 = vmatprep.subr.mxu0 0.0
    %4300 = vmatpush1.msra.mxu0 0.0
    %4301 = vmatprep.subr.mxu0 0.0
    %4302 = vmatpush1.msra.mxu0 0.0
    %4303 = vmatprep.subr.mxu0 0.0
    %4304 = vmatpush1.msra.mxu0 0.0
    %4305 = vmatprep.subr.mxu0 0.0
    %4306 = vmatpush1.msra.mxu0 0.0
    %4307 = vmatprep.subr.mxu0 0.0
    %4308 = vmatpush1.msra.mxu0 0.0
    %4309 = vmatprep.subr.mxu0 0.0
    %4310 = vmatpush1.msra.mxu0 0.0
    %4311 = vmatprep.subr.mxu0 0.0
    %4312 = vmatpush1.msra.mxu0 0.0
    %4313 = vmatprep.subr.mxu0 0.0
    %4314 = vmatpush1.msra.mxu0 0.0
    %4315 = vmatprep.subr.mxu0 0.0
    %4316 = vmatpush1.msra.mxu0 0.0
    %4317 = vmatprep.subr.mxu0 0.0
    %4318 = vmatpush1.msra.mxu0 0.0
    %4319 = vmatprep.subr.mxu0 0.0
    %4320 = vmatpush1.msra.mxu0 0.0
    %4321 = vmatprep.subr.mxu0 0.0
    %4322 = vmatpush1.msra.mxu0 0.0
    %4323 = vmatprep.subr.mxu0 0.0
    %4324 = vmatpush1.msra.mxu0 0.0
    %4325 = vmatprep.subr.mxu0 0.0
    %4326 = vmatpush1.msra.mxu0 0.0
    %4327 = vmatprep.subr.mxu0 0.0
    %4328 = vmatpush1.msra.mxu0 0.0
    %4329 = vmatprep.subr.mxu0 0.0
    %4330 = vmatpush1.msra.mxu0 0.0
    %4331 = vmatprep.subr.mxu0 0.0
    %4332 = vmatpush1.msra.mxu0 0.0
    %4333 = vmatprep.subr.mxu0 0.0
    %4334 = vmatpush1.msra.mxu0 0.0
    %4335 = vmatprep.mubr.f32.mxu0 0.0
    %4336 = vmatmul.mubr.f32.gmra.mrb[0].mxu0 %v4189
    %v4337 = vpop.f32.mrb[0].mxu0
    %v4338 = vadd.f32 0.0, %v4337
    %v4339 = vpop.f32.mrb[0].mxu0
    %4340 = vdwg.mxu0
    %v4342 = vrot.slane %v4338, 2
    %v4344 = vadd.f32 %v380, %v4342
    %v4345 = vxor.u32 %v4344, 2147483648
    %v4346 = vmul.f32 %v4345, 1.442695
    %v4347 = vpow.pop %v4346
    %v4348 = vadd.f32 %v4347, 1.0
    %v4349 = vrcp.pop %v4348
    %v4350 = vmul.f32 1.0, %v4349
    %4351 = vmatprep.subr.mxu0 0.0
    %4352 = vmatpush1.msra.mxu0 %v500
    %4353 = vmatprep.subr.mxu0 0.0
    %4354 = vmatpush1.msra.mxu0 %v501
    %4355 = vmatprep.subr.mxu0 0.0
    %4356 = vmatpush1.msra.mxu0 %v502
    %4357 = vmatprep.subr.mxu0 0.0
    %4358 = vmatpush1.msra.mxu0 %v503
    %4359 = vmatprep.subr.mxu0 0.0
    %4360 = vmatpush1.msra.mxu0 0.0
    %4361 = vmatprep.subr.mxu0 0.0
    %4362 = vmatpush1.msra.mxu0 0.0
    %4363 = vmatprep.subr.mxu0 0.0
    %4364 = vmatpush1.msra.mxu0 0.0
    %4365 = vmatprep.subr.mxu0 0.0
    %4366 = vmatpush1.msra.mxu0 0.0
    %4367 = vmatprep.subr.mxu0 0.0
    %4368 = vmatpush1.msra.mxu0 0.0
    %4369 = vmatprep.subr.mxu0 0.0
    %4370 = vmatpush1.msra.mxu0 0.0
    %4371 = vmatprep.subr.mxu0 0.0
    %4372 = vmatpush1.msra.mxu0 0.0
    %4373 = vmatprep.subr.mxu0 0.0
    %4374 = vmatpush1.msra.mxu0 0.0
    %4375 = vmatprep.subr.mxu0 0.0
    %4376 = vmatpush1.msra.mxu0 0.0
    %4377 = vmatprep.subr.mxu0 0.0
    %4378 = vmatpush1.msra.mxu0 0.0
    %4379 = vmatprep.subr.mxu0 0.0
    %4380 = vmatpush1.msra.mxu0 0.0
    %4381 = vmatprep.subr.mxu0 0.0
    %4382 = vmatpush1.msra.mxu0 0.0
    %4383 = vmatprep.subr.mxu0 0.0
    %4384 = vmatpush1.msra.mxu0 0.0
    %4385 = vmatprep.subr.mxu0 0.0
    %4386 = vmatpush1.msra.mxu0 0.0
    %4387 = vmatprep.subr.mxu0 0.0
    %4388 = vmatpush1.msra.mxu0 0.0
    %4389 = vmatprep.subr.mxu0 0.0
    %4390 = vmatpush1.msra.mxu0 0.0
    %4391 = vmatprep.subr.mxu0 0.0
    %4392 = vmatpush1.msra.mxu0 0.0
    %4393 = vmatprep.subr.mxu0 0.0
    %4394 = vmatpush1.msra.mxu0 0.0
    %4395 = vmatprep.subr.mxu0 0.0
    %4396 = vmatpush1.msra.mxu0 0.0
    %4397 = vmatprep.subr.mxu0 0.0
    %4398 = vmatpush1.msra.mxu0 0.0
    %4399 = vmatprep.subr.mxu0 0.0
    %4400 = vmatpush1.msra.mxu0 0.0
    %4401 = vmatprep.subr.mxu0 0.0
    %4402 = vmatpush1.msra.mxu0 0.0
    %4403 = vmatprep.subr.mxu0 0.0
    %4404 = vmatpush1.msra.mxu0 0.0
    %4405 = vmatprep.subr.mxu0 0.0
    %4406 = vmatpush1.msra.mxu0 0.0
    %4407 = vmatprep.subr.mxu0 0.0
    %4408 = vmatpush1.msra.mxu0 0.0
    %4409 = vmatprep.subr.mxu0 0.0
    %4410 = vmatpush1.msra.mxu0 0.0
    %4411 = vmatprep.subr.mxu0 0.0
    %4412 = vmatpush1.msra.mxu0 0.0
    %4413 = vmatprep.subr.mxu0 0.0
    %4414 = vmatpush1.msra.mxu0 0.0
    %4415 = vmatprep.mubr.f32.mxu0 0.0
    %4416 = vmatmul.mubr.f32.gmra.mrb[0].mxu0 %v4189
    %v4417 = vpop.f32.mrb[0].mxu0
    %v4418 = vadd.f32 %v666, %v4417
    %v4419 = vpop.f32.mrb[0].mxu0
    %4420 = vdwg.mxu0
    %v4422 = vrot.slane %v4418, 2
    %v4424 = vmul.f32 %v4270, %v4422
    %v4425 = vadd.f32 %v487, %v4424
    %v4426 = vtanh.pop %v4425
    %v4427 = vsub.f32 1.0, %v4350
    %v4428 = vmul.f32 %v4427, %v4426
    %v4429 = vrot.slane %v4184, 6
    %v4431 = vmul.f32 %v4350, %v4429
    %v4432 = vadd.f32 %v4428, %v4431
    %s4433 = scalar_lea.vmem %s6, 30
    %4434 = vst.msk [vmem:[%s4433 - $0x6] sm:$0xc0] %vm1490, %v4432
    %4435 = vst.msk [vmem:[#allocation2 - $0x6] sm:$0xc0] %vm1490, %v4432
    // Predicated region
    $region26: #{crnn_forward.1} parent=1 // pred_check
      _
    $region27: #{crnn_forward.1} parent=1 // pred_check_branch
      %4437 = sbr.rel (0) target = $region29
    $region28: #{crnn_forward.1} parent=1 // pred_region
      _
    $region29: #{crnn_forward.1} parent=1 // pred_fallthru
      _
    // Predicated region
    $region30: #{crnn_forward.1} parent=1 // pred_check
      _
    $region31: #{crnn_forward.1} parent=1 // pred_check_branch
      %4439 = sbr.rel (0) target = $region33
    $region32: #{crnn_forward.1} parent=1 // pred_region
      %s4441 = ssub.s32 32, 32
      %4442 = vsyncadd [#allocation3], %s4441
      %s4444 = sshll.u32 [#allocation2], 4
      %s4445 = int_to_ptr.vmem [resolvable:$true] %s4444
      %4447 = dma.vmem_to_hbm [thread:$0]  %s4445, 32, %s7, [#allocation3]
    $region33: #{crnn_forward.1} parent=1 // pred_fallthru
      _
    // Predicated region
    $region34: #{crnn_forward.1} parent=1 // pred_check
      _
    $region35: #{crnn_forward.1} parent=1 // pred_check_branch
      %4449 = sbr.rel (0) target = $region37
    $region36: #{crnn_forward.1} parent=1 // pred_region
      _
    $region37: #{crnn_forward.1} parent=1 // pred_fallthru
      _
    // Predicated region
    $region38: #{crnn_forward.1} parent=1 // pred_check
      _
    $region39: #{crnn_forward.1} parent=1 // pred_check_branch
      %4451 = sbr.rel (0) target = $region41
    $region40: #{crnn_forward.1} parent=1 // pred_region
      %4452 = dma.done [#allocation3], 32
    $region41: #{crnn_forward.1} parent=1 // pred_fallthru
      _
    %4453 = vsyncpa [#allocation3], 1

</llo_original>
